<compile_context>
chip_gen: v6e
topology: v6e:2x2x1
jax: 0.10.0
libtpu: 0.0.40
codegen_flags: <defaults>
</compile_context>

<pallas_src>
import numpy as np

import jax
import jax.numpy as jnp
from jax.experimental import pallas as pl
from jax.experimental.pallas import tpu as pltpu


# ----------------------------- static sizes ---------------------------------
C_IN, H_IN, W_IN = 3, 32, 32          # input image (NCHW)
K = 5                                 # conv kernel size
C1, H1, W1 = 6, 28, 28                # conv1 output
PH1 = 14                              # pooled1 height
C2, H2, W2 = 16, 10, 10               # conv2 output
PH2, PW2 = 5, 5                       # pooled2 spatial
FC1, FC2, NCLS = 120, 84, 10

L1 = W1 * C1                          # 168: conv1 row lanes, index = ow*6 + co
L1P = L1 - C1                         # 162: lanes valid after width-pair max
L2 = W2 * C2                          # 160: conv2 row lanes, index = ow*16 + co
L2P = L2 - C2                         # 144


# ------------------------------ fused kernel --------------------------------
def _convnet_kernel(x_ref, t1_ref, b1_ref, t2_ref, b2_ref, f1_ref, bf1_ref,
                    w2_ref, bf2_ref, w3_ref, b3_ref, o_ref, p1_ref):
    """One image per grid step.  Activations are kept as 2-D (rows, w*c) slabs
    so every op is a 2-D MXU matmul, a static slice, or an elementwise max."""
    f32 = jnp.float32

    # ---- conv1 (5x5 valid) + bias + ReLU: 15 row-Toeplitz matmuls on the MXU.
    # x_ref[0] is the NCHW image viewed as (C_IN*H_IN, W_IN); the lhs rows are
    # input rows ih = oh + kh of channel ci, the rhs folds the kw/ow expansion.
    acc1 = jnp.zeros((H1, L1), f32)
    for ci in range(C_IN):
        for kh in range(K):
            r0 = ci * H_IN + kh
            acc1 = acc1 + jnp.dot(x_ref[0, r0:r0 + H1, :], t1_ref[kh, ci],
                                  preferred_element_type=f32)        # (28, 168)
    c1 = jnp.maximum(acc1 + b1_ref[...], 0.0)

    # ---- maxpool 2x2 #1 (exact): pairwise max along lanes (width) then rows
    # (height).  Result stays "dilated": only even rows / even ow lane-groups
    # are real pooled values; the rest is ignored via zeros packed into t2.
    m1 = jnp.maximum(c1[:, 0:L1P], c1[:, C1:L1])                     # (28, 162)
    rw1 = jnp.maximum(m1[0:H1 - 1, :], m1[1:H1, :])                  # (27, 162)
    for ph in range(PH1):                                            # row compact
        p1_ref[ph:ph + 1, :] = rw1[2 * ph:2 * ph + 1, :]

    # ---- conv2 (5x5 valid) + bias + ReLU: 5 row-Toeplitz matmuls.
    acc2 = jnp.zeros((H2, L2), f32)
    for kh in range(K):
        acc2 = acc2 + jnp.dot(p1_ref[kh:kh + H2, :], t2_ref[kh],
                              preferred_element_type=f32)            # (10, 160)
    c2 = jnp.maximum(acc2 + b2_ref[...], 0.0)

    # ---- maxpool 2x2 #2 (exact, dilated as above; selection folded into f1).
    m2 = jnp.maximum(c2[:, 0:L2P], c2[:, C2:L2])                     # (10, 144)
    rw2 = jnp.maximum(m2[0:H2 - 1, :], m2[1:H2, :])                  # (9, 144)

    # ---- fc1 (torch's view(-1, 400) flatten folded into f1) + fc2 + out.
    acc3 = jnp.zeros((1, FC1), f32)
    for r in range(PH2):
        acc3 = acc3 + jnp.dot(rw2[2 * r:2 * r + 1, :], f1_ref[r],
                              preferred_element_type=f32)            # (1, 120)
    y1 = jnp.maximum(acc3 + bf1_ref[...], 0.0)
    y2 = jnp.maximum(jnp.dot(y1, w2_ref[...], preferred_element_type=f32)
                     + bf2_ref[...], 0.0)                            # (1, 84)
    o_ref[0] = (jnp.dot(y2, w3_ref[...], preferred_element_type=f32)
                + b3_ref[...])                                       # (1, 10)


# ----------------------- parameter init (torch layout) ----------------------
def init_params(key):
    """PyTorch-default-like uniform(-1/sqrt(fan_in), 1/sqrt(fan_in)) init."""
    ks = jax.random.split(key, 10)

    def u(k, shape, fan_in):
        bound = 1.0 / float(fan_in) ** 0.5
        return jax.random.uniform(k, shape, jnp.float32, -bound, bound)

    return {
        "conv1_w": u(ks[0], (C1, C_IN, K, K), C_IN * K * K),
        "conv1_b": u(ks[1], (C1,), C_IN * K * K),
        "conv2_w": u(ks[2], (C2, C1, K, K), C1 * K * K),
        "conv2_b": u(ks[3], (C2,), C1 * K * K),
        "fc1_w":   u(ks[4], (FC1, C2 * PH2 * PW2), C2 * PH2 * PW2),
        "fc1_b":   u(ks[5], (FC1,), C2 * PH2 * PW2),
        "fc2_w":   u(ks[6], (FC2, FC1), FC1),
        "fc2_b":   u(ks[7], (FC2,), FC1),
        "out_w":   u(ks[8], (NCLS, FC2), FC2),
        "out_b":   u(ks[9], (NCLS,), FC2),
    }


# ------------------- one-time host-side weight packing ----------------------
def pack_params(params):
    """Fold im2col, the pooling selection and the torch flatten order into the
    weight matrices.  Runs once on the host, outside the jitted forward."""
    w1 = np.asarray(params["conv1_w"], np.float32)   # (6, 3, 5, 5)
    b1 = np.asarray(params["conv1_b"], np.float32)
    w2 = np.asarray(params["conv2_w"], np.float32)   # (16, 6, 5, 5)
    b2 = np.asarray(params["conv2_b"], np.float32)
    wf1 = np.asarray(params["fc1_w"], np.float32)    # (120, 400)
    bf1 = np.asarray(params["fc1_b"], np.float32)
    wf2 = np.asarray(params["fc2_w"], np.float32)    # (84, 120)
    bf2 = np.asarray(params["fc2_b"], np.float32)
    wo = np.asarray(params["out_w"], np.float32)     # (10, 84)
    bo = np.asarray(params["out_b"], np.float32)

    # conv1: per-(kh, ci) width-Toeplitz matrix mapping one input row (W_IN
    # lanes) to one conv1 output row flattened as lane = ow*C1 + co.
    t1 = np.zeros((K, C_IN, W_IN, L1), np.float32)
    for kh in range(K):
        for ci in range(C_IN):
            for kw in range(K):
                for ow in range(W1):
                    t1[kh, ci, ow + kw, ow * C1:(ow + 1) * C1] = w1[:, ci, kh, kw]

    # conv2: consumes the *dilated* pooled1 rows; valid input lanes are
    # 2*pw*C1 + ci (even ow groups only), odd groups get zero weights.
    t2 = np.zeros((K, L1P, L2), np.float32)
    for kh in range(K):
        for kw in range(K):
            for ow in range(W2):
                lane0 = 2 * (ow + kw) * C1
                t2[kh, lane0:lane0 + C1, ow * C2:(ow + 1) * C2] = w2[:, :, kh, kw].T

    # fc1: consumes the dilated pooled2 rows (valid lanes 2*w*C2 + co); the
    # torch x.view(-1, 16*5*5) flatten order (c, h, w) is folded in here.
    f1 = np.zeros((PH2, L2P, FC1), np.float32)
    wf1r = wf1.reshape(FC1, C2, PH2, PW2)            # [j, co, r, w]
    for r in range(PH2):
        for w in range(PW2):
            f1[r, 2 * w * C2:2 * w * C2 + C2, :] = wf1r[:, :, r, w].T

    return {
        "t1": jnp.asarray(t1),
        "b1": jnp.asarray(np.tile(b1, W1)[None, :]),          # (1, 168)
        "t2": jnp.asarray(t2),
        "b2": jnp.asarray(np.tile(b2, W2)[None, :]),          # (1, 160)
        "f1": jnp.asarray(f1),
        "bf1": jnp.asarray(bf1[None, :]),
        "w2": jnp.asarray(wf2.T.copy()),                      # (120, 84)
        "bf2": jnp.asarray(bf2[None, :]),
        "w3": jnp.asarray(wo.T.copy()),                       # (84, 10)
        "b3": jnp.asarray(bo[None, :]),
    }


# ------------------------------- forward -------------------------------------
def convnet_forward(x_nchw, packed):
    n = x_nchw.shape[0]
    # metadata-only view: (N, C, H, W) -> (N, C*H, W); row index = ci*H_IN + ih.
    x_rows = x_nchw.reshape(n, C_IN * H_IN, W_IN).astype(jnp.float32)

    def full(shape):
        return pl.BlockSpec(shape, lambda i: (0,) * len(shape))

    out3 = pl.pallas_call(
        _convnet_kernel,
        out_shape=jax.ShapeDtypeStruct((n, 1, NCLS), jnp.float32),
        grid=(n,),
        in_specs=[
            pl.BlockSpec((1, C_IN * H_IN, W_IN), lambda i: (i, 0, 0)),  # x
            full((K, C_IN, W_IN, L1)),     # t1
            full((1, L1)),                 # b1
            full((K, L1P, L2)),            # t2
            full((1, L2)),                 # b2
            full((PH2, L2P, FC1)),         # f1
            full((1, FC1)),                # bf1
            full((FC1, FC2)),              # w2
            full((1, FC2)),                # bf2
            full((FC2, NCLS)),             # w3
            full((1, NCLS)),               # b3
        ],
        out_specs=pl.BlockSpec((1, 1, NCLS), lambda i: (i, 0, 0)),
        scratch_shapes=[pltpu.VMEM((PH1, L1P), jnp.float32)],
        compiler_params=pltpu.CompilerParams(
            dimension_semantics=("parallel",)),
    )(x_rows, packed["t1"], packed["b1"], packed["t2"], packed["b2"],
      packed["f1"], packed["bf1"], packed["w2"], packed["bf2"],
      packed["w3"], packed["b3"])
    return out3[:, 0, :]


# --------------------------- pure-JAX reference ------------------------------
def convnet_reference(x_nchw, params):
    hp = jax.lax.Precision.HIGHEST
    dn = ("NCHW", "OIHW", "NCHW")
    x = jax.lax.conv_general_dilated(x_nchw, params["conv1_w"], (1, 1), "VALID",
                                     dimension_numbers=dn, precision=hp)
    x = jax.nn.relu(x + params["conv1_b"][None, :, None, None])
    x = jax.lax.reduce_window(x, -jnp.inf, jax.lax.max,
                              (1, 1, 2, 2), (1, 1, 2, 2), "VALID")
    x = jax.lax.conv_general_dilated(x, params["conv2_w"], (1, 1), "VALID",
                                     dimension_numbers=dn, precision=hp)
    x = jax.nn.relu(x + params["conv2_b"][None, :, None, None])
    x = jax.lax.reduce_window(x, -jnp.inf, jax.lax.max,
                              (1, 1, 2, 2), (1, 1, 2, 2), "VALID")
    x = x.reshape(x.shape[0], -1)                       # == torch view(-1, 400)
    x = jax.nn.relu(jnp.dot(x, params["fc1_w"].T, precision=hp) + params["fc1_b"])
    x = jax.nn.relu(jnp.dot(x, params["fc2_w"].T, precision=hp) + params["fc2_b"])
    return jnp.dot(x, params["out_w"].T, precision=hp) + params["out_b"]


if __name__ == "__main__":
    key = jax.random.PRNGKey(0)
    k_params, k_x = jax.random.split(key)
    params = init_params(k_params)
    packed = pack_params(params)              # one-time host-side weight packing

    # 32x32x3 input is required by the module (16*5*5 flatten); small batch=2.
    x = jax.random.normal(k_x, (2, C_IN, H_IN, W_IN), jnp.float32)

    logits = jax.jit(convnet_forward)(x, packed)
    jax.block_until_ready(logits)
    assert logits.shape == (2, NCLS) and logits.dtype == jnp.float32

    # numerical self-check against a pure-JAX reference (loose tolerance: the
    # in-kernel MXU matmuls use default TPU matmul precision).
    ref = jax.jit(convnet_reference)(x, params)
    max_err = float(jnp.max(jnp.abs(logits - ref)))
    assert max_err < 1e-1, f"kernel/reference mismatch: max_err={max_err}"

    print("KERNEL_OK")
</pallas_src>

<mosaic_0001>
module attributes {stable_mosaic.version = 11 : i64} {
  func.func @_convnet_kernel(%arg0: i32, %arg1: memref<1x96x32xf32, #tpu.memory_space<vmem>>, %arg2: memref<5x3x32x168xf32, #tpu.memory_space<vmem>>, %arg3: memref<1x168xf32, #tpu.memory_space<vmem>>, %arg4: memref<5x162x160xf32, #tpu.memory_space<vmem>>, %arg5: memref<1x160xf32, #tpu.memory_space<vmem>>, %arg6: memref<5x144x120xf32, #tpu.memory_space<vmem>>, %arg7: memref<1x120xf32, #tpu.memory_space<vmem>>, %arg8: memref<120x84xf32, #tpu.memory_space<vmem>>, %arg9: memref<1x84xf32, #tpu.memory_space<vmem>>, %arg10: memref<84x10xf32, #tpu.memory_space<vmem>>, %arg11: memref<1x10xf32, #tpu.memory_space<vmem>>, %arg12: memref<1x1x10xf32, #tpu.memory_space<vmem>>, %arg13: memref<14x162xf32, #tpu.memory_space<vmem>>) attributes {dimension_semantics = [#tpu.dimension_semantics<parallel>], iteration_bounds = array<i64: 2>, scalar_prefetch = 0 : i64, scratch_operands = 1 : i64, tpu.core_type = #tpu.core_type<tc>, window_params = [{transform_indices = @transform_0, window_bounds = array<i64: 1, 96, 32>}, {pipeline_mode = #tpu.pipeline_mode<synchronous>, transform_indices = @transform_1, window_bounds = array<i64: 5, 3, 32, 168>}, {pipeline_mode = #tpu.pipeline_mode<synchronous>, transform_indices = @transform_2, window_bounds = array<i64: 1, 168>}, {pipeline_mode = #tpu.pipeline_mode<synchronous>, transform_indices = @transform_3, window_bounds = array<i64: 5, 162, 160>}, {pipeline_mode = #tpu.pipeline_mode<synchronous>, transform_indices = @transform_4, window_bounds = array<i64: 1, 160>}, {pipeline_mode = #tpu.pipeline_mode<synchronous>, transform_indices = @transform_5, window_bounds = array<i64: 5, 144, 120>}, {pipeline_mode = #tpu.pipeline_mode<synchronous>, transform_indices = @transform_6, window_bounds = array<i64: 1, 120>}, {pipeline_mode = #tpu.pipeline_mode<synchronous>, transform_indices = @transform_7, window_bounds = array<i64: 120, 84>}, {pipeline_mode = #tpu.pipeline_mode<synchronous>, transform_indices = @transform_8, window_bounds = array<i64: 1, 84>}, {pipeline_mode = #tpu.pipeline_mode<synchronous>, transform_indices = @transform_9, window_bounds = array<i64: 84, 10>}, {pipeline_mode = #tpu.pipeline_mode<synchronous>, transform_indices = @transform_10, window_bounds = array<i64: 1, 10>}, {transform_indices = @transform_11, window_bounds = array<i64: 1, 1, 10>}]} {
    %cst = arith.constant 0.000000e+00 : f32
    %0 = vector.broadcast %cst : f32 to vector<28x168xf32>
    %c0 = arith.constant 0 : index
    %c0_0 = arith.constant 0 : index
    %c0_1 = arith.constant 0 : index
    %1 = vector.load %arg1[%c0, %c0_0, %c0_1] : memref<1x96x32xf32, #tpu.memory_space<vmem>>, vector<1x28x32xf32>
    %2 = vector.shape_cast %1 : vector<1x28x32xf32> to vector<28x32xf32>
    %c0_2 = arith.constant 0 : index
    %c0_3 = arith.constant 0 : index
    %c0_4 = arith.constant 0 : index
    %c0_5 = arith.constant 0 : index
    %3 = vector.load %arg2[%c0_2, %c0_3, %c0_4, %c0_5] : memref<5x3x32x168xf32, #tpu.memory_space<vmem>>, vector<1x1x32x168xf32>
    %4 = vector.shape_cast %3 : vector<1x1x32x168xf32> to vector<32x168xf32>
    %cst_6 = arith.constant dense<0.000000e+00> : vector<28x168xf32>
    %5 = tpu.matmul %2, %4, %cst_6 {dimension_numbers = #tpu.dot_dimension_numbers<[1], [0], [0], [1], [0, 0, 1, 1], [], []>} : vector<28x32xf32>, vector<32x168xf32>, vector<28x168xf32> -> vector<28x168xf32>
    %6 = arith.addf %0, %5 : vector<28x168xf32>
    %c0_7 = arith.constant 0 : index
    %c1 = arith.constant 1 : index
    %c0_8 = arith.constant 0 : index
    %7 = vector.load %arg1[%c0_7, %c1, %c0_8] : memref<1x96x32xf32, #tpu.memory_space<vmem>>, vector<1x28x32xf32>
    %8 = vector.shape_cast %7 : vector<1x28x32xf32> to vector<28x32xf32>
    %c1_9 = arith.constant 1 : index
    %c0_10 = arith.constant 0 : index
    %c0_11 = arith.constant 0 : index
    %c0_12 = arith.constant 0 : index
    %9 = vector.load %arg2[%c1_9, %c0_10, %c0_11, %c0_12] : memref<5x3x32x168xf32, #tpu.memory_space<vmem>>, vector<1x1x32x168xf32>
    %10 = vector.shape_cast %9 : vector<1x1x32x168xf32> to vector<32x168xf32>
    %cst_13 = arith.constant dense<0.000000e+00> : vector<28x168xf32>
    %11 = tpu.matmul %8, %10, %cst_13 {dimension_numbers = #tpu.dot_dimension_numbers<[1], [0], [0], [1], [0, 0, 1, 1], [], []>} : vector<28x32xf32>, vector<32x168xf32>, vector<28x168xf32> -> vector<28x168xf32>
    %12 = arith.addf %6, %11 : vector<28x168xf32>
    %c0_14 = arith.constant 0 : index
    %c2 = arith.constant 2 : index
    %c0_15 = arith.constant 0 : index
    %13 = vector.load %arg1[%c0_14, %c2, %c0_15] : memref<1x96x32xf32, #tpu.memory_space<vmem>>, vector<1x28x32xf32>
    %14 = vector.shape_cast %13 : vector<1x28x32xf32> to vector<28x32xf32>
    %c2_16 = arith.constant 2 : index
    %c0_17 = arith.constant 0 : index
    %c0_18 = arith.constant 0 : index
    %c0_19 = arith.constant 0 : index
    %15 = vector.load %arg2[%c2_16, %c0_17, %c0_18, %c0_19] : memref<5x3x32x168xf32, #tpu.memory_space<vmem>>, vector<1x1x32x168xf32>
    %16 = vector.shape_cast %15 : vector<1x1x32x168xf32> to vector<32x168xf32>
    %cst_20 = arith.constant dense<0.000000e+00> : vector<28x168xf32>
    %17 = tpu.matmul %14, %16, %cst_20 {dimension_numbers = #tpu.dot_dimension_numbers<[1], [0], [0], [1], [0, 0, 1, 1], [], []>} : vector<28x32xf32>, vector<32x168xf32>, vector<28x168xf32> -> vector<28x168xf32>
    %18 = arith.addf %12, %17 : vector<28x168xf32>
    %c0_21 = arith.constant 0 : index
    %c3 = arith.constant 3 : index
    %c0_22 = arith.constant 0 : index
    %19 = vector.load %arg1[%c0_21, %c3, %c0_22] : memref<1x96x32xf32, #tpu.memory_space<vmem>>, vector<1x28x32xf32>
    %20 = vector.shape_cast %19 : vector<1x28x32xf32> to vector<28x32xf32>
    %c3_23 = arith.constant 3 : index
    %c0_24 = arith.constant 0 : index
    %c0_25 = arith.constant 0 : index
    %c0_26 = arith.constant 0 : index
    %21 = vector.load %arg2[%c3_23, %c0_24, %c0_25, %c0_26] : memref<5x3x32x168xf32, #tpu.memory_space<vmem>>, vector<1x1x32x168xf32>
    %22 = vector.shape_cast %21 : vector<1x1x32x168xf32> to vector<32x168xf32>
    %cst_27 = arith.constant dense<0.000000e+00> : vector<28x168xf32>
    %23 = tpu.matmul %20, %22, %cst_27 {dimension_numbers = #tpu.dot_dimension_numbers<[1], [0], [0], [1], [0, 0, 1, 1], [], []>} : vector<28x32xf32>, vector<32x168xf32>, vector<28x168xf32> -> vector<28x168xf32>
    %24 = arith.addf %18, %23 : vector<28x168xf32>
    %c0_28 = arith.constant 0 : index
    %c4 = arith.constant 4 : index
    %c0_29 = arith.constant 0 : index
    %25 = vector.load %arg1[%c0_28, %c4, %c0_29] : memref<1x96x32xf32, #tpu.memory_space<vmem>>, vector<1x28x32xf32>
    %26 = vector.shape_cast %25 : vector<1x28x32xf32> to vector<28x32xf32>
    %c4_30 = arith.constant 4 : index
    %c0_31 = arith.constant 0 : index
    %c0_32 = arith.constant 0 : index
    %c0_33 = arith.constant 0 : index
    %27 = vector.load %arg2[%c4_30, %c0_31, %c0_32, %c0_33] : memref<5x3x32x168xf32, #tpu.memory_space<vmem>>, vector<1x1x32x168xf32>
    %28 = vector.shape_cast %27 : vector<1x1x32x168xf32> to vector<32x168xf32>
    %cst_34 = arith.constant dense<0.000000e+00> : vector<28x168xf32>
    %29 = tpu.matmul %26, %28, %cst_34 {dimension_numbers = #tpu.dot_dimension_numbers<[1], [0], [0], [1], [0, 0, 1, 1], [], []>} : vector<28x32xf32>, vector<32x168xf32>, vector<28x168xf32> -> vector<28x168xf32>
    %30 = arith.addf %24, %29 : vector<28x168xf32>
    %c0_35 = arith.constant 0 : index
    %c32 = arith.constant 32 : index
    %c0_36 = arith.constant 0 : index
    %31 = vector.load %arg1[%c0_35, %c32, %c0_36] : memref<1x96x32xf32, #tpu.memory_space<vmem>>, vector<1x28x32xf32>
    %32 = vector.shape_cast %31 : vector<1x28x32xf32> to vector<28x32xf32>
    %c0_37 = arith.constant 0 : index
    %c1_38 = arith.constant 1 : index
    %c0_39 = arith.constant 0 : index
    %c0_40 = arith.constant 0 : index
    %33 = vector.load %arg2[%c0_37, %c1_38, %c0_39, %c0_40] : memref<5x3x32x168xf32, #tpu.memory_space<vmem>>, vector<1x1x32x168xf32>
    %34 = vector.shape_cast %33 : vector<1x1x32x168xf32> to vector<32x168xf32>
    %cst_41 = arith.constant dense<0.000000e+00> : vector<28x168xf32>
    %35 = tpu.matmul %32, %34, %cst_41 {dimension_numbers = #tpu.dot_dimension_numbers<[1], [0], [0], [1], [0, 0, 1, 1], [], []>} : vector<28x32xf32>, vector<32x168xf32>, vector<28x168xf32> -> vector<28x168xf32>
    %36 = arith.addf %30, %35 : vector<28x168xf32>
    %c0_42 = arith.constant 0 : index
    %c33 = arith.constant 33 : index
    %c0_43 = arith.constant 0 : index
    %37 = vector.load %arg1[%c0_42, %c33, %c0_43] : memref<1x96x32xf32, #tpu.memory_space<vmem>>, vector<1x28x32xf32>
    %38 = vector.shape_cast %37 : vector<1x28x32xf32> to vector<28x32xf32>
    %c1_44 = arith.constant 1 : index
    %c1_45 = arith.constant 1 : index
    %c0_46 = arith.constant 0 : index
    %c0_47 = arith.constant 0 : index
    %39 = vector.load %arg2[%c1_44, %c1_45, %c0_46, %c0_47] : memref<5x3x32x168xf32, #tpu.memory_space<vmem>>, vector<1x1x32x168xf32>
    %40 = vector.shape_cast %39 : vector<1x1x32x168xf32> to vector<32x168xf32>
    %cst_48 = arith.constant dense<0.000000e+00> : vector<28x168xf32>
    %41 = tpu.matmul %38, %40, %cst_48 {dimension_numbers = #tpu.dot_dimension_numbers<[1], [0], [0], [1], [0, 0, 1, 1], [], []>} : vector<28x32xf32>, vector<32x168xf32>, vector<28x168xf32> -> vector<28x168xf32>
    %42 = arith.addf %36, %41 : vector<28x168xf32>
    %c0_49 = arith.constant 0 : index
    %c34 = arith.constant 34 : index
    %c0_50 = arith.constant 0 : index
    %43 = vector.load %arg1[%c0_49, %c34, %c0_50] : memref<1x96x32xf32, #tpu.memory_space<vmem>>, vector<1x28x32xf32>
    %44 = vector.shape_cast %43 : vector<1x28x32xf32> to vector<28x32xf32>
    %c2_51 = arith.constant 2 : index
    %c1_52 = arith.constant 1 : index
    %c0_53 = arith.constant 0 : index
    %c0_54 = arith.constant 0 : index
    %45 = vector.load %arg2[%c2_51, %c1_52, %c0_53, %c0_54] : memref<5x3x32x168xf32, #tpu.memory_space<vmem>>, vector<1x1x32x168xf32>
    %46 = vector.shape_cast %45 : vector<1x1x32x168xf32> to vector<32x168xf32>
    %cst_55 = arith.constant dense<0.000000e+00> : vector<28x168xf32>
    %47 = tpu.matmul %44, %46, %cst_55 {dimension_numbers = #tpu.dot_dimension_numbers<[1], [0], [0], [1], [0, 0, 1, 1], [], []>} : vector<28x32xf32>, vector<32x168xf32>, vector<28x168xf32> -> vector<28x168xf32>
    %48 = arith.addf %42, %47 : vector<28x168xf32>
    %c0_56 = arith.constant 0 : index
    %c35 = arith.constant 35 : index
    %c0_57 = arith.constant 0 : index
    %49 = vector.load %arg1[%c0_56, %c35, %c0_57] : memref<1x96x32xf32, #tpu.memory_space<vmem>>, vector<1x28x32xf32>
    %50 = vector.shape_cast %49 : vector<1x28x32xf32> to vector<28x32xf32>
    %c3_58 = arith.constant 3 : index
    %c1_59 = arith.constant 1 : index
    %c0_60 = arith.constant 0 : index
    %c0_61 = arith.constant 0 : index
    %51 = vector.load %arg2[%c3_58, %c1_59, %c0_60, %c0_61] : memref<5x3x32x168xf32, #tpu.memory_space<vmem>>, vector<1x1x32x168xf32>
    %52 = vector.shape_cast %51 : vector<1x1x32x168xf32> to vector<32x168xf32>
    %cst_62 = arith.constant dense<0.000000e+00> : vector<28x168xf32>
    %53 = tpu.matmul %50, %52, %cst_62 {dimension_numbers = #tpu.dot_dimension_numbers<[1], [0], [0], [1], [0, 0, 1, 1], [], []>} : vector<28x32xf32>, vector<32x168xf32>, vector<28x168xf32> -> vector<28x168xf32>
    %54 = arith.addf %48, %53 : vector<28x168xf32>
    %c0_63 = arith.constant 0 : index
    %c36 = arith.constant 36 : index
    %c0_64 = arith.constant 0 : index
    %55 = vector.load %arg1[%c0_63, %c36, %c0_64] : memref<1x96x32xf32, #tpu.memory_space<vmem>>, vector<1x28x32xf32>
    %56 = vector.shape_cast %55 : vector<1x28x32xf32> to vector<28x32xf32>
    %c4_65 = arith.constant 4 : index
    %c1_66 = arith.constant 1 : index
    %c0_67 = arith.constant 0 : index
    %c0_68 = arith.constant 0 : index
    %57 = vector.load %arg2[%c4_65, %c1_66, %c0_67, %c0_68] : memref<5x3x32x168xf32, #tpu.memory_space<vmem>>, vector<1x1x32x168xf32>
    %58 = vector.shape_cast %57 : vector<1x1x32x168xf32> to vector<32x168xf32>
    %cst_69 = arith.constant dense<0.000000e+00> : vector<28x168xf32>
    %59 = tpu.matmul %56, %58, %cst_69 {dimension_numbers = #tpu.dot_dimension_numbers<[1], [0], [0], [1], [0, 0, 1, 1], [], []>} : vector<28x32xf32>, vector<32x168xf32>, vector<28x168xf32> -> vector<28x168xf32>
    %60 = arith.addf %54, %59 : vector<28x168xf32>
    %c0_70 = arith.constant 0 : index
    %c64 = arith.constant 64 : index
    %c0_71 = arith.constant 0 : index
    %61 = vector.load %arg1[%c0_70, %c64, %c0_71] : memref<1x96x32xf32, #tpu.memory_space<vmem>>, vector<1x28x32xf32>
    %62 = vector.shape_cast %61 : vector<1x28x32xf32> to vector<28x32xf32>
    %c0_72 = arith.constant 0 : index
    %c2_73 = arith.constant 2 : index
    %c0_74 = arith.constant 0 : index
    %c0_75 = arith.constant 0 : index
    %63 = vector.load %arg2[%c0_72, %c2_73, %c0_74, %c0_75] : memref<5x3x32x168xf32, #tpu.memory_space<vmem>>, vector<1x1x32x168xf32>
    %64 = vector.shape_cast %63 : vector<1x1x32x168xf32> to vector<32x168xf32>
    %cst_76 = arith.constant dense<0.000000e+00> : vector<28x168xf32>
    %65 = tpu.matmul %62, %64, %cst_76 {dimension_numbers = #tpu.dot_dimension_numbers<[1], [0], [0], [1], [0, 0, 1, 1], [], []>} : vector<28x32xf32>, vector<32x168xf32>, vector<28x168xf32> -> vector<28x168xf32>
    %66 = arith.addf %60, %65 : vector<28x168xf32>
    %c0_77 = arith.constant 0 : index
    %c65 = arith.constant 65 : index
    %c0_78 = arith.constant 0 : index
    %67 = vector.load %arg1[%c0_77, %c65, %c0_78] : memref<1x96x32xf32, #tpu.memory_space<vmem>>, vector<1x28x32xf32>
    %68 = vector.shape_cast %67 : vector<1x28x32xf32> to vector<28x32xf32>
    %c1_79 = arith.constant 1 : index
    %c2_80 = arith.constant 2 : index
    %c0_81 = arith.constant 0 : index
    %c0_82 = arith.constant 0 : index
    %69 = vector.load %arg2[%c1_79, %c2_80, %c0_81, %c0_82] : memref<5x3x32x168xf32, #tpu.memory_space<vmem>>, vector<1x1x32x168xf32>
    %70 = vector.shape_cast %69 : vector<1x1x32x168xf32> to vector<32x168xf32>
    %cst_83 = arith.constant dense<0.000000e+00> : vector<28x168xf32>
    %71 = tpu.matmul %68, %70, %cst_83 {dimension_numbers = #tpu.dot_dimension_numbers<[1], [0], [0], [1], [0, 0, 1, 1], [], []>} : vector<28x32xf32>, vector<32x168xf32>, vector<28x168xf32> -> vector<28x168xf32>
    %72 = arith.addf %66, %71 : vector<28x168xf32>
    %c0_84 = arith.constant 0 : index
    %c66 = arith.constant 66 : index
    %c0_85 = arith.constant 0 : index
    %73 = vector.load %arg1[%c0_84, %c66, %c0_85] : memref<1x96x32xf32, #tpu.memory_space<vmem>>, vector<1x28x32xf32>
    %74 = vector.shape_cast %73 : vector<1x28x32xf32> to vector<28x32xf32>
    %c2_86 = arith.constant 2 : index
    %c2_87 = arith.constant 2 : index
    %c0_88 = arith.constant 0 : index
    %c0_89 = arith.constant 0 : index
    %75 = vector.load %arg2[%c2_86, %c2_87, %c0_88, %c0_89] : memref<5x3x32x168xf32, #tpu.memory_space<vmem>>, vector<1x1x32x168xf32>
    %76 = vector.shape_cast %75 : vector<1x1x32x168xf32> to vector<32x168xf32>
    %cst_90 = arith.constant dense<0.000000e+00> : vector<28x168xf32>
    %77 = tpu.matmul %74, %76, %cst_90 {dimension_numbers = #tpu.dot_dimension_numbers<[1], [0], [0], [1], [0, 0, 1, 1], [], []>} : vector<28x32xf32>, vector<32x168xf32>, vector<28x168xf32> -> vector<28x168xf32>
    %78 = arith.addf %72, %77 : vector<28x168xf32>
    %c0_91 = arith.constant 0 : index
    %c67 = arith.constant 67 : index
    %c0_92 = arith.constant 0 : index
    %79 = vector.load %arg1[%c0_91, %c67, %c0_92] : memref<1x96x32xf32, #tpu.memory_space<vmem>>, vector<1x28x32xf32>
    %80 = vector.shape_cast %79 : vector<1x28x32xf32> to vector<28x32xf32>
    %c3_93 = arith.constant 3 : index
    %c2_94 = arith.constant 2 : index
    %c0_95 = arith.constant 0 : index
    %c0_96 = arith.constant 0 : index
    %81 = vector.load %arg2[%c3_93, %c2_94, %c0_95, %c0_96] : memref<5x3x32x168xf32, #tpu.memory_space<vmem>>, vector<1x1x32x168xf32>
    %82 = vector.shape_cast %81 : vector<1x1x32x168xf32> to vector<32x168xf32>
    %cst_97 = arith.constant dense<0.000000e+00> : vector<28x168xf32>
    %83 = tpu.matmul %80, %82, %cst_97 {dimension_numbers = #tpu.dot_dimension_numbers<[1], [0], [0], [1], [0, 0, 1, 1], [], []>} : vector<28x32xf32>, vector<32x168xf32>, vector<28x168xf32> -> vector<28x168xf32>
    %84 = arith.addf %78, %83 : vector<28x168xf32>
    %c0_98 = arith.constant 0 : index
    %c68 = arith.constant 68 : index
    %c0_99 = arith.constant 0 : index
    %85 = vector.load %arg1[%c0_98, %c68, %c0_99] : memref<1x96x32xf32, #tpu.memory_space<vmem>>, vector<1x28x32xf32>
    %86 = vector.shape_cast %85 : vector<1x28x32xf32> to vector<28x32xf32>
    %c4_100 = arith.constant 4 : index
    %c2_101 = arith.constant 2 : index
    %c0_102 = arith.constant 0 : index
    %c0_103 = arith.constant 0 : index
    %87 = vector.load %arg2[%c4_100, %c2_101, %c0_102, %c0_103] : memref<5x3x32x168xf32, #tpu.memory_space<vmem>>, vector<1x1x32x168xf32>
    %88 = vector.shape_cast %87 : vector<1x1x32x168xf32> to vector<32x168xf32>
    %cst_104 = arith.constant dense<0.000000e+00> : vector<28x168xf32>
    %89 = tpu.matmul %86, %88, %cst_104 {dimension_numbers = #tpu.dot_dimension_numbers<[1], [0], [0], [1], [0, 0, 1, 1], [], []>} : vector<28x32xf32>, vector<32x168xf32>, vector<28x168xf32> -> vector<28x168xf32>
    %90 = arith.addf %84, %89 : vector<28x168xf32>
    %c0_105 = arith.constant 0 : index
    %c0_106 = arith.constant 0 : index
    %91 = vector.load %arg3[%c0_105, %c0_106] : memref<1x168xf32, #tpu.memory_space<vmem>>, vector<1x168xf32>
    %92 = vector.broadcast %91 : vector<1x168xf32> to vector<28x168xf32>
    %93 = arith.addf %90, %92 : vector<28x168xf32>
    %cst_107 = arith.constant 0.000000e+00 : f32
    %94 = vector.broadcast %cst_107 : f32 to vector<28x168xf32>
    %95 = arith.maximumf %93, %94 : vector<28x168xf32>
    %96 = vector.extract_strided_slice %95 {offsets = [0, 0], sizes = [28, 162], strides = [1, 1]} : vector<28x168xf32> to vector<28x162xf32>
    %97 = vector.extract_strided_slice %95 {offsets = [0, 6], sizes = [28, 162], strides = [1, 1]} : vector<28x168xf32> to vector<28x162xf32>
    %98 = arith.maximumf %96, %97 : vector<28x162xf32>
    %99 = vector.extract_strided_slice %98 {offsets = [0, 0], sizes = [27, 162], strides = [1, 1]} : vector<28x162xf32> to vector<27x162xf32>
    %100 = vector.extract_strided_slice %98 {offsets = [1, 0], sizes = [27, 162], strides = [1, 1]} : vector<28x162xf32> to vector<27x162xf32>
    %101 = arith.maximumf %99, %100 : vector<27x162xf32>
    %102 = vector.extract_strided_slice %101 {offsets = [0, 0], sizes = [1, 162], strides = [1, 1]} : vector<27x162xf32> to vector<1x162xf32>
    %c0_108 = arith.constant 0 : index
    %c0_109 = arith.constant 0 : index
    %103 = vector.load %arg13[%c0_108, %c0_109] : memref<14x162xf32, #tpu.memory_space<vmem>>, vector<1x162xf32>
    tpu.vector_store %arg13[%c0_108, %c0_109], %102 {strides = array<i32>} : memref<14x162xf32, #tpu.memory_space<vmem>>, vector<1x162xf32>,
    %104 = vector.extract_strided_slice %101 {offsets = [2, 0], sizes = [1, 162], strides = [1, 1]} : vector<27x162xf32> to vector<1x162xf32>
    %c1_110 = arith.constant 1 : index
    %c0_111 = arith.constant 0 : index
    %105 = vector.load %arg13[%c1_110, %c0_111] : memref<14x162xf32, #tpu.memory_space<vmem>>, vector<1x162xf32>
    tpu.vector_store %arg13[%c1_110, %c0_111], %104 {strides = array<i32>} : memref<14x162xf32, #tpu.memory_space<vmem>>, vector<1x162xf32>,
    %106 = vector.extract_strided_slice %101 {offsets = [4, 0], sizes = [1, 162], strides = [1, 1]} : vector<27x162xf32> to vector<1x162xf32>
    %c2_112 = arith.constant 2 : index
    %c0_113 = arith.constant 0 : index
    %107 = vector.load %arg13[%c2_112, %c0_113] : memref<14x162xf32, #tpu.memory_space<vmem>>, vector<1x162xf32>
    tpu.vector_store %arg13[%c2_112, %c0_113], %106 {strides = array<i32>} : memref<14x162xf32, #tpu.memory_space<vmem>>, vector<1x162xf32>,
    %108 = vector.extract_strided_slice %101 {offsets = [6, 0], sizes = [1, 162], strides = [1, 1]} : vector<27x162xf32> to vector<1x162xf32>
    %c3_114 = arith.constant 3 : index
    %c0_115 = arith.constant 0 : index
    %109 = vector.load %arg13[%c3_114, %c0_115] : memref<14x162xf32, #tpu.memory_space<vmem>>, vector<1x162xf32>
    tpu.vector_store %arg13[%c3_114, %c0_115], %108 {strides = array<i32>} : memref<14x162xf32, #tpu.memory_space<vmem>>, vector<1x162xf32>,
    %110 = vector.extract_strided_slice %101 {offsets = [8, 0], sizes = [1, 162], strides = [1, 1]} : vector<27x162xf32> to vector<1x162xf32>
    %c4_116 = arith.constant 4 : index
    %c0_117 = arith.constant 0 : index
    %111 = vector.load %arg13[%c4_116, %c0_117] : memref<14x162xf32, #tpu.memory_space<vmem>>, vector<1x162xf32>
    tpu.vector_store %arg13[%c4_116, %c0_117], %110 {strides = array<i32>} : memref<14x162xf32, #tpu.memory_space<vmem>>, vector<1x162xf32>,
    %112 = vector.extract_strided_slice %101 {offsets = [10, 0], sizes = [1, 162], strides = [1, 1]} : vector<27x162xf32> to vector<1x162xf32>
    %c5 = arith.constant 5 : index
    %c0_118 = arith.constant 0 : index
    %113 = vector.load %arg13[%c5, %c0_118] : memref<14x162xf32, #tpu.memory_space<vmem>>, vector<1x162xf32>
    tpu.vector_store %arg13[%c5, %c0_118], %112 {strides = array<i32>} : memref<14x162xf32, #tpu.memory_space<vmem>>, vector<1x162xf32>,
    %114 = vector.extract_strided_slice %101 {offsets = [12, 0], sizes = [1, 162], strides = [1, 1]} : vector<27x162xf32> to vector<1x162xf32>
    %c6 = arith.constant 6 : index
    %c0_119 = arith.constant 0 : index
    %115 = vector.load %arg13[%c6, %c0_119] : memref<14x162xf32, #tpu.memory_space<vmem>>, vector<1x162xf32>
    tpu.vector_store %arg13[%c6, %c0_119], %114 {strides = array<i32>} : memref<14x162xf32, #tpu.memory_space<vmem>>, vector<1x162xf32>,
    %116 = vector.extract_strided_slice %101 {offsets = [14, 0], sizes = [1, 162], strides = [1, 1]} : vector<27x162xf32> to vector<1x162xf32>
    %c7 = arith.constant 7 : index
    %c0_120 = arith.constant 0 : index
    %117 = vector.load %arg13[%c7, %c0_120] : memref<14x162xf32, #tpu.memory_space<vmem>>, vector<1x162xf32>
    tpu.vector_store %arg13[%c7, %c0_120], %116 {strides = array<i32>} : memref<14x162xf32, #tpu.memory_space<vmem>>, vector<1x162xf32>,
    %118 = vector.extract_strided_slice %101 {offsets = [16, 0], sizes = [1, 162], strides = [1, 1]} : vector<27x162xf32> to vector<1x162xf32>
    %c8 = arith.constant 8 : index
    %c0_121 = arith.constant 0 : index
    %119 = vector.load %arg13[%c8, %c0_121] : memref<14x162xf32, #tpu.memory_space<vmem>>, vector<1x162xf32>
    tpu.vector_store %arg13[%c8, %c0_121], %118 {strides = array<i32>} : memref<14x162xf32, #tpu.memory_space<vmem>>, vector<1x162xf32>,
    %120 = vector.extract_strided_slice %101 {offsets = [18, 0], sizes = [1, 162], strides = [1, 1]} : vector<27x162xf32> to vector<1x162xf32>
    %c9 = arith.constant 9 : index
    %c0_122 = arith.constant 0 : index
    %121 = vector.load %arg13[%c9, %c0_122] : memref<14x162xf32, #tpu.memory_space<vmem>>, vector<1x162xf32>
    tpu.vector_store %arg13[%c9, %c0_122], %120 {strides = array<i32>} : memref<14x162xf32, #tpu.memory_space<vmem>>, vector<1x162xf32>,
    %122 = vector.extract_strided_slice %101 {offsets = [20, 0], sizes = [1, 162], strides = [1, 1]} : vector<27x162xf32> to vector<1x162xf32>
    %c10 = arith.constant 10 : index
    %c0_123 = arith.constant 0 : index
    %123 = vector.load %arg13[%c10, %c0_123] : memref<14x162xf32, #tpu.memory_space<vmem>>, vector<1x162xf32>
    tpu.vector_store %arg13[%c10, %c0_123], %122 {strides = array<i32>} : memref<14x162xf32, #tpu.memory_space<vmem>>, vector<1x162xf32>,
    %124 = vector.extract_strided_slice %101 {offsets = [22, 0], sizes = [1, 162], strides = [1, 1]} : vector<27x162xf32> to vector<1x162xf32>
    %c11 = arith.constant 11 : index
    %c0_124 = arith.constant 0 : index
    %125 = vector.load %arg13[%c11, %c0_124] : memref<14x162xf32, #tpu.memory_space<vmem>>, vector<1x162xf32>
    tpu.vector_store %arg13[%c11, %c0_124], %124 {strides = array<i32>} : memref<14x162xf32, #tpu.memory_space<vmem>>, vector<1x162xf32>,
    %126 = vector.extract_strided_slice %101 {offsets = [24, 0], sizes = [1, 162], strides = [1, 1]} : vector<27x162xf32> to vector<1x162xf32>
    %c12 = arith.constant 12 : index
    %c0_125 = arith.constant 0 : index
    %127 = vector.load %arg13[%c12, %c0_125] : memref<14x162xf32, #tpu.memory_space<vmem>>, vector<1x162xf32>
    tpu.vector_store %arg13[%c12, %c0_125], %126 {strides = array<i32>} : memref<14x162xf32, #tpu.memory_space<vmem>>, vector<1x162xf32>,
    %128 = vector.extract_strided_slice %101 {offsets = [26, 0], sizes = [1, 162], strides = [1, 1]} : vector<27x162xf32> to vector<1x162xf32>
    %c13 = arith.constant 13 : index
    %c0_126 = arith.constant 0 : index
    %129 = vector.load %arg13[%c13, %c0_126] : memref<14x162xf32, #tpu.memory_space<vmem>>, vector<1x162xf32>
    tpu.vector_store %arg13[%c13, %c0_126], %128 {strides = array<i32>} : memref<14x162xf32, #tpu.memory_space<vmem>>, vector<1x162xf32>,
    %cst_127 = arith.constant 0.000000e+00 : f32
    %130 = vector.broadcast %cst_127 : f32 to vector<10x160xf32>
    %c0_128 = arith.constant 0 : index
    %c0_129 = arith.constant 0 : index
    %131 = vector.load %arg13[%c0_128, %c0_129] : memref<14x162xf32, #tpu.memory_space<vmem>>, vector<10x162xf32>
    %c0_130 = arith.constant 0 : index
    %c0_131 = arith.constant 0 : index
    %c0_132 = arith.constant 0 : index
    %132 = vector.load %arg4[%c0_130, %c0_131, %c0_132] : memref<5x162x160xf32, #tpu.memory_space<vmem>>, vector<1x162x160xf32>
    %133 = vector.shape_cast %132 : vector<1x162x160xf32> to vector<162x160xf32>
    %cst_133 = arith.constant dense<0.000000e+00> : vector<10x160xf32>
    %134 = tpu.matmul %131, %133, %cst_133 {dimension_numbers = #tpu.dot_dimension_numbers<[1], [0], [0], [1], [0, 0, 1, 1], [], []>} : vector<10x162xf32>, vector<162x160xf32>, vector<10x160xf32> -> vector<10x160xf32>
    %135 = arith.addf %130, %134 : vector<10x160xf32>
    %c1_134 = arith.constant 1 : index
    %c0_135 = arith.constant 0 : index
    %136 = vector.load %arg13[%c1_134, %c0_135] : memref<14x162xf32, #tpu.memory_space<vmem>>, vector<10x162xf32>
    %c1_136 = arith.constant 1 : index
    %c0_137 = arith.constant 0 : index
    %c0_138 = arith.constant 0 : index
    %137 = vector.load %arg4[%c1_136, %c0_137, %c0_138] : memref<5x162x160xf32, #tpu.memory_space<vmem>>, vector<1x162x160xf32>
    %138 = vector.shape_cast %137 : vector<1x162x160xf32> to vector<162x160xf32>
    %cst_139 = arith.constant dense<0.000000e+00> : vector<10x160xf32>
    %139 = tpu.matmul %136, %138, %cst_139 {dimension_numbers = #tpu.dot_dimension_numbers<[1], [0], [0], [1], [0, 0, 1, 1], [], []>} : vector<10x162xf32>, vector<162x160xf32>, vector<10x160xf32> -> vector<10x160xf32>
    %140 = arith.addf %135, %139 : vector<10x160xf32>
    %c2_140 = arith.constant 2 : index
    %c0_141 = arith.constant 0 : index
    %141 = vector.load %arg13[%c2_140, %c0_141] : memref<14x162xf32, #tpu.memory_space<vmem>>, vector<10x162xf32>
    %c2_142 = arith.constant 2 : index
    %c0_143 = arith.constant 0 : index
    %c0_144 = arith.constant 0 : index
    %142 = vector.load %arg4[%c2_142, %c0_143, %c0_144] : memref<5x162x160xf32, #tpu.memory_space<vmem>>, vector<1x162x160xf32>
    %143 = vector.shape_cast %142 : vector<1x162x160xf32> to vector<162x160xf32>
    %cst_145 = arith.constant dense<0.000000e+00> : vector<10x160xf32>
    %144 = tpu.matmul %141, %143, %cst_145 {dimension_numbers = #tpu.dot_dimension_numbers<[1], [0], [0], [1], [0, 0, 1, 1], [], []>} : vector<10x162xf32>, vector<162x160xf32>, vector<10x160xf32> -> vector<10x160xf32>
    %145 = arith.addf %140, %144 : vector<10x160xf32>
    %c3_146 = arith.constant 3 : index
    %c0_147 = arith.constant 0 : index
    %146 = vector.load %arg13[%c3_146, %c0_147] : memref<14x162xf32, #tpu.memory_space<vmem>>, vector<10x162xf32>
    %c3_148 = arith.constant 3 : index
    %c0_149 = arith.constant 0 : index
    %c0_150 = arith.constant 0 : index
    %147 = vector.load %arg4[%c3_148, %c0_149, %c0_150] : memref<5x162x160xf32, #tpu.memory_space<vmem>>, vector<1x162x160xf32>
    %148 = vector.shape_cast %147 : vector<1x162x160xf32> to vector<162x160xf32>
    %cst_151 = arith.constant dense<0.000000e+00> : vector<10x160xf32>
    %149 = tpu.matmul %146, %148, %cst_151 {dimension_numbers = #tpu.dot_dimension_numbers<[1], [0], [0], [1], [0, 0, 1, 1], [], []>} : vector<10x162xf32>, vector<162x160xf32>, vector<10x160xf32> -> vector<10x160xf32>
    %150 = arith.addf %145, %149 : vector<10x160xf32>
    %c4_152 = arith.constant 4 : index
    %c0_153 = arith.constant 0 : index
    %151 = vector.load %arg13[%c4_152, %c0_153] : memref<14x162xf32, #tpu.memory_space<vmem>>, vector<10x162xf32>
    %c4_154 = arith.constant 4 : index
    %c0_155 = arith.constant 0 : index
    %c0_156 = arith.constant 0 : index
    %152 = vector.load %arg4[%c4_154, %c0_155, %c0_156] : memref<5x162x160xf32, #tpu.memory_space<vmem>>, vector<1x162x160xf32>
    %153 = vector.shape_cast %152 : vector<1x162x160xf32> to vector<162x160xf32>
    %cst_157 = arith.constant dense<0.000000e+00> : vector<10x160xf32>
    %154 = tpu.matmul %151, %153, %cst_157 {dimension_numbers = #tpu.dot_dimension_numbers<[1], [0], [0], [1], [0, 0, 1, 1], [], []>} : vector<10x162xf32>, vector<162x160xf32>, vector<10x160xf32> -> vector<10x160xf32>
    %155 = arith.addf %150, %154 : vector<10x160xf32>
    %c0_158 = arith.constant 0 : index
    %c0_159 = arith.constant 0 : index
    %156 = vector.load %arg5[%c0_158, %c0_159] : memref<1x160xf32, #tpu.memory_space<vmem>>, vector<1x160xf32>
    %157 = vector.broadcast %156 : vector<1x160xf32> to vector<10x160xf32>
    %158 = arith.addf %155, %157 : vector<10x160xf32>
    %cst_160 = arith.constant 0.000000e+00 : f32
    %159 = vector.broadcast %cst_160 : f32 to vector<10x160xf32>
    %160 = arith.maximumf %158, %159 : vector<10x160xf32>
    %161 = vector.extract_strided_slice %160 {offsets = [0, 0], sizes = [10, 144], strides = [1, 1]} : vector<10x160xf32> to vector<10x144xf32>
    %162 = vector.extract_strided_slice %160 {offsets = [0, 16], sizes = [10, 144], strides = [1, 1]} : vector<10x160xf32> to vector<10x144xf32>
    %163 = arith.maximumf %161, %162 : vector<10x144xf32>
    %164 = vector.extract_strided_slice %163 {offsets = [0, 0], sizes = [9, 144], strides = [1, 1]} : vector<10x144xf32> to vector<9x144xf32>
    %165 = vector.extract_strided_slice %163 {offsets = [1, 0], sizes = [9, 144], strides = [1, 1]} : vector<10x144xf32> to vector<9x144xf32>
    %166 = arith.maximumf %164, %165 : vector<9x144xf32>
    %cst_161 = arith.constant 0.000000e+00 : f32
    %167 = vector.broadcast %cst_161 : f32 to vector<1x120xf32>
    %168 = vector.extract_strided_slice %166 {offsets = [0, 0], sizes = [1, 144], strides = [1, 1]} : vector<9x144xf32> to vector<1x144xf32>
    %c0_162 = arith.constant 0 : index
    %c0_163 = arith.constant 0 : index
    %c0_164 = arith.constant 0 : index
    %169 = vector.load %arg6[%c0_162, %c0_163, %c0_164] : memref<5x144x120xf32, #tpu.memory_space<vmem>>, vector<1x144x120xf32>
    %170 = vector.shape_cast %169 : vector<1x144x120xf32> to vector<144x120xf32>
    %cst_165 = arith.constant dense<0.000000e+00> : vector<1x120xf32>
    %171 = tpu.matmul %168, %170, %cst_165 {dimension_numbers = #tpu.dot_dimension_numbers<[1], [0], [0], [1], [0, 0, 1, 1], [], []>} : vector<1x144xf32>, vector<144x120xf32>, vector<1x120xf32> -> vector<1x120xf32>
    %172 = arith.addf %167, %171 : vector<1x120xf32>
    %173 = vector.extract_strided_slice %166 {offsets = [2, 0], sizes = [1, 144], strides = [1, 1]} : vector<9x144xf32> to vector<1x144xf32>
    %c1_166 = arith.constant 1 : index
    %c0_167 = arith.constant 0 : index
    %c0_168 = arith.constant 0 : index
    %174 = vector.load %arg6[%c1_166, %c0_167, %c0_168] : memref<5x144x120xf32, #tpu.memory_space<vmem>>, vector<1x144x120xf32>
    %175 = vector.shape_cast %174 : vector<1x144x120xf32> to vector<144x120xf32>
    %cst_169 = arith.constant dense<0.000000e+00> : vector<1x120xf32>
    %176 = tpu.matmul %173, %175, %cst_169 {dimension_numbers = #tpu.dot_dimension_numbers<[1], [0], [0], [1], [0, 0, 1, 1], [], []>} : vector<1x144xf32>, vector<144x120xf32>, vector<1x120xf32> -> vector<1x120xf32>
    %177 = arith.addf %172, %176 : vector<1x120xf32>
    %178 = vector.extract_strided_slice %166 {offsets = [4, 0], sizes = [1, 144], strides = [1, 1]} : vector<9x144xf32> to vector<1x144xf32>
    %c2_170 = arith.constant 2 : index
    %c0_171 = arith.constant 0 : index
    %c0_172 = arith.constant 0 : index
    %179 = vector.load %arg6[%c2_170, %c0_171, %c0_172] : memref<5x144x120xf32, #tpu.memory_space<vmem>>, vector<1x144x120xf32>
    %180 = vector.shape_cast %179 : vector<1x144x120xf32> to vector<144x120xf32>
    %cst_173 = arith.constant dense<0.000000e+00> : vector<1x120xf32>
    %181 = tpu.matmul %178, %180, %cst_173 {dimension_numbers = #tpu.dot_dimension_numbers<[1], [0], [0], [1], [0, 0, 1, 1], [], []>} : vector<1x144xf32>, vector<144x120xf32>, vector<1x120xf32> -> vector<1x120xf32>
    %182 = arith.addf %177, %181 : vector<1x120xf32>
    %183 = vector.extract_strided_slice %166 {offsets = [6, 0], sizes = [1, 144], strides = [1, 1]} : vector<9x144xf32> to vector<1x144xf32>
    %c3_174 = arith.constant 3 : index
    %c0_175 = arith.constant 0 : index
    %c0_176 = arith.constant 0 : index
    %184 = vector.load %arg6[%c3_174, %c0_175, %c0_176] : memref<5x144x120xf32, #tpu.memory_space<vmem>>, vector<1x144x120xf32>
    %185 = vector.shape_cast %184 : vector<1x144x120xf32> to vector<144x120xf32>
    %cst_177 = arith.constant dense<0.000000e+00> : vector<1x120xf32>
    %186 = tpu.matmul %183, %185, %cst_177 {dimension_numbers = #tpu.dot_dimension_numbers<[1], [0], [0], [1], [0, 0, 1, 1], [], []>} : vector<1x144xf32>, vector<144x120xf32>, vector<1x120xf32> -> vector<1x120xf32>
    %187 = arith.addf %182, %186 : vector<1x120xf32>
    %188 = vector.extract_strided_slice %166 {offsets = [8, 0], sizes = [1, 144], strides = [1, 1]} : vector<9x144xf32> to vector<1x144xf32>
    %c4_178 = arith.constant 4 : index
    %c0_179 = arith.constant 0 : index
    %c0_180 = arith.constant 0 : index
    %189 = vector.load %arg6[%c4_178, %c0_179, %c0_180] : memref<5x144x120xf32, #tpu.memory_space<vmem>>, vector<1x144x120xf32>
    %190 = vector.shape_cast %189 : vector<1x144x120xf32> to vector<144x120xf32>
    %cst_181 = arith.constant dense<0.000000e+00> : vector<1x120xf32>
    %191 = tpu.matmul %188, %190, %cst_181 {dimension_numbers = #tpu.dot_dimension_numbers<[1], [0], [0], [1], [0, 0, 1, 1], [], []>} : vector<1x144xf32>, vector<144x120xf32>, vector<1x120xf32> -> vector<1x120xf32>
    %192 = arith.addf %187, %191 : vector<1x120xf32>
    %c0_182 = arith.constant 0 : index
    %c0_183 = arith.constant 0 : index
    %193 = vector.load %arg7[%c0_182, %c0_183] : memref<1x120xf32, #tpu.memory_space<vmem>>, vector<1x120xf32>
    %194 = arith.addf %192, %193 : vector<1x120xf32>
    %cst_184 = arith.constant 0.000000e+00 : f32
    %195 = vector.broadcast %cst_184 : f32 to vector<1x120xf32>
    %196 = arith.maximumf %194, %195 : vector<1x120xf32>
    %c0_185 = arith.constant 0 : index
    %c0_186 = arith.constant 0 : index
    %197 = vector.load %arg8[%c0_185, %c0_186] : memref<120x84xf32, #tpu.memory_space<vmem>>, vector<120x84xf32>
    %cst_187 = arith.constant dense<0.000000e+00> : vector<1x84xf32>
    %198 = tpu.matmul %196, %197, %cst_187 {dimension_numbers = #tpu.dot_dimension_numbers<[1], [0], [0], [1], [0, 0, 1, 1], [], []>} : vector<1x120xf32>, vector<120x84xf32>, vector<1x84xf32> -> vector<1x84xf32>
    %c0_188 = arith.constant 0 : index
    %c0_189 = arith.constant 0 : index
    %199 = vector.load %arg9[%c0_188, %c0_189] : memref<1x84xf32, #tpu.memory_space<vmem>>, vector<1x84xf32>
    %200 = arith.addf %198, %199 : vector<1x84xf32>
    %cst_190 = arith.constant 0.000000e+00 : f32
    %201 = vector.broadcast %cst_190 : f32 to vector<1x84xf32>
    %202 = arith.maximumf %200, %201 : vector<1x84xf32>
    %c0_191 = arith.constant 0 : index
    %c0_192 = arith.constant 0 : index
    %203 = vector.load %arg10[%c0_191, %c0_192] : memref<84x10xf32, #tpu.memory_space<vmem>>, vector<84x10xf32>
    %cst_193 = arith.constant dense<0.000000e+00> : vector<1x10xf32>
    %204 = tpu.matmul %202, %203, %cst_193 {dimension_numbers = #tpu.dot_dimension_numbers<[1], [0], [0], [1], [0, 0, 1, 1], [], []>} : vector<1x84xf32>, vector<84x10xf32>, vector<1x10xf32> -> vector<1x10xf32>
    %c0_194 = arith.constant 0 : index
    %c0_195 = arith.constant 0 : index
    %205 = vector.load %arg11[%c0_194, %c0_195] : memref<1x10xf32, #tpu.memory_space<vmem>>, vector<1x10xf32>
    %206 = arith.addf %204, %205 : vector<1x10xf32>
    %c0_196 = arith.constant 0 : index
    %c0_197 = arith.constant 0 : index
    %c0_198 = arith.constant 0 : index
    %207 = vector.load %arg12[%c0_196, %c0_197, %c0_198] : memref<1x1x10xf32, #tpu.memory_space<vmem>>, vector<1x1x10xf32>
    %208 = vector.shape_cast %207 : vector<1x1x10xf32> to vector<1x10xf32>
    %209 = vector.shape_cast %206 : vector<1x10xf32> to vector<1x1x10xf32>
    tpu.vector_store %arg12[%c0_196, %c0_197, %c0_198], %209 {strides = array<i32>} : memref<1x1x10xf32, #tpu.memory_space<vmem>>, vector<1x1x10xf32>,
    return
  }
  func.func @transform_0(%arg0: i32) -> (i32, i32, i32) {
    %c0_i32 = arith.constant 0 : i32
    %c0_i32_0 = arith.constant 0 : i32
    %c0_i32_1 = arith.constant 0 : i32
    return %arg0, %c0_i32, %c0_i32_0 : i32, i32, i32
  }
  func.func @transform_1(%arg0: i32) -> (i32, i32, i32, i32) {
    %c0_i32 = arith.constant 0 : i32
    %c0_i32_0 = arith.constant 0 : i32
    %c0_i32_1 = arith.constant 0 : i32
    %c0_i32_2 = arith.constant 0 : i32
    %c0_i32_3 = arith.constant 0 : i32
    return %c0_i32, %c0_i32_0, %c0_i32_1, %c0_i32_2 : i32, i32, i32, i32
  }
  func.func @transform_2(%arg0: i32) -> (i32, i32) {
    %c0_i32 = arith.constant 0 : i32
    %c0_i32_0 = arith.constant 0 : i32
    %c0_i32_1 = arith.constant 0 : i32
    return %c0_i32, %c0_i32_0 : i32, i32
  }
  func.func @transform_3(%arg0: i32) -> (i32, i32, i32) {
    %c0_i32 = arith.constant 0 : i32
    %c0_i32_0 = arith.constant 0 : i32
    %c0_i32_1 = arith.constant 0 : i32
    %c0_i32_2 = arith.constant 0 : i32
    return %c0_i32, %c0_i32_0, %c0_i32_1 : i32, i32, i32
  }
  func.func @transform_4(%arg0: i32) -> (i32, i32) {
    %c0_i32 = arith.constant 0 : i32
    %c0_i32_0 = arith.constant 0 : i32
    %c0_i32_1 = arith.constant 0 : i32
    return %c0_i32, %c0_i32_0 : i32, i32
  }
  func.func @transform_5(%arg0: i32) -> (i32, i32, i32) {
    %c0_i32 = arith.constant 0 : i32
    %c0_i32_0 = arith.constant 0 : i32
    %c0_i32_1 = arith.constant 0 : i32
    %c0_i32_2 = arith.constant 0 : i32
    return %c0_i32, %c0_i32_0, %c0_i32_1 : i32, i32, i32
  }
  func.func @transform_6(%arg0: i32) -> (i32, i32) {
    %c0_i32 = arith.constant 0 : i32
    %c0_i32_0 = arith.constant 0 : i32
    %c0_i32_1 = arith.constant 0 : i32
    return %c0_i32, %c0_i32_0 : i32, i32
  }
  func.func @transform_7(%arg0: i32) -> (i32, i32) {
    %c0_i32 = arith.constant 0 : i32
    %c0_i32_0 = arith.constant 0 : i32
    %c0_i32_1 = arith.constant 0 : i32
    return %c0_i32, %c0_i32_0 : i32, i32
  }
  func.func @transform_8(%arg0: i32) -> (i32, i32) {
    %c0_i32 = arith.constant 0 : i32
    %c0_i32_0 = arith.constant 0 : i32
    %c0_i32_1 = arith.constant 0 : i32
    return %c0_i32, %c0_i32_0 : i32, i32
  }
  func.func @transform_9(%arg0: i32) -> (i32, i32) {
    %c0_i32 = arith.constant 0 : i32
    %c0_i32_0 = arith.constant 0 : i32
    %c0_i32_1 = arith.constant 0 : i32
    return %c0_i32, %c0_i32_0 : i32, i32
  }
  func.func @transform_10(%arg0: i32) -> (i32, i32) {
    %c0_i32 = arith.constant 0 : i32
    %c0_i32_0 = arith.constant 0 : i32
    %c0_i32_1 = arith.constant 0 : i32
    return %c0_i32, %c0_i32_0 : i32, i32
  }
  func.func @transform_11(%arg0: i32) -> (i32, i32, i32) {
    %c0_i32 = arith.constant 0 : i32
    %c0_i32_0 = arith.constant 0 : i32
    %c0_i32_1 = arith.constant 0 : i32
    return %arg0, %c0_i32, %c0_i32_0 : i32, i32, i32
  }
}

</mosaic_0001>

<llo_original>
// kernel: convnet_forward.1
$region0: #{convnet_forward.1}
  #allocation0 [shape = 'u32[]', space=smem, size = 0x4, offset = 0x4, fixed_abs, tag = 'smem constant byte address 0x4 - core index']
  #allocation1 [shape = 'u32[144,128]{1,0:T(1,128)}', space=vmem, size = 0x12000, scoped, tag = 'internal scratch']
  #allocation2 [shape = 'f32[14,162]{1,0:T(8,128)}', space=vmem, size = 0x4000, scoped, tag = 'scratch operand']
  %s0 = inlined_call_operand.vmem [shape: f32[2,96,32], index: 0, kind: input, shape index: {}]
  %s1 = inlined_call_operand.vmem [shape: f32[5,3,32,168], index: 1, kind: input, shape index: {}]
  %s2 = inlined_call_operand.vmem [shape: f32[1,168], index: 2, kind: input, shape index: {}]
  %s3 = inlined_call_operand.vmem [shape: f32[5,162,160], index: 3, kind: input, shape index: {}]
  %s4 = inlined_call_operand.vmem [shape: f32[1,160], index: 4, kind: input, shape index: {}]
  %s5 = inlined_call_operand.vmem [shape: f32[5,144,120], index: 5, kind: input, shape index: {}]
  %s6 = inlined_call_operand.vmem [shape: f32[1,120], index: 6, kind: input, shape index: {}]
  %s7 = inlined_call_operand.vmem [shape: f32[120,84], index: 7, kind: input, shape index: {}]
  %s8 = inlined_call_operand.vmem [shape: f32[1,84], index: 8, kind: input, shape index: {}]
  %s9 = inlined_call_operand.vmem [shape: f32[84,10], index: 9, kind: input, shape index: {}]
  %s10 = inlined_call_operand.vmem [shape: f32[1,10], index: 10, kind: input, shape index: {}]
  %s11 = inlined_call_operand.hbm [shape: f32[2,1,10], index: 11, kind: output, shape index: {}]
  %s12 = sld [smem:[#allocation0]]
  $region77: #{convnet_forward.1} parent=0
    _
  %s14 = ssub.s32 1, %s12
  %s15 = scalar_select 0, %s14, %s12
  $region1: #{convnet_forward.1} parent=0
    #allocation3 [shape = 'u8[1024]{0}', space=vmem, size = 0x400, scoped, tag = 'output window, operand 0']
    #allocation4 [shape = 's32[2]{0}', space=sflag, size = 0x8, scoped, tag = 'scoped memory for convnet_forward.1']
    %16 = vsyncpa [#allocation4], 0
    %s17 = scalar_lea.sflag [#allocation4], 1
    %18 = vsyncpa %s17, 0
    loop: start=0, step=1, limit=4
    $region2: #{convnet_forward.1} parent=1 // loop_pre_header
      _
    $region3: #{convnet_forward.1} parent=1 // loop_header
      %s20 = sphi 0, %s24
      %p21 = scmp.ge.s32.totalorder %s20, 4
      %s30 = sphi 0, %s32
      %s33 = sphi 0, %s30
      %s34 = sphi 0, %s33
      %s50 = sphi 0, %s34
      %s54 = sphi 0, %s54
      %s56 = sphi 0, %s54
      %s57 = sphi 0, %s56
      %s71 = sphi 0, %s57
      %s75 = sphi 0, %s75
      %s77 = sphi 0, %s75
      %s78 = sphi 0, %s77
      %s92 = sphi 0, %s78
      %s96 = sphi 0, %s96
      %s98 = sphi 0, %s96
      %s99 = sphi 0, %s98
      %s113 = sphi 0, %s99
      %s117 = sphi 0, %s117
      %s119 = sphi 0, %s117
      %s120 = sphi 0, %s119
      %s134 = sphi 0, %s120
      %s138 = sphi 0, %s138
      %s140 = sphi 0, %s138
      %s141 = sphi 0, %s140
      %s155 = sphi 0, %s141
      %s159 = sphi 0, %s159
      %s161 = sphi 0, %s159
      %s162 = sphi 0, %s161
      %s176 = sphi 0, %s162
      %s180 = sphi 0, %s180
      %s182 = sphi 0, %s180
      %s183 = sphi 0, %s182
      %s197 = sphi 0, %s183
      %s201 = sphi 0, %s201
      %s203 = sphi 0, %s201
      %s204 = sphi 0, %s203
      %s218 = sphi 0, %s204
      %s222 = sphi 0, %s222
      %s224 = sphi 0, %s222
      %s225 = sphi 0, %s224
      %s239 = sphi 0, %s225
      %s243 = sphi 0, %s243
      %s245 = sphi 0, %s243
      %s246 = sphi 0, %s245
      %s260 = sphi 0, %s246
      %s266 = sphi 0, %s268
      %s269 = sphi 0, %s266
      %s270 = sphi 0, %s269
      %s286 = sphi 0, %s270
    $region4: #{convnet_forward.1} parent=1 // loop_header_branch
      %23 = sbr.rel (%p21) target = $region8
    $region5: #{convnet_forward.1} parent=1 // loop_body
      %s25 = ssub.s32 %s20, 1
      %s26 = ssub.s32 %s20, 2
      %s27 = sadd.s32 %s20, 1
      %s28 = ssub.s32 %s20, %s27
      %p29 = scmp.eq.s32.totalorder %s28, 0
      %s31 = sadd.s32 %s30, 1
      %s32 = scalar_select %p29, %s30, %s31
      %p35 = pneg %p29
      %p36 = scmp.eq.s32.totalorder %s20, 1
      %p37 = por %p35, %p36
      %p38 = scmp.ne.s32.totalorder %s30, %s33
      %p39 = scmp.eq.s32.totalorder %s20, 0
      %p40 = por %p38, %p39
      %p41 = scmp.ne.s32.totalorder %s30, %s33
      %p42 = scmp.eq.s32.totalorder %s25, 1
      %p43 = por %p41, %p42
      %p44 = scmp.ne.s32.totalorder %s33, %s34
      %p45 = scmp.eq.s32.totalorder %s25, 0
      %p46 = por %p44, %p45
      %p47 = scmp.ne.s32.totalorder %s33, %s34
      %p48 = scmp.eq.s32.totalorder %s26, 1
      %p49 = por %p47, %p48
      %p51 = scmp.ne.s32.totalorder %s34, %s50
      %p52 = scmp.eq.s32.totalorder %s26, 0
      %p53 = por %p51, %p52
      %s55 = sadd.s32 %s54, 1
      %p58 = scmp.eq.s32.totalorder %s20, 1
      %p59 = scmp.ne.s32.totalorder %s54, %s56
      %p60 = scmp.eq.s32.totalorder %s20, 0
      %p61 = por %p59, %p60
      %p62 = scmp.ne.s32.totalorder %s54, %s56
      %p63 = scmp.eq.s32.totalorder %s25, 1
      %p64 = por %p62, %p63
      %p65 = scmp.ne.s32.totalorder %s56, %s57
      %p66 = scmp.eq.s32.totalorder %s25, 0
      %p67 = por %p65, %p66
      %p68 = scmp.ne.s32.totalorder %s56, %s57
      %p69 = scmp.eq.s32.totalorder %s26, 1
      %p70 = por %p68, %p69
      %p72 = scmp.ne.s32.totalorder %s57, %s71
      %p73 = scmp.eq.s32.totalorder %s26, 0
      %p74 = por %p72, %p73
      %s76 = sadd.s32 %s75, 1
      %p79 = scmp.eq.s32.totalorder %s20, 1
      %p80 = scmp.ne.s32.totalorder %s75, %s77
      %p81 = scmp.eq.s32.totalorder %s20, 0
      %p82 = por %p80, %p81
      %p83 = scmp.ne.s32.totalorder %s75, %s77
      %p84 = scmp.eq.s32.totalorder %s25, 1
      %p85 = por %p83, %p84
      %p86 = scmp.ne.s32.totalorder %s77, %s78
      %p87 = scmp.eq.s32.totalorder %s25, 0
      %p88 = por %p86, %p87
      %p89 = scmp.ne.s32.totalorder %s77, %s78
      %p90 = scmp.eq.s32.totalorder %s26, 1
      %p91 = por %p89, %p90
      %p93 = scmp.ne.s32.totalorder %s78, %s92
      %p94 = scmp.eq.s32.totalorder %s26, 0
      %p95 = por %p93, %p94
      %s97 = sadd.s32 %s96, 1
      %p100 = scmp.eq.s32.totalorder %s20, 1
      %p101 = scmp.ne.s32.totalorder %s96, %s98
      %p102 = scmp.eq.s32.totalorder %s20, 0
      %p103 = por %p101, %p102
      %p104 = scmp.ne.s32.totalorder %s96, %s98
      %p105 = scmp.eq.s32.totalorder %s25, 1
      %p106 = por %p104, %p105
      %p107 = scmp.ne.s32.totalorder %s98, %s99
      %p108 = scmp.eq.s32.totalorder %s25, 0
      %p109 = por %p107, %p108
      %p110 = scmp.ne.s32.totalorder %s98, %s99
      %p111 = scmp.eq.s32.totalorder %s26, 1
      %p112 = por %p110, %p111
      %p114 = scmp.ne.s32.totalorder %s99, %s113
      %p115 = scmp.eq.s32.totalorder %s26, 0
      %p116 = por %p114, %p115
      %s118 = sadd.s32 %s117, 1
      %p121 = scmp.eq.s32.totalorder %s20, 1
      %p122 = scmp.ne.s32.totalorder %s117, %s119
      %p123 = scmp.eq.s32.totalorder %s20, 0
      %p124 = por %p122, %p123
      %p125 = scmp.ne.s32.totalorder %s117, %s119
      %p126 = scmp.eq.s32.totalorder %s25, 1
      %p127 = por %p125, %p126
      %p128 = scmp.ne.s32.totalorder %s119, %s120
      %p129 = scmp.eq.s32.totalorder %s25, 0
      %p130 = por %p128, %p129
      %p131 = scmp.ne.s32.totalorder %s119, %s120
      %p132 = scmp.eq.s32.totalorder %s26, 1
      %p133 = por %p131, %p132
      %p135 = scmp.ne.s32.totalorder %s120, %s134
      %p136 = scmp.eq.s32.totalorder %s26, 0
      %p137 = por %p135, %p136
      %s139 = sadd.s32 %s138, 1
      %p142 = scmp.eq.s32.totalorder %s20, 1
      %p143 = scmp.ne.s32.totalorder %s138, %s140
      %p144 = scmp.eq.s32.totalorder %s20, 0
      %p145 = por %p143, %p144
      %p146 = scmp.ne.s32.totalorder %s138, %s140
      %p147 = scmp.eq.s32.totalorder %s25, 1
      %p148 = por %p146, %p147
      %p149 = scmp.ne.s32.totalorder %s140, %s141
      %p150 = scmp.eq.s32.totalorder %s25, 0
      %p151 = por %p149, %p150
      %p152 = scmp.ne.s32.totalorder %s140, %s141
      %p153 = scmp.eq.s32.totalorder %s26, 1
      %p154 = por %p152, %p153
      %p156 = scmp.ne.s32.totalorder %s141, %s155
      %p157 = scmp.eq.s32.totalorder %s26, 0
      %p158 = por %p156, %p157
      %s160 = sadd.s32 %s159, 1
      %p163 = scmp.eq.s32.totalorder %s20, 1
      %p164 = scmp.ne.s32.totalorder %s159, %s161
      %p165 = scmp.eq.s32.totalorder %s20, 0
      %p166 = por %p164, %p165
      %p167 = scmp.ne.s32.totalorder %s159, %s161
      %p168 = scmp.eq.s32.totalorder %s25, 1
      %p169 = por %p167, %p168
      %p170 = scmp.ne.s32.totalorder %s161, %s162
      %p171 = scmp.eq.s32.totalorder %s25, 0
      %p172 = por %p170, %p171
      %p173 = scmp.ne.s32.totalorder %s161, %s162
      %p174 = scmp.eq.s32.totalorder %s26, 1
      %p175 = por %p173, %p174
      %p177 = scmp.ne.s32.totalorder %s162, %s176
      %p178 = scmp.eq.s32.totalorder %s26, 0
      %p179 = por %p177, %p178
      %s181 = sadd.s32 %s180, 1
      %p184 = scmp.eq.s32.totalorder %s20, 1
      %p185 = scmp.ne.s32.totalorder %s180, %s182
      %p186 = scmp.eq.s32.totalorder %s20, 0
      %p187 = por %p185, %p186
      %p188 = scmp.ne.s32.totalorder %s180, %s182
      %p189 = scmp.eq.s32.totalorder %s25, 1
      %p190 = por %p188, %p189
      %p191 = scmp.ne.s32.totalorder %s182, %s183
      %p192 = scmp.eq.s32.totalorder %s25, 0
      %p193 = por %p191, %p192
      %p194 = scmp.ne.s32.totalorder %s182, %s183
      %p195 = scmp.eq.s32.totalorder %s26, 1
      %p196 = por %p194, %p195
      %p198 = scmp.ne.s32.totalorder %s183, %s197
      %p199 = scmp.eq.s32.totalorder %s26, 0
      %p200 = por %p198, %p199
      %s202 = sadd.s32 %s201, 1
      %p205 = scmp.eq.s32.totalorder %s20, 1
      %p206 = scmp.ne.s32.totalorder %s201, %s203
      %p207 = scmp.eq.s32.totalorder %s20, 0
      %p208 = por %p206, %p207
      %p209 = scmp.ne.s32.totalorder %s201, %s203
      %p210 = scmp.eq.s32.totalorder %s25, 1
      %p211 = por %p209, %p210
      %p212 = scmp.ne.s32.totalorder %s203, %s204
      %p213 = scmp.eq.s32.totalorder %s25, 0
      %p214 = por %p212, %p213
      %p215 = scmp.ne.s32.totalorder %s203, %s204
      %p216 = scmp.eq.s32.totalorder %s26, 1
      %p217 = por %p215, %p216
      %p219 = scmp.ne.s32.totalorder %s204, %s218
      %p220 = scmp.eq.s32.totalorder %s26, 0
      %p221 = por %p219, %p220
      %s223 = sadd.s32 %s222, 1
      %p226 = scmp.eq.s32.totalorder %s20, 1
      %p227 = scmp.ne.s32.totalorder %s222, %s224
      %p228 = scmp.eq.s32.totalorder %s20, 0
      %p229 = por %p227, %p228
      %p230 = scmp.ne.s32.totalorder %s222, %s224
      %p231 = scmp.eq.s32.totalorder %s25, 1
      %p232 = por %p230, %p231
      %p233 = scmp.ne.s32.totalorder %s224, %s225
      %p234 = scmp.eq.s32.totalorder %s25, 0
      %p235 = por %p233, %p234
      %p236 = scmp.ne.s32.totalorder %s224, %s225
      %p237 = scmp.eq.s32.totalorder %s26, 1
      %p238 = por %p236, %p237
      %p240 = scmp.ne.s32.totalorder %s225, %s239
      %p241 = scmp.eq.s32.totalorder %s26, 0
      %p242 = por %p240, %p241
      %s244 = sadd.s32 %s243, 1
      %p247 = scmp.eq.s32.totalorder %s20, 1
      %p248 = scmp.ne.s32.totalorder %s243, %s245
      %p249 = scmp.eq.s32.totalorder %s20, 0
      %p250 = por %p248, %p249
      %p251 = scmp.ne.s32.totalorder %s243, %s245
      %p252 = scmp.eq.s32.totalorder %s25, 1
      %p253 = por %p251, %p252
      %p254 = scmp.ne.s32.totalorder %s245, %s246
      %p255 = scmp.eq.s32.totalorder %s25, 0
      %p256 = por %p254, %p255
      %p257 = scmp.ne.s32.totalorder %s245, %s246
      %p258 = scmp.eq.s32.totalorder %s26, 1
      %p259 = por %p257, %p258
      %p261 = scmp.ne.s32.totalorder %s246, %s260
      %p262 = scmp.eq.s32.totalorder %s26, 0
      %p263 = por %p261, %p262
      %s264 = ssub.s32 %s20, %s27
      %p265 = scmp.eq.s32.totalorder %s264, 0
      %s267 = sadd.s32 %s266, 1
      %s268 = scalar_select %p265, %s266, %s267
      %p271 = pneg %p265
      %p272 = scmp.eq.s32.totalorder %s20, 1
      %p273 = por %p271, %p272
      %p274 = scmp.ne.s32.totalorder %s266, %s269
      %p275 = scmp.eq.s32.totalorder %s20, 0
      %p276 = por %p274, %p275
      %p277 = scmp.ne.s32.totalorder %s266, %s269
      %p278 = scmp.eq.s32.totalorder %s25, 1
      %p279 = por %p277, %p278
      %p280 = scmp.ne.s32.totalorder %s269, %s270
      %p281 = scmp.eq.s32.totalorder %s25, 0
      %p282 = por %p280, %p281
      %p283 = scmp.ne.s32.totalorder %s269, %s270
      %p284 = scmp.eq.s32.totalorder %s26, 1
      %p285 = por %p283, %p284
      %p287 = scmp.ne.s32.totalorder %s270, %s286
      %p288 = scmp.eq.s32.totalorder %s26, 0
      %p289 = por %p287, %p288
      %p290 = scmp.le.s32.totalorder 1, %s20
      %p291 = scmp.lt.s32.totalorder %s20, 3
      %p292 = pnand %p290, %p291
      %p293 = pneg %p292
      // Predicated region
      $region9: #{convnet_forward.1} parent=5 // pred_check
        _
      $region10: #{convnet_forward.1} parent=5 // pred_check_branch
        %295 = sbr.rel (%p292) target = $region12
      $region11: #{convnet_forward.1} parent=5 // pred_region
        %s296 = ssub.s32 %s20, 1
        // Predicated region
        $region13: #{convnet_forward.1} parent=11 // pred_check
          %p297 = pneg %p67
        $region14: #{convnet_forward.1} parent=11 // pred_check_branch
          %299 = sbr.rel (%p297) target = $region16
        $region15: #{convnet_forward.1} parent=11 // pred_region
          _
        $region16: #{convnet_forward.1} parent=11 // pred_fallthru
          _
        // Predicated region
        $region17: #{convnet_forward.1} parent=11 // pred_check
          %p300 = pneg %p88
        $region18: #{convnet_forward.1} parent=11 // pred_check_branch
          %302 = sbr.rel (%p300) target = $region20
        $region19: #{convnet_forward.1} parent=11 // pred_region
          _
        $region20: #{convnet_forward.1} parent=11 // pred_fallthru
          _
        // Predicated region
        $region21: #{convnet_forward.1} parent=11 // pred_check
          %p303 = pneg %p109
        $region22: #{convnet_forward.1} parent=11 // pred_check_branch
          %305 = sbr.rel (%p303) target = $region24
        $region23: #{convnet_forward.1} parent=11 // pred_region
          _
        $region24: #{convnet_forward.1} parent=11 // pred_fallthru
          _
        // Predicated region
        $region25: #{convnet_forward.1} parent=11 // pred_check
          %p306 = pneg %p130
        $region26: #{convnet_forward.1} parent=11 // pred_check_branch
          %308 = sbr.rel (%p306) target = $region28
        $region27: #{convnet_forward.1} parent=11 // pred_region
          _
        $region28: #{convnet_forward.1} parent=11 // pred_fallthru
          _
        // Predicated region
        $region29: #{convnet_forward.1} parent=11 // pred_check
          %p309 = pneg %p151
        $region30: #{convnet_forward.1} parent=11 // pred_check_branch
          %311 = sbr.rel (%p309) target = $region32
        $region31: #{convnet_forward.1} parent=11 // pred_region
          _
        $region32: #{convnet_forward.1} parent=11 // pred_fallthru
          _
        // Predicated region
        $region33: #{convnet_forward.1} parent=11 // pred_check
          %p312 = pneg %p172
        $region34: #{convnet_forward.1} parent=11 // pred_check_branch
          %314 = sbr.rel (%p312) target = $region36
        $region35: #{convnet_forward.1} parent=11 // pred_region
          _
        $region36: #{convnet_forward.1} parent=11 // pred_fallthru
          _
        // Predicated region
        $region37: #{convnet_forward.1} parent=11 // pred_check
          %p315 = pneg %p193
        $region38: #{convnet_forward.1} parent=11 // pred_check_branch
          %317 = sbr.rel (%p315) target = $region40
        $region39: #{convnet_forward.1} parent=11 // pred_region
          _
        $region40: #{convnet_forward.1} parent=11 // pred_fallthru
          _
        // Predicated region
        $region41: #{convnet_forward.1} parent=11 // pred_check
          %p318 = pneg %p214
        $region42: #{convnet_forward.1} parent=11 // pred_check_branch
          %320 = sbr.rel (%p318) target = $region44
        $region43: #{convnet_forward.1} parent=11 // pred_region
          _
        $region44: #{convnet_forward.1} parent=11 // pred_fallthru
          _
        // Predicated region
        $region45: #{convnet_forward.1} parent=11 // pred_check
          %p321 = pneg %p235
        $region46: #{convnet_forward.1} parent=11 // pred_check_branch
          %323 = sbr.rel (%p321) target = $region48
        $region47: #{convnet_forward.1} parent=11 // pred_region
          _
        $region48: #{convnet_forward.1} parent=11 // pred_fallthru
          _
        // Predicated region
        $region49: #{convnet_forward.1} parent=11 // pred_check
          %p324 = pneg %p256
        $region50: #{convnet_forward.1} parent=11 // pred_check_branch
          %326 = sbr.rel (%p324) target = $region52
        $region51: #{convnet_forward.1} parent=11 // pred_region
          _
        $region52: #{convnet_forward.1} parent=11 // pred_fallthru
          _
      $region12: #{convnet_forward.1} parent=5 // pred_fallthru
        _
      %p327 = scmp.lt.s32.totalorder %s20, 2
      // Predicated region
      $region53: #{convnet_forward.1} parent=5 // pred_check
        %p328 = pneg %p327
      $region54: #{convnet_forward.1} parent=5 // pred_check_branch
        %330 = sbr.rel (%p328) target = $region56
      $region55: #{convnet_forward.1} parent=5 // pred_region
        // Predicated region
        $region57: #{convnet_forward.1} parent=55 // pred_check
          %p331 = pneg %p40
        $region58: #{convnet_forward.1} parent=55 // pred_check_branch
          %333 = sbr.rel (%p331) target = $region60
        $region59: #{convnet_forward.1} parent=55 // pred_region
          %p334 = scmp.lt.s32.totalorder %s20, 1
          %s335 = scalar_select %p334, %s20, 1
          %s336 = smul.addr %s335, 12
          %s337 = smul.addr %s336, 8
          %s338 = scalar_lea.vmem %s0, %s337
        $region60: #{convnet_forward.1} parent=55 // pred_fallthru
          _
      $region56: #{convnet_forward.1} parent=5 // pred_fallthru
        _
      %p339 = scmp.le.s32.totalorder 1, %s20
      %p340 = scmp.lt.s32.totalorder %s20, 3
      %p341 = pnand %p339, %p340
      %p342 = pneg %p341
      // Predicated region
      $region61: #{convnet_forward.1} parent=5 // pred_check
        _
      $region62: #{convnet_forward.1} parent=5 // pred_check_branch
        %344 = sbr.rel (%p341) target = $region64
      $region63: #{convnet_forward.1} parent=5 // pred_region
        %s345 = ssub.s32 %s20, 1
        %p346 = scmp.lt.s32.totalorder %s25, 1
        %s347 = scalar_select %p346, %s25, 1
        %s348 = smul.addr %s347, 12
        %s349 = smul.addr %s348, 8
        %s350 = scalar_lea.vmem %s0, %s349
        %p351 = pneg %p46
        %p352 = pneg %p43
        %p353 = pneg %p67
        %p354 = pneg %p64
        %p355 = pneg %p88
        %p356 = pneg %p85
        %p357 = pneg %p109
        %p358 = pneg %p106
        %p359 = pneg %p130
        %p360 = pneg %p127
        %p361 = pneg %p151
        %p362 = pneg %p148
        %p363 = pneg %p172
        %p364 = pneg %p169
        %p365 = pneg %p193
        %p366 = pneg %p190
        %p367 = pneg %p214
        %p368 = pneg %p211
        %p369 = pneg %p235
        %p370 = pneg %p232
        %p371 = pneg %p256
        %p372 = pneg %p253
        %p373 = pneg %p282
        %p374 = pneg %p279
        %s375 = sand.u32 %s269, 1
        %s376 = scalar_lea.sflag [#allocation4], %s375
        %s377 = sand.u32 %s269, 1
        %s378 = scalar_lea.vmem [#allocation3], %s377
        %p379 = scmp.lt.s32.totalorder %s25, 1
        %s380 = scalar_select %p379, %s25, 1
        %s381 = smul.addr %s380, 12
        %s382 = smul.addr %s381, 8
        %s383 = scalar_lea.vmem %s0, %s382
        %v384 = vld [vmem:[%s383] sm:$0xff]
        %v385 = vld [vmem:[%s383 + $0x8] sm:$0xff]
        %v386 = vld [vmem:[%s383 + $0x10] sm:$0xff]
        %v387 = vld [vmem:[%s383 + $0x18] sm:$0xf]
        %v388 = vld [vmem:[%s1] sm:$0xff]
        %v389 = vld [vmem:[%s1 + $0x8] sm:$0xff]
        %v390 = vld [vmem:[%s1 + $0x10] sm:$0xff]
        %v391 = vld [vmem:[%s1 + $0x18] sm:$0xff]
        %v392 = vld [vmem:[%s1 + $0x20] sm:$0xff]
        %v393 = vld [vmem:[%s1 + $0x28] sm:$0xff]
        %v394 = vld [vmem:[%s1 + $0x30] sm:$0xff]
        %v395 = vld [vmem:[%s1 + $0x38] sm:$0xff]
        %v396 = vld [vmem:[%s383 + $0x1] sm:$0xff]
        %v397 = vld [vmem:[%s383 + $0x9] sm:$0xff]
        %v398 = vld [vmem:[%s383 + $0x11] sm:$0xff]
        %v399 = vld [vmem:[%s383 + $0x19] sm:$0xf]
        %s400 = scalar_lea.vmem %s1, 192
        %v401 = vld [vmem:[%s400] sm:$0xff]
        %v402 = vld [vmem:[%s400 + $0x8] sm:$0xff]
        %v403 = vld [vmem:[%s400 + $0x10] sm:$0xff]
        %v404 = vld [vmem:[%s400 + $0x18] sm:$0xff]
        %v405 = vld [vmem:[%s400 + $0x20] sm:$0xff]
        %v406 = vld [vmem:[%s400 + $0x28] sm:$0xff]
        %v407 = vld [vmem:[%s400 + $0x30] sm:$0xff]
        %v408 = vld [vmem:[%s400 + $0x38] sm:$0xff]
        %vm409 = vcmask 261120
        %v411 = vsel %vm409, %v396, 0
        %v414 = vsel %vm409, %v397, 0
        %v417 = vsel %vm409, %v398, 0
        %v420 = vsel %vm409, %v399, 0
        %422 = vmatprep.subr.mxu0 0.0
        %423 = vmatpush1.msra.mxu0 0.0
        %424 = vmatprep.subr.mxu0 0.0
        %425 = vmatpush1.msra.mxu0 0.0
        %426 = vmatprep.subr.mxu0 0.0
        %427 = vmatpush1.msra.mxu0 0.0
        %428 = vmatprep.subr.mxu0 0.0
        %429 = vmatpush1.msra.mxu0 0.0
        %430 = vmatprep.subr.mxu0 0.0
        %431 = vmatpush1.msra.mxu0 0.0
        %432 = vmatprep.subr.mxu0 0.0
        %433 = vmatpush1.msra.mxu0 0.0
        %434 = vmatprep.subr.mxu0 0.0
        %435 = vmatpush1.msra.mxu0 0.0
        %436 = vmatprep.subr.mxu0 0.0
        %437 = vmatpush1.msra.mxu0 0.0
        %438 = vmatprep.subr.mxu0 0.0
        %439 = vmatpush1.msra.mxu0 0.0
        %440 = vmatprep.subr.mxu0 0.0
        %441 = vmatpush1.msra.mxu0 0.0
        %442 = vmatprep.subr.mxu0 0.0
        %443 = vmatpush1.msra.mxu0 0.0
        %444 = vmatprep.subr.mxu0 0.0
        %445 = vmatpush1.msra.mxu0 0.0
        %446 = vmatprep.subr.mxu0 %v408
        %447 = vmatpush1.msra.mxu0 %v407
        %448 = vmatprep.subr.mxu0 %v406
        %449 = vmatpush1.msra.mxu0 %v405
        %450 = vmatprep.subr.mxu0 %v404
        %451 = vmatpush1.msra.mxu0 %v403
        %452 = vmatprep.subr.mxu0 %v402
        %453 = vmatpush1.msra.mxu0 %v401
        %454 = vmatprep.subr.mxu0 0.0
        %455 = vmatpush2.msra.mxu0 0.0
        %456 = vmatprep.subr.mxu0 0.0
        %457 = vmatpush2.msra.mxu0 0.0
        %458 = vmatprep.subr.mxu0 0.0
        %459 = vmatpush2.msra.mxu0 0.0
        %460 = vmatprep.subr.mxu0 0.0
        %461 = vmatpush2.msra.mxu0 0.0
        %462 = vmatprep.subr.mxu0 0.0
        %463 = vmatpush2.msra.mxu0 0.0
        %464 = vmatprep.subr.mxu0 0.0
        %465 = vmatpush2.msra.mxu0 0.0
        %466 = vmatprep.subr.mxu0 0.0
        %467 = vmatpush2.msra.mxu0 0.0
        %468 = vmatprep.subr.mxu0 0.0
        %469 = vmatpush2.msra.mxu0 0.0
        %470 = vmatprep.subr.mxu0 0.0
        %471 = vmatpush2.msra.mxu0 0.0
        %472 = vmatprep.subr.mxu0 0.0
        %473 = vmatpush2.msra.mxu0 0.0
        %474 = vmatprep.subr.mxu0 0.0
        %475 = vmatpush2.msra.mxu0 0.0
        %476 = vmatprep.subr.mxu0 0.0
        %477 = vmatpush2.msra.mxu0 0.0
        %478 = vmatprep.subr.mxu0 0.0
        %479 = vmatpush2.msra.mxu0 0.0
        %480 = vmatprep.subr.mxu0 0.0
        %481 = vmatpush2.msra.mxu0 0.0
        %482 = vmatprep.subr.mxu0 0.0
        %483 = vmatpush2.msra.mxu0 0.0
        %484 = vmatprep.subr.mxu0 0.0
        %485 = vmatpush2.msra.mxu0 0.0
        %486 = vmatprep.mubr.f32.mxu0 0.0
        %487 = vmatmul.mubr.f32.gmra.mxu0 %v411
        %v488 = vpop.f32.mrf.mxu0
        %v489 = vadd.f32 0.0, %v488
        %v490 = vpop.f32.mrf.mxu0
        %v491 = vadd.f32 0.0, %v490
        %492 = vmatprep.mubr.f32.mxu0 0.0
        %493 = vmatmul.mubr.f32.gmra.mxu0 %v414
        %v494 = vpop.f32.mrf.mxu0
        %v495 = vadd.f32 0.0, %v494
        %v496 = vpop.f32.mrf.mxu0
        %v497 = vadd.f32 0.0, %v496
        %498 = vmatprep.mubr.f32.mxu0 0.0
        %499 = vmatmul.mubr.f32.gmra.mxu0 %v417
        %v500 = vpop.f32.mrf.mxu0
        %v501 = vadd.f32 0.0, %v500
        %v502 = vpop.f32.mrf.mxu0
        %v503 = vadd.f32 0.0, %v502
        %504 = vmatprep.mubr.f32.mxu0 0.0
        %505 = vmatmul.mubr.f32.gmra.mxu0 %v420
        %v506 = vpop.f32.mrf.mxu0
        %v507 = vadd.f32 0.0, %v506
        %v508 = vpop.f32.mrf.mxu0
        %v509 = vadd.f32 0.0, %v508
        %510 = vdwg.mxu0
        %v512 = vsel %vm409, %v384, 0
        %v515 = vsel %vm409, %v385, 0
        %v518 = vsel %vm409, %v386, 0
        %v521 = vsel %vm409, %v387, 0
        %523 = vmatprep.subr.mxu0 0.0
        %524 = vmatpush1.msra.mxu0 0.0
        %525 = vmatprep.subr.mxu0 0.0
        %526 = vmatpush1.msra.mxu0 0.0
        %527 = vmatprep.subr.mxu0 0.0
        %528 = vmatpush1.msra.mxu0 0.0
        %529 = vmatprep.subr.mxu0 0.0
        %530 = vmatpush1.msra.mxu0 0.0
        %531 = vmatprep.subr.mxu0 0.0
        %532 = vmatpush1.msra.mxu0 0.0
        %533 = vmatprep.subr.mxu0 0.0
        %534 = vmatpush1.msra.mxu0 0.0
        %535 = vmatprep.subr.mxu0 0.0
        %536 = vmatpush1.msra.mxu0 0.0
        %537 = vmatprep.subr.mxu0 0.0
        %538 = vmatpush1.msra.mxu0 0.0
        %539 = vmatprep.subr.mxu0 0.0
        %540 = vmatpush1.msra.mxu0 0.0
        %541 = vmatprep.subr.mxu0 0.0
        %542 = vmatpush1.msra.mxu0 0.0
        %543 = vmatprep.subr.mxu0 0.0
        %544 = vmatpush1.msra.mxu0 0.0
        %545 = vmatprep.subr.mxu0 0.0
        %546 = vmatpush1.msra.mxu0 0.0
        %547 = vmatprep.subr.mxu0 %v395
        %548 = vmatpush1.msra.mxu0 %v394
        %549 = vmatprep.subr.mxu0 %v393
        %550 = vmatpush1.msra.mxu0 %v392
        %551 = vmatprep.subr.mxu0 %v391
        %552 = vmatpush1.msra.mxu0 %v390
        %553 = vmatprep.subr.mxu0 %v389
        %554 = vmatpush1.msra.mxu0 %v388
        %555 = vmatprep.subr.mxu0 0.0
        %556 = vmatpush2.msra.mxu0 0.0
        %557 = vmatprep.subr.mxu0 0.0
        %558 = vmatpush2.msra.mxu0 0.0
        %559 = vmatprep.subr.mxu0 0.0
        %560 = vmatpush2.msra.mxu0 0.0
        %561 = vmatprep.subr.mxu0 0.0
        %562 = vmatpush2.msra.mxu0 0.0
        %563 = vmatprep.subr.mxu0 0.0
        %564 = vmatpush2.msra.mxu0 0.0
        %565 = vmatprep.subr.mxu0 0.0
        %566 = vmatpush2.msra.mxu0 0.0
        %567 = vmatprep.subr.mxu0 0.0
        %568 = vmatpush2.msra.mxu0 0.0
        %569 = vmatprep.subr.mxu0 0.0
        %570 = vmatpush2.msra.mxu0 0.0
        %571 = vmatprep.subr.mxu0 0.0
        %572 = vmatpush2.msra.mxu0 0.0
        %573 = vmatprep.subr.mxu0 0.0
        %574 = vmatpush2.msra.mxu0 0.0
        %575 = vmatprep.subr.mxu0 0.0
        %576 = vmatpush2.msra.mxu0 0.0
        %577 = vmatprep.subr.mxu0 0.0
        %578 = vmatpush2.msra.mxu0 0.0
        %579 = vmatprep.subr.mxu0 0.0
        %580 = vmatpush2.msra.mxu0 0.0
        %581 = vmatprep.subr.mxu0 0.0
        %582 = vmatpush2.msra.mxu0 0.0
        %583 = vmatprep.subr.mxu0 0.0
        %584 = vmatpush2.msra.mxu0 0.0
        %585 = vmatprep.subr.mxu0 0.0
        %586 = vmatpush2.msra.mxu0 0.0
        %587 = vmatprep.mubr.f32.mxu0 0.0
        %588 = vmatmul.mubr.f32.gmra.mxu0 %v512
        %v589 = vpop.f32.mrf.mxu0
        %v590 = vadd.f32 %v489, %v589
        %v591 = vpop.f32.mrf.mxu0
        %v592 = vadd.f32 %v491, %v591
        %593 = vmatprep.mubr.f32.mxu0 0.0
        %594 = vmatmul.mubr.f32.gmra.mxu0 %v515
        %v595 = vpop.f32.mrf.mxu0
        %v596 = vadd.f32 %v495, %v595
        %v597 = vpop.f32.mrf.mxu0
        %v598 = vadd.f32 %v497, %v597
        %599 = vmatprep.mubr.f32.mxu0 0.0
        %600 = vmatmul.mubr.f32.gmra.mxu0 %v518
        %v601 = vpop.f32.mrf.mxu0
        %v602 = vadd.f32 %v501, %v601
        %v603 = vpop.f32.mrf.mxu0
        %v604 = vadd.f32 %v503, %v603
        %605 = vmatprep.mubr.f32.mxu0 0.0
        %606 = vmatmul.mubr.f32.gmra.mxu0 %v521
        %v607 = vpop.f32.mrf.mxu0
        %v608 = vadd.f32 %v507, %v607
        %v609 = vpop.f32.mrf.mxu0
        %v610 = vadd.f32 %v509, %v609
        %611 = vdwg.mxu0
        %v612 = vld [vmem:[%s383 + $0x2] sm:$0xff]
        %v613 = vld [vmem:[%s383 + $0xa] sm:$0xff]
        %v614 = vld [vmem:[%s383 + $0x12] sm:$0xff]
        %v615 = vld [vmem:[%s383 + $0x1a] sm:$0xf]
        %s616 = scalar_lea.vmem %s1, 384
        %v617 = vld [vmem:[%s616] sm:$0xff]
        %v618 = vld [vmem:[%s616 + $0x8] sm:$0xff]
        %v619 = vld [vmem:[%s616 + $0x10] sm:$0xff]
        %v620 = vld [vmem:[%s616 + $0x18] sm:$0xff]
        %v621 = vld [vmem:[%s616 + $0x20] sm:$0xff]
        %v622 = vld [vmem:[%s616 + $0x28] sm:$0xff]
        %v623 = vld [vmem:[%s616 + $0x30] sm:$0xff]
        %v624 = vld [vmem:[%s616 + $0x38] sm:$0xff]
        %v626 = vsel %vm409, %v612, 0
        %v629 = vsel %vm409, %v613, 0
        %v632 = vsel %vm409, %v614, 0
        %v635 = vsel %vm409, %v615, 0
        %637 = vmatprep.subr.mxu0 0.0
        %638 = vmatpush1.msra.mxu0 0.0
        %639 = vmatprep.subr.mxu0 0.0
        %640 = vmatpush1.msra.mxu0 0.0
        %641 = vmatprep.subr.mxu0 0.0
        %642 = vmatpush1.msra.mxu0 0.0
        %643 = vmatprep.subr.mxu0 0.0
        %644 = vmatpush1.msra.mxu0 0.0
        %645 = vmatprep.subr.mxu0 0.0
        %646 = vmatpush1.msra.mxu0 0.0
        %647 = vmatprep.subr.mxu0 0.0
        %648 = vmatpush1.msra.mxu0 0.0
        %649 = vmatprep.subr.mxu0 0.0
        %650 = vmatpush1.msra.mxu0 0.0
        %651 = vmatprep.subr.mxu0 0.0
        %652 = vmatpush1.msra.mxu0 0.0
        %653 = vmatprep.subr.mxu0 0.0
        %654 = vmatpush1.msra.mxu0 0.0
        %655 = vmatprep.subr.mxu0 0.0
        %656 = vmatpush1.msra.mxu0 0.0
        %657 = vmatprep.subr.mxu0 0.0
        %658 = vmatpush1.msra.mxu0 0.0
        %659 = vmatprep.subr.mxu0 0.0
        %660 = vmatpush1.msra.mxu0 0.0
        %661 = vmatprep.subr.mxu0 %v624
        %662 = vmatpush1.msra.mxu0 %v623
        %663 = vmatprep.subr.mxu0 %v622
        %664 = vmatpush1.msra.mxu0 %v621
        %665 = vmatprep.subr.mxu0 %v620
        %666 = vmatpush1.msra.mxu0 %v619
        %667 = vmatprep.subr.mxu0 %v618
        %668 = vmatpush1.msra.mxu0 %v617
        %669 = vmatprep.subr.mxu0 0.0
        %670 = vmatpush2.msra.mxu0 0.0
        %671 = vmatprep.subr.mxu0 0.0
        %672 = vmatpush2.msra.mxu0 0.0
        %673 = vmatprep.subr.mxu0 0.0
        %674 = vmatpush2.msra.mxu0 0.0
        %675 = vmatprep.subr.mxu0 0.0
        %676 = vmatpush2.msra.mxu0 0.0
        %677 = vmatprep.subr.mxu0 0.0
        %678 = vmatpush2.msra.mxu0 0.0
        %679 = vmatprep.subr.mxu0 0.0
        %680 = vmatpush2.msra.mxu0 0.0
        %681 = vmatprep.subr.mxu0 0.0
        %682 = vmatpush2.msra.mxu0 0.0
        %683 = vmatprep.subr.mxu0 0.0
        %684 = vmatpush2.msra.mxu0 0.0
        %685 = vmatprep.subr.mxu0 0.0
        %686 = vmatpush2.msra.mxu0 0.0
        %687 = vmatprep.subr.mxu0 0.0
        %688 = vmatpush2.msra.mxu0 0.0
        %689 = vmatprep.subr.mxu0 0.0
        %690 = vmatpush2.msra.mxu0 0.0
        %691 = vmatprep.subr.mxu0 0.0
        %692 = vmatpush2.msra.mxu0 0.0
        %693 = vmatprep.subr.mxu0 0.0
        %694 = vmatpush2.msra.mxu0 0.0
        %695 = vmatprep.subr.mxu0 0.0
        %696 = vmatpush2.msra.mxu0 0.0
        %697 = vmatprep.subr.mxu0 0.0
        %698 = vmatpush2.msra.mxu0 0.0
        %699 = vmatprep.subr.mxu0 0.0
        %700 = vmatpush2.msra.mxu0 0.0
        %701 = vmatprep.mubr.f32.mxu0 0.0
        %702 = vmatmul.mubr.f32.gmra.mxu0 %v626
        %v703 = vpop.f32.mrf.mxu0
        %v704 = vadd.f32 0.0, %v703
        %v705 = vpop.f32.mrf.mxu0
        %v706 = vadd.f32 0.0, %v705
        %707 = vmatprep.mubr.f32.mxu0 0.0
        %708 = vmatmul.mubr.f32.gmra.mxu0 %v629
        %v709 = vpop.f32.mrf.mxu0
        %v710 = vadd.f32 0.0, %v709
        %v711 = vpop.f32.mrf.mxu0
        %v712 = vadd.f32 0.0, %v711
        %713 = vmatprep.mubr.f32.mxu0 0.0
        %714 = vmatmul.mubr.f32.gmra.mxu0 %v632
        %v715 = vpop.f32.mrf.mxu0
        %v716 = vadd.f32 0.0, %v715
        %v717 = vpop.f32.mrf.mxu0
        %v718 = vadd.f32 0.0, %v717
        %719 = vmatprep.mubr.f32.mxu0 0.0
        %720 = vmatmul.mubr.f32.gmra.mxu0 %v635
        %v721 = vpop.f32.mrf.mxu0
        %v722 = vadd.f32 0.0, %v721
        %v723 = vpop.f32.mrf.mxu0
        %v724 = vadd.f32 0.0, %v723
        %725 = vdwg.mxu0
        %v726 = vadd.f32 %v590, %v704
        %v727 = vadd.f32 %v592, %v706
        %v728 = vadd.f32 %v596, %v710
        %v729 = vadd.f32 %v598, %v712
        %v730 = vadd.f32 %v602, %v716
        %v731 = vadd.f32 %v604, %v718
        %v732 = vadd.f32 %v608, %v722
        %v733 = vadd.f32 %v610, %v724
        %v734 = vld [vmem:[%s383 + $0x3] sm:$0xff]
        %v735 = vld [vmem:[%s383 + $0xb] sm:$0xff]
        %v736 = vld [vmem:[%s383 + $0x13] sm:$0xff]
        %v737 = vld [vmem:[%s383 + $0x1b] sm:$0xf]
        %s738 = scalar_lea.vmem %s1, 576
        %v739 = vld [vmem:[%s738] sm:$0xff]
        %v740 = vld [vmem:[%s738 + $0x8] sm:$0xff]
        %v741 = vld [vmem:[%s738 + $0x10] sm:$0xff]
        %v742 = vld [vmem:[%s738 + $0x18] sm:$0xff]
        %v743 = vld [vmem:[%s738 + $0x20] sm:$0xff]
        %v744 = vld [vmem:[%s738 + $0x28] sm:$0xff]
        %v745 = vld [vmem:[%s738 + $0x30] sm:$0xff]
        %v746 = vld [vmem:[%s738 + $0x38] sm:$0xff]
        %v748 = vsel %vm409, %v734, 0
        %v751 = vsel %vm409, %v735, 0
        %v754 = vsel %vm409, %v736, 0
        %v757 = vsel %vm409, %v737, 0
        %759 = vmatprep.subr.mxu0 0.0
        %760 = vmatpush1.msra.mxu0 0.0
        %761 = vmatprep.subr.mxu0 0.0
        %762 = vmatpush1.msra.mxu0 0.0
        %763 = vmatprep.subr.mxu0 0.0
        %764 = vmatpush1.msra.mxu0 0.0
        %765 = vmatprep.subr.mxu0 0.0
        %766 = vmatpush1.msra.mxu0 0.0
        %767 = vmatprep.subr.mxu0 0.0
        %768 = vmatpush1.msra.mxu0 0.0
        %769 = vmatprep.subr.mxu0 0.0
        %770 = vmatpush1.msra.mxu0 0.0
        %771 = vmatprep.subr.mxu0 0.0
        %772 = vmatpush1.msra.mxu0 0.0
        %773 = vmatprep.subr.mxu0 0.0
        %774 = vmatpush1.msra.mxu0 0.0
        %775 = vmatprep.subr.mxu0 0.0
        %776 = vmatpush1.msra.mxu0 0.0
        %777 = vmatprep.subr.mxu0 0.0
        %778 = vmatpush1.msra.mxu0 0.0
        %779 = vmatprep.subr.mxu0 0.0
        %780 = vmatpush1.msra.mxu0 0.0
        %781 = vmatprep.subr.mxu0 0.0
        %782 = vmatpush1.msra.mxu0 0.0
        %783 = vmatprep.subr.mxu0 %v746
        %784 = vmatpush1.msra.mxu0 %v745
        %785 = vmatprep.subr.mxu0 %v744
        %786 = vmatpush1.msra.mxu0 %v743
        %787 = vmatprep.subr.mxu0 %v742
        %788 = vmatpush1.msra.mxu0 %v741
        %789 = vmatprep.subr.mxu0 %v740
        %790 = vmatpush1.msra.mxu0 %v739
        %791 = vmatprep.subr.mxu0 0.0
        %792 = vmatpush2.msra.mxu0 0.0
        %793 = vmatprep.subr.mxu0 0.0
        %794 = vmatpush2.msra.mxu0 0.0
        %795 = vmatprep.subr.mxu0 0.0
        %796 = vmatpush2.msra.mxu0 0.0
        %797 = vmatprep.subr.mxu0 0.0
        %798 = vmatpush2.msra.mxu0 0.0
        %799 = vmatprep.subr.mxu0 0.0
        %800 = vmatpush2.msra.mxu0 0.0
        %801 = vmatprep.subr.mxu0 0.0
        %802 = vmatpush2.msra.mxu0 0.0
        %803 = vmatprep.subr.mxu0 0.0
        %804 = vmatpush2.msra.mxu0 0.0
        %805 = vmatprep.subr.mxu0 0.0
        %806 = vmatpush2.msra.mxu0 0.0
        %807 = vmatprep.subr.mxu0 0.0
        %808 = vmatpush2.msra.mxu0 0.0
        %809 = vmatprep.subr.mxu0 0.0
        %810 = vmatpush2.msra.mxu0 0.0
        %811 = vmatprep.subr.mxu0 0.0
        %812 = vmatpush2.msra.mxu0 0.0
        %813 = vmatprep.subr.mxu0 0.0
        %814 = vmatpush2.msra.mxu0 0.0
        %815 = vmatprep.subr.mxu0 0.0
        %816 = vmatpush2.msra.mxu0 0.0
        %817 = vmatprep.subr.mxu0 0.0
        %818 = vmatpush2.msra.mxu0 0.0
        %819 = vmatprep.subr.mxu0 0.0
        %820 = vmatpush2.msra.mxu0 0.0
        %821 = vmatprep.subr.mxu0 0.0
        %822 = vmatpush2.msra.mxu0 0.0
        %823 = vmatprep.mubr.f32.mxu0 0.0
        %824 = vmatmul.mubr.f32.gmra.mxu0 %v748
        %v825 = vpop.f32.mrf.mxu0
        %v826 = vadd.f32 0.0, %v825
        %v827 = vpop.f32.mrf.mxu0
        %v828 = vadd.f32 0.0, %v827
        %829 = vmatprep.mubr.f32.mxu0 0.0
        %830 = vmatmul.mubr.f32.gmra.mxu0 %v751
        %v831 = vpop.f32.mrf.mxu0
        %v832 = vadd.f32 0.0, %v831
        %v833 = vpop.f32.mrf.mxu0
        %v834 = vadd.f32 0.0, %v833
        %835 = vmatprep.mubr.f32.mxu0 0.0
        %836 = vmatmul.mubr.f32.gmra.mxu0 %v754
        %v837 = vpop.f32.mrf.mxu0
        %v838 = vadd.f32 0.0, %v837
        %v839 = vpop.f32.mrf.mxu0
        %v840 = vadd.f32 0.0, %v839
        %841 = vmatprep.mubr.f32.mxu0 0.0
        %842 = vmatmul.mubr.f32.gmra.mxu0 %v757
        %v843 = vpop.f32.mrf.mxu0
        %v844 = vadd.f32 0.0, %v843
        %v845 = vpop.f32.mrf.mxu0
        %v846 = vadd.f32 0.0, %v845
        %847 = vdwg.mxu0
        %v848 = vadd.f32 %v726, %v826
        %v849 = vadd.f32 %v727, %v828
        %v850 = vadd.f32 %v728, %v832
        %v851 = vadd.f32 %v729, %v834
        %v852 = vadd.f32 %v730, %v838
        %v853 = vadd.f32 %v731, %v840
        %v854 = vadd.f32 %v732, %v844
        %v855 = vadd.f32 %v733, %v846
        %v856 = vld [vmem:[%s383 + $0x4] sm:$0xff]
        %v857 = vld [vmem:[%s383 + $0xc] sm:$0xff]
        %v858 = vld [vmem:[%s383 + $0x14] sm:$0xff]
        %v859 = vld [vmem:[%s383 + $0x1c] sm:$0xf]
        %s860 = scalar_lea.vmem %s1, 768
        %v861 = vld [vmem:[%s860] sm:$0xff]
        %v862 = vld [vmem:[%s860 + $0x8] sm:$0xff]
        %v863 = vld [vmem:[%s860 + $0x10] sm:$0xff]
        %v864 = vld [vmem:[%s860 + $0x18] sm:$0xff]
        %v865 = vld [vmem:[%s860 + $0x20] sm:$0xff]
        %v866 = vld [vmem:[%s860 + $0x28] sm:$0xff]
        %v867 = vld [vmem:[%s860 + $0x30] sm:$0xff]
        %v868 = vld [vmem:[%s860 + $0x38] sm:$0xff]
        %v870 = vsel %vm409, %v856, 0
        %v873 = vsel %vm409, %v857, 0
        %v876 = vsel %vm409, %v858, 0
        %v879 = vsel %vm409, %v859, 0
        %881 = vmatprep.subr.mxu0 0.0
        %882 = vmatpush1.msra.mxu0 0.0
        %883 = vmatprep.subr.mxu0 0.0
        %884 = vmatpush1.msra.mxu0 0.0
        %885 = vmatprep.subr.mxu0 0.0
        %886 = vmatpush1.msra.mxu0 0.0
        %887 = vmatprep.subr.mxu0 0.0
        %888 = vmatpush1.msra.mxu0 0.0
        %889 = vmatprep.subr.mxu0 0.0
        %890 = vmatpush1.msra.mxu0 0.0
        %891 = vmatprep.subr.mxu0 0.0
        %892 = vmatpush1.msra.mxu0 0.0
        %893 = vmatprep.subr.mxu0 0.0
        %894 = vmatpush1.msra.mxu0 0.0
        %895 = vmatprep.subr.mxu0 0.0
        %896 = vmatpush1.msra.mxu0 0.0
        %897 = vmatprep.subr.mxu0 0.0
        %898 = vmatpush1.msra.mxu0 0.0
        %899 = vmatprep.subr.mxu0 0.0
        %900 = vmatpush1.msra.mxu0 0.0
        %901 = vmatprep.subr.mxu0 0.0
        %902 = vmatpush1.msra.mxu0 0.0
        %903 = vmatprep.subr.mxu0 0.0
        %904 = vmatpush1.msra.mxu0 0.0
        %905 = vmatprep.subr.mxu0 %v868
        %906 = vmatpush1.msra.mxu0 %v867
        %907 = vmatprep.subr.mxu0 %v866
        %908 = vmatpush1.msra.mxu0 %v865
        %909 = vmatprep.subr.mxu0 %v864
        %910 = vmatpush1.msra.mxu0 %v863
        %911 = vmatprep.subr.mxu0 %v862
        %912 = vmatpush1.msra.mxu0 %v861
        %913 = vmatprep.subr.mxu0 0.0
        %914 = vmatpush2.msra.mxu0 0.0
        %915 = vmatprep.subr.mxu0 0.0
        %916 = vmatpush2.msra.mxu0 0.0
        %917 = vmatprep.subr.mxu0 0.0
        %918 = vmatpush2.msra.mxu0 0.0
        %919 = vmatprep.subr.mxu0 0.0
        %920 = vmatpush2.msra.mxu0 0.0
        %921 = vmatprep.subr.mxu0 0.0
        %922 = vmatpush2.msra.mxu0 0.0
        %923 = vmatprep.subr.mxu0 0.0
        %924 = vmatpush2.msra.mxu0 0.0
        %925 = vmatprep.subr.mxu0 0.0
        %926 = vmatpush2.msra.mxu0 0.0
        %927 = vmatprep.subr.mxu0 0.0
        %928 = vmatpush2.msra.mxu0 0.0
        %929 = vmatprep.subr.mxu0 0.0
        %930 = vmatpush2.msra.mxu0 0.0
        %931 = vmatprep.subr.mxu0 0.0
        %932 = vmatpush2.msra.mxu0 0.0
        %933 = vmatprep.subr.mxu0 0.0
        %934 = vmatpush2.msra.mxu0 0.0
        %935 = vmatprep.subr.mxu0 0.0
        %936 = vmatpush2.msra.mxu0 0.0
        %937 = vmatprep.subr.mxu0 0.0
        %938 = vmatpush2.msra.mxu0 0.0
        %939 = vmatprep.subr.mxu0 0.0
        %940 = vmatpush2.msra.mxu0 0.0
        %941 = vmatprep.subr.mxu0 0.0
        %942 = vmatpush2.msra.mxu0 0.0
        %943 = vmatprep.subr.mxu0 0.0
        %944 = vmatpush2.msra.mxu0 0.0
        %945 = vmatprep.mubr.f32.mxu0 0.0
        %946 = vmatmul.mubr.f32.gmra.mxu0 %v870
        %v947 = vpop.f32.mrf.mxu0
        %v948 = vadd.f32 0.0, %v947
        %v949 = vpop.f32.mrf.mxu0
        %v950 = vadd.f32 0.0, %v949
        %951 = vmatprep.mubr.f32.mxu0 0.0
        %952 = vmatmul.mubr.f32.gmra.mxu0 %v873
        %v953 = vpop.f32.mrf.mxu0
        %v954 = vadd.f32 0.0, %v953
        %v955 = vpop.f32.mrf.mxu0
        %v956 = vadd.f32 0.0, %v955
        %957 = vmatprep.mubr.f32.mxu0 0.0
        %958 = vmatmul.mubr.f32.gmra.mxu0 %v876
        %v959 = vpop.f32.mrf.mxu0
        %v960 = vadd.f32 0.0, %v959
        %v961 = vpop.f32.mrf.mxu0
        %v962 = vadd.f32 0.0, %v961
        %963 = vmatprep.mubr.f32.mxu0 0.0
        %964 = vmatmul.mubr.f32.gmra.mxu0 %v879
        %v965 = vpop.f32.mrf.mxu0
        %v966 = vadd.f32 0.0, %v965
        %v967 = vpop.f32.mrf.mxu0
        %v968 = vadd.f32 0.0, %v967
        %969 = vdwg.mxu0
        %v970 = vadd.f32 %v848, %v948
        %v971 = vadd.f32 %v849, %v950
        %v972 = vadd.f32 %v850, %v954
        %v973 = vadd.f32 %v851, %v956
        %v974 = vadd.f32 %v852, %v960
        %v975 = vadd.f32 %v853, %v962
        %v976 = vadd.f32 %v854, %v966
        %v977 = vadd.f32 %v855, %v968
        %v978 = vld [vmem:[%s383 + $0x20] sm:$0xff]
        %v979 = vld [vmem:[%s383 + $0x28] sm:$0xff]
        %v980 = vld [vmem:[%s383 + $0x30] sm:$0xff]
        %v981 = vld [vmem:[%s383 + $0x38] sm:$0xf]
        %s982 = scalar_lea.vmem %s1, 64
        %v983 = vld [vmem:[%s982] sm:$0xff]
        %v984 = vld [vmem:[%s982 + $0x8] sm:$0xff]
        %v985 = vld [vmem:[%s982 + $0x10] sm:$0xff]
        %v986 = vld [vmem:[%s982 + $0x18] sm:$0xff]
        %v987 = vld [vmem:[%s982 + $0x20] sm:$0xff]
        %v988 = vld [vmem:[%s982 + $0x28] sm:$0xff]
        %v989 = vld [vmem:[%s982 + $0x30] sm:$0xff]
        %v990 = vld [vmem:[%s982 + $0x38] sm:$0xff]
        %v992 = vsel %vm409, %v978, 0
        %v995 = vsel %vm409, %v979, 0
        %v998 = vsel %vm409, %v980, 0
        %v1001 = vsel %vm409, %v981, 0
        %1003 = vmatprep.subr.mxu0 0.0
        %1004 = vmatpush1.msra.mxu0 0.0
        %1005 = vmatprep.subr.mxu0 0.0
        %1006 = vmatpush1.msra.mxu0 0.0
        %1007 = vmatprep.subr.mxu0 0.0
        %1008 = vmatpush1.msra.mxu0 0.0
        %1009 = vmatprep.subr.mxu0 0.0
        %1010 = vmatpush1.msra.mxu0 0.0
        %1011 = vmatprep.subr.mxu0 0.0
        %1012 = vmatpush1.msra.mxu0 0.0
        %1013 = vmatprep.subr.mxu0 0.0
        %1014 = vmatpush1.msra.mxu0 0.0
        %1015 = vmatprep.subr.mxu0 0.0
        %1016 = vmatpush1.msra.mxu0 0.0
        %1017 = vmatprep.subr.mxu0 0.0
        %1018 = vmatpush1.msra.mxu0 0.0
        %1019 = vmatprep.subr.mxu0 0.0
        %1020 = vmatpush1.msra.mxu0 0.0
        %1021 = vmatprep.subr.mxu0 0.0
        %1022 = vmatpush1.msra.mxu0 0.0
        %1023 = vmatprep.subr.mxu0 0.0
        %1024 = vmatpush1.msra.mxu0 0.0
        %1025 = vmatprep.subr.mxu0 0.0
        %1026 = vmatpush1.msra.mxu0 0.0
        %1027 = vmatprep.subr.mxu0 %v990
        %1028 = vmatpush1.msra.mxu0 %v989
        %1029 = vmatprep.subr.mxu0 %v988
        %1030 = vmatpush1.msra.mxu0 %v987
        %1031 = vmatprep.subr.mxu0 %v986
        %1032 = vmatpush1.msra.mxu0 %v985
        %1033 = vmatprep.subr.mxu0 %v984
        %1034 = vmatpush1.msra.mxu0 %v983
        %1035 = vmatprep.subr.mxu0 0.0
        %1036 = vmatpush2.msra.mxu0 0.0
        %1037 = vmatprep.subr.mxu0 0.0
        %1038 = vmatpush2.msra.mxu0 0.0
        %1039 = vmatprep.subr.mxu0 0.0
        %1040 = vmatpush2.msra.mxu0 0.0
        %1041 = vmatprep.subr.mxu0 0.0
        %1042 = vmatpush2.msra.mxu0 0.0
        %1043 = vmatprep.subr.mxu0 0.0
        %1044 = vmatpush2.msra.mxu0 0.0
        %1045 = vmatprep.subr.mxu0 0.0
        %1046 = vmatpush2.msra.mxu0 0.0
        %1047 = vmatprep.subr.mxu0 0.0
        %1048 = vmatpush2.msra.mxu0 0.0
        %1049 = vmatprep.subr.mxu0 0.0
        %1050 = vmatpush2.msra.mxu0 0.0
        %1051 = vmatprep.subr.mxu0 0.0
        %1052 = vmatpush2.msra.mxu0 0.0
        %1053 = vmatprep.subr.mxu0 0.0
        %1054 = vmatpush2.msra.mxu0 0.0
        %1055 = vmatprep.subr.mxu0 0.0
        %1056 = vmatpush2.msra.mxu0 0.0
        %1057 = vmatprep.subr.mxu0 0.0
        %1058 = vmatpush2.msra.mxu0 0.0
        %1059 = vmatprep.subr.mxu0 0.0
        %1060 = vmatpush2.msra.mxu0 0.0
        %1061 = vmatprep.subr.mxu0 0.0
        %1062 = vmatpush2.msra.mxu0 0.0
        %1063 = vmatprep.subr.mxu0 0.0
        %1064 = vmatpush2.msra.mxu0 0.0
        %1065 = vmatprep.subr.mxu0 0.0
        %1066 = vmatpush2.msra.mxu0 0.0
        %1067 = vmatprep.mubr.f32.mxu0 0.0
        %1068 = vmatmul.mubr.f32.gmra.mxu0 %v992
        %v1069 = vpop.f32.mrf.mxu0
        %v1070 = vadd.f32 0.0, %v1069
        %v1071 = vpop.f32.mrf.mxu0
        %v1072 = vadd.f32 0.0, %v1071
        %1073 = vmatprep.mubr.f32.mxu0 0.0
        %1074 = vmatmul.mubr.f32.gmra.mxu0 %v995
        %v1075 = vpop.f32.mrf.mxu0
        %v1076 = vadd.f32 0.0, %v1075
        %v1077 = vpop.f32.mrf.mxu0
        %v1078 = vadd.f32 0.0, %v1077
        %1079 = vmatprep.mubr.f32.mxu0 0.0
        %1080 = vmatmul.mubr.f32.gmra.mxu0 %v998
        %v1081 = vpop.f32.mrf.mxu0
        %v1082 = vadd.f32 0.0, %v1081
        %v1083 = vpop.f32.mrf.mxu0
        %v1084 = vadd.f32 0.0, %v1083
        %1085 = vmatprep.mubr.f32.mxu0 0.0
        %1086 = vmatmul.mubr.f32.gmra.mxu0 %v1001
        %v1087 = vpop.f32.mrf.mxu0
        %v1088 = vadd.f32 0.0, %v1087
        %v1089 = vpop.f32.mrf.mxu0
        %v1090 = vadd.f32 0.0, %v1089
        %1091 = vdwg.mxu0
        %v1092 = vadd.f32 %v970, %v1070
        %v1093 = vadd.f32 %v971, %v1072
        %v1094 = vadd.f32 %v972, %v1076
        %v1095 = vadd.f32 %v973, %v1078
        %v1096 = vadd.f32 %v974, %v1082
        %v1097 = vadd.f32 %v975, %v1084
        %v1098 = vadd.f32 %v976, %v1088
        %v1099 = vadd.f32 %v977, %v1090
        %v1100 = vld [vmem:[%s383 + $0x21] sm:$0xff]
        %v1101 = vld [vmem:[%s383 + $0x29] sm:$0xff]
        %v1102 = vld [vmem:[%s383 + $0x31] sm:$0xff]
        %v1103 = vld [vmem:[%s383 + $0x39] sm:$0xf]
        %s1104 = scalar_lea.vmem %s1, 256
        %v1105 = vld [vmem:[%s1104] sm:$0xff]
        %v1106 = vld [vmem:[%s1104 + $0x8] sm:$0xff]
        %v1107 = vld [vmem:[%s1104 + $0x10] sm:$0xff]
        %v1108 = vld [vmem:[%s1104 + $0x18] sm:$0xff]
        %v1109 = vld [vmem:[%s1104 + $0x20] sm:$0xff]
        %v1110 = vld [vmem:[%s1104 + $0x28] sm:$0xff]
        %v1111 = vld [vmem:[%s1104 + $0x30] sm:$0xff]
        %v1112 = vld [vmem:[%s1104 + $0x38] sm:$0xff]
        %v1114 = vsel %vm409, %v1100, 0
        %v1117 = vsel %vm409, %v1101, 0
        %v1120 = vsel %vm409, %v1102, 0
        %v1123 = vsel %vm409, %v1103, 0
        %1125 = vmatprep.subr.mxu0 0.0
        %1126 = vmatpush1.msra.mxu0 0.0
        %1127 = vmatprep.subr.mxu0 0.0
        %1128 = vmatpush1.msra.mxu0 0.0
        %1129 = vmatprep.subr.mxu0 0.0
        %1130 = vmatpush1.msra.mxu0 0.0
        %1131 = vmatprep.subr.mxu0 0.0
        %1132 = vmatpush1.msra.mxu0 0.0
        %1133 = vmatprep.subr.mxu0 0.0
        %1134 = vmatpush1.msra.mxu0 0.0
        %1135 = vmatprep.subr.mxu0 0.0
        %1136 = vmatpush1.msra.mxu0 0.0
        %1137 = vmatprep.subr.mxu0 0.0
        %1138 = vmatpush1.msra.mxu0 0.0
        %1139 = vmatprep.subr.mxu0 0.0
        %1140 = vmatpush1.msra.mxu0 0.0
        %1141 = vmatprep.subr.mxu0 0.0
        %1142 = vmatpush1.msra.mxu0 0.0
        %1143 = vmatprep.subr.mxu0 0.0
        %1144 = vmatpush1.msra.mxu0 0.0
        %1145 = vmatprep.subr.mxu0 0.0
        %1146 = vmatpush1.msra.mxu0 0.0
        %1147 = vmatprep.subr.mxu0 0.0
        %1148 = vmatpush1.msra.mxu0 0.0
        %1149 = vmatprep.subr.mxu0 %v1112
        %1150 = vmatpush1.msra.mxu0 %v1111
        %1151 = vmatprep.subr.mxu0 %v1110
        %1152 = vmatpush1.msra.mxu0 %v1109
        %1153 = vmatprep.subr.mxu0 %v1108
        %1154 = vmatpush1.msra.mxu0 %v1107
        %1155 = vmatprep.subr.mxu0 %v1106
        %1156 = vmatpush1.msra.mxu0 %v1105
        %1157 = vmatprep.subr.mxu0 0.0
        %1158 = vmatpush2.msra.mxu0 0.0
        %1159 = vmatprep.subr.mxu0 0.0
        %1160 = vmatpush2.msra.mxu0 0.0
        %1161 = vmatprep.subr.mxu0 0.0
        %1162 = vmatpush2.msra.mxu0 0.0
        %1163 = vmatprep.subr.mxu0 0.0
        %1164 = vmatpush2.msra.mxu0 0.0
        %1165 = vmatprep.subr.mxu0 0.0
        %1166 = vmatpush2.msra.mxu0 0.0
        %1167 = vmatprep.subr.mxu0 0.0
        %1168 = vmatpush2.msra.mxu0 0.0
        %1169 = vmatprep.subr.mxu0 0.0
        %1170 = vmatpush2.msra.mxu0 0.0
        %1171 = vmatprep.subr.mxu0 0.0
        %1172 = vmatpush2.msra.mxu0 0.0
        %1173 = vmatprep.subr.mxu0 0.0
        %1174 = vmatpush2.msra.mxu0 0.0
        %1175 = vmatprep.subr.mxu0 0.0
        %1176 = vmatpush2.msra.mxu0 0.0
        %1177 = vmatprep.subr.mxu0 0.0
        %1178 = vmatpush2.msra.mxu0 0.0
        %1179 = vmatprep.subr.mxu0 0.0
        %1180 = vmatpush2.msra.mxu0 0.0
        %1181 = vmatprep.subr.mxu0 0.0
        %1182 = vmatpush2.msra.mxu0 0.0
        %1183 = vmatprep.subr.mxu0 0.0
        %1184 = vmatpush2.msra.mxu0 0.0
        %1185 = vmatprep.subr.mxu0 0.0
        %1186 = vmatpush2.msra.mxu0 0.0
        %1187 = vmatprep.subr.mxu0 0.0
        %1188 = vmatpush2.msra.mxu0 0.0
        %1189 = vmatprep.mubr.f32.mxu0 0.0
        %1190 = vmatmul.mubr.f32.gmra.mxu0 %v1114
        %v1191 = vpop.f32.mrf.mxu0
        %v1192 = vadd.f32 0.0, %v1191
        %v1193 = vpop.f32.mrf.mxu0
        %v1194 = vadd.f32 0.0, %v1193
        %1195 = vmatprep.mubr.f32.mxu0 0.0
        %1196 = vmatmul.mubr.f32.gmra.mxu0 %v1117
        %v1197 = vpop.f32.mrf.mxu0
        %v1198 = vadd.f32 0.0, %v1197
        %v1199 = vpop.f32.mrf.mxu0
        %v1200 = vadd.f32 0.0, %v1199
        %1201 = vmatprep.mubr.f32.mxu0 0.0
        %1202 = vmatmul.mubr.f32.gmra.mxu0 %v1120
        %v1203 = vpop.f32.mrf.mxu0
        %v1204 = vadd.f32 0.0, %v1203
        %v1205 = vpop.f32.mrf.mxu0
        %v1206 = vadd.f32 0.0, %v1205
        %1207 = vmatprep.mubr.f32.mxu0 0.0
        %1208 = vmatmul.mubr.f32.gmra.mxu0 %v1123
        %v1209 = vpop.f32.mrf.mxu0
        %v1210 = vadd.f32 0.0, %v1209
        %v1211 = vpop.f32.mrf.mxu0
        %v1212 = vadd.f32 0.0, %v1211
        %1213 = vdwg.mxu0
        %v1214 = vadd.f32 %v1092, %v1192
        %v1215 = vadd.f32 %v1093, %v1194
        %v1216 = vadd.f32 %v1094, %v1198
        %v1217 = vadd.f32 %v1095, %v1200
        %v1218 = vadd.f32 %v1096, %v1204
        %v1219 = vadd.f32 %v1097, %v1206
        %v1220 = vadd.f32 %v1098, %v1210
        %v1221 = vadd.f32 %v1099, %v1212
        %v1222 = vld [vmem:[%s383 + $0x22] sm:$0xff]
        %v1223 = vld [vmem:[%s383 + $0x2a] sm:$0xff]
        %v1224 = vld [vmem:[%s383 + $0x32] sm:$0xff]
        %v1225 = vld [vmem:[%s383 + $0x3a] sm:$0xf]
        %s1226 = scalar_lea.vmem %s1, 448
        %v1227 = vld [vmem:[%s1226] sm:$0xff]
        %v1228 = vld [vmem:[%s1226 + $0x8] sm:$0xff]
        %v1229 = vld [vmem:[%s1226 + $0x10] sm:$0xff]
        %v1230 = vld [vmem:[%s1226 + $0x18] sm:$0xff]
        %v1231 = vld [vmem:[%s1226 + $0x20] sm:$0xff]
        %v1232 = vld [vmem:[%s1226 + $0x28] sm:$0xff]
        %v1233 = vld [vmem:[%s1226 + $0x30] sm:$0xff]
        %v1234 = vld [vmem:[%s1226 + $0x38] sm:$0xff]
        %v1236 = vsel %vm409, %v1222, 0
        %v1239 = vsel %vm409, %v1223, 0
        %v1242 = vsel %vm409, %v1224, 0
        %v1245 = vsel %vm409, %v1225, 0
        %1247 = vmatprep.subr.mxu0 0.0
        %1248 = vmatpush1.msra.mxu0 0.0
        %1249 = vmatprep.subr.mxu0 0.0
        %1250 = vmatpush1.msra.mxu0 0.0
        %1251 = vmatprep.subr.mxu0 0.0
        %1252 = vmatpush1.msra.mxu0 0.0
        %1253 = vmatprep.subr.mxu0 0.0
        %1254 = vmatpush1.msra.mxu0 0.0
        %1255 = vmatprep.subr.mxu0 0.0
        %1256 = vmatpush1.msra.mxu0 0.0
        %1257 = vmatprep.subr.mxu0 0.0
        %1258 = vmatpush1.msra.mxu0 0.0
        %1259 = vmatprep.subr.mxu0 0.0
        %1260 = vmatpush1.msra.mxu0 0.0
        %1261 = vmatprep.subr.mxu0 0.0
        %1262 = vmatpush1.msra.mxu0 0.0
        %1263 = vmatprep.subr.mxu0 0.0
        %1264 = vmatpush1.msra.mxu0 0.0
        %1265 = vmatprep.subr.mxu0 0.0
        %1266 = vmatpush1.msra.mxu0 0.0
        %1267 = vmatprep.subr.mxu0 0.0
        %1268 = vmatpush1.msra.mxu0 0.0
        %1269 = vmatprep.subr.mxu0 0.0
        %1270 = vmatpush1.msra.mxu0 0.0
        %1271 = vmatprep.subr.mxu0 %v1234
        %1272 = vmatpush1.msra.mxu0 %v1233
        %1273 = vmatprep.subr.mxu0 %v1232
        %1274 = vmatpush1.msra.mxu0 %v1231
        %1275 = vmatprep.subr.mxu0 %v1230
        %1276 = vmatpush1.msra.mxu0 %v1229
        %1277 = vmatprep.subr.mxu0 %v1228
        %1278 = vmatpush1.msra.mxu0 %v1227
        %1279 = vmatprep.subr.mxu0 0.0
        %1280 = vmatpush2.msra.mxu0 0.0
        %1281 = vmatprep.subr.mxu0 0.0
        %1282 = vmatpush2.msra.mxu0 0.0
        %1283 = vmatprep.subr.mxu0 0.0
        %1284 = vmatpush2.msra.mxu0 0.0
        %1285 = vmatprep.subr.mxu0 0.0
        %1286 = vmatpush2.msra.mxu0 0.0
        %1287 = vmatprep.subr.mxu0 0.0
        %1288 = vmatpush2.msra.mxu0 0.0
        %1289 = vmatprep.subr.mxu0 0.0
        %1290 = vmatpush2.msra.mxu0 0.0
        %1291 = vmatprep.subr.mxu0 0.0
        %1292 = vmatpush2.msra.mxu0 0.0
        %1293 = vmatprep.subr.mxu0 0.0
        %1294 = vmatpush2.msra.mxu0 0.0
        %1295 = vmatprep.subr.mxu0 0.0
        %1296 = vmatpush2.msra.mxu0 0.0
        %1297 = vmatprep.subr.mxu0 0.0
        %1298 = vmatpush2.msra.mxu0 0.0
        %1299 = vmatprep.subr.mxu0 0.0
        %1300 = vmatpush2.msra.mxu0 0.0
        %1301 = vmatprep.subr.mxu0 0.0
        %1302 = vmatpush2.msra.mxu0 0.0
        %1303 = vmatprep.subr.mxu0 0.0
        %1304 = vmatpush2.msra.mxu0 0.0
        %1305 = vmatprep.subr.mxu0 0.0
        %1306 = vmatpush2.msra.mxu0 0.0
        %1307 = vmatprep.subr.mxu0 0.0
        %1308 = vmatpush2.msra.mxu0 0.0
        %1309 = vmatprep.subr.mxu0 0.0
        %1310 = vmatpush2.msra.mxu0 0.0
        %1311 = vmatprep.mubr.f32.mxu0 0.0
        %1312 = vmatmul.mubr.f32.gmra.mxu0 %v1236
        %v1313 = vpop.f32.mrf.mxu0
        %v1314 = vadd.f32 0.0, %v1313
        %v1315 = vpop.f32.mrf.mxu0
        %v1316 = vadd.f32 0.0, %v1315
        %1317 = vmatprep.mubr.f32.mxu0 0.0
        %1318 = vmatmul.mubr.f32.gmra.mxu0 %v1239
        %v1319 = vpop.f32.mrf.mxu0
        %v1320 = vadd.f32 0.0, %v1319
        %v1321 = vpop.f32.mrf.mxu0
        %v1322 = vadd.f32 0.0, %v1321
        %1323 = vmatprep.mubr.f32.mxu0 0.0
        %1324 = vmatmul.mubr.f32.gmra.mxu0 %v1242
        %v1325 = vpop.f32.mrf.mxu0
        %v1326 = vadd.f32 0.0, %v1325
        %v1327 = vpop.f32.mrf.mxu0
        %v1328 = vadd.f32 0.0, %v1327
        %1329 = vmatprep.mubr.f32.mxu0 0.0
        %1330 = vmatmul.mubr.f32.gmra.mxu0 %v1245
        %v1331 = vpop.f32.mrf.mxu0
        %v1332 = vadd.f32 0.0, %v1331
        %v1333 = vpop.f32.mrf.mxu0
        %v1334 = vadd.f32 0.0, %v1333
        %1335 = vdwg.mxu0
        %v1336 = vadd.f32 %v1214, %v1314
        %v1337 = vadd.f32 %v1215, %v1316
        %v1338 = vadd.f32 %v1216, %v1320
        %v1339 = vadd.f32 %v1217, %v1322
        %v1340 = vadd.f32 %v1218, %v1326
        %v1341 = vadd.f32 %v1219, %v1328
        %v1342 = vadd.f32 %v1220, %v1332
        %v1343 = vadd.f32 %v1221, %v1334
        %v1344 = vld [vmem:[%s383 + $0x23] sm:$0xff]
        %v1345 = vld [vmem:[%s383 + $0x2b] sm:$0xff]
        %v1346 = vld [vmem:[%s383 + $0x33] sm:$0xff]
        %v1347 = vld [vmem:[%s383 + $0x3b] sm:$0xf]
        %s1348 = scalar_lea.vmem %s1, 640
        %v1349 = vld [vmem:[%s1348] sm:$0xff]
        %v1350 = vld [vmem:[%s1348 + $0x8] sm:$0xff]
        %v1351 = vld [vmem:[%s1348 + $0x10] sm:$0xff]
        %v1352 = vld [vmem:[%s1348 + $0x18] sm:$0xff]
        %v1353 = vld [vmem:[%s1348 + $0x20] sm:$0xff]
        %v1354 = vld [vmem:[%s1348 + $0x28] sm:$0xff]
        %v1355 = vld [vmem:[%s1348 + $0x30] sm:$0xff]
        %v1356 = vld [vmem:[%s1348 + $0x38] sm:$0xff]
        %v1358 = vsel %vm409, %v1344, 0
        %v1361 = vsel %vm409, %v1345, 0
        %v1364 = vsel %vm409, %v1346, 0
        %v1367 = vsel %vm409, %v1347, 0
        %1369 = vmatprep.subr.mxu0 0.0
        %1370 = vmatpush1.msra.mxu0 0.0
        %1371 = vmatprep.subr.mxu0 0.0
        %1372 = vmatpush1.msra.mxu0 0.0
        %1373 = vmatprep.subr.mxu0 0.0
        %1374 = vmatpush1.msra.mxu0 0.0
        %1375 = vmatprep.subr.mxu0 0.0
        %1376 = vmatpush1.msra.mxu0 0.0
        %1377 = vmatprep.subr.mxu0 0.0
        %1378 = vmatpush1.msra.mxu0 0.0
        %1379 = vmatprep.subr.mxu0 0.0
        %1380 = vmatpush1.msra.mxu0 0.0
        %1381 = vmatprep.subr.mxu0 0.0
        %1382 = vmatpush1.msra.mxu0 0.0
        %1383 = vmatprep.subr.mxu0 0.0
        %1384 = vmatpush1.msra.mxu0 0.0
        %1385 = vmatprep.subr.mxu0 0.0
        %1386 = vmatpush1.msra.mxu0 0.0
        %1387 = vmatprep.subr.mxu0 0.0
        %1388 = vmatpush1.msra.mxu0 0.0
        %1389 = vmatprep.subr.mxu0 0.0
        %1390 = vmatpush1.msra.mxu0 0.0
        %1391 = vmatprep.subr.mxu0 0.0
        %1392 = vmatpush1.msra.mxu0 0.0
        %1393 = vmatprep.subr.mxu0 %v1356
        %1394 = vmatpush1.msra.mxu0 %v1355
        %1395 = vmatprep.subr.mxu0 %v1354
        %1396 = vmatpush1.msra.mxu0 %v1353
        %1397 = vmatprep.subr.mxu0 %v1352
        %1398 = vmatpush1.msra.mxu0 %v1351
        %1399 = vmatprep.subr.mxu0 %v1350
        %1400 = vmatpush1.msra.mxu0 %v1349
        %1401 = vmatprep.subr.mxu0 0.0
        %1402 = vmatpush2.msra.mxu0 0.0
        %1403 = vmatprep.subr.mxu0 0.0
        %1404 = vmatpush2.msra.mxu0 0.0
        %1405 = vmatprep.subr.mxu0 0.0
        %1406 = vmatpush2.msra.mxu0 0.0
        %1407 = vmatprep.subr.mxu0 0.0
        %1408 = vmatpush2.msra.mxu0 0.0
        %1409 = vmatprep.subr.mxu0 0.0
        %1410 = vmatpush2.msra.mxu0 0.0
        %1411 = vmatprep.subr.mxu0 0.0
        %1412 = vmatpush2.msra.mxu0 0.0
        %1413 = vmatprep.subr.mxu0 0.0
        %1414 = vmatpush2.msra.mxu0 0.0
        %1415 = vmatprep.subr.mxu0 0.0
        %1416 = vmatpush2.msra.mxu0 0.0
        %1417 = vmatprep.subr.mxu0 0.0
        %1418 = vmatpush2.msra.mxu0 0.0
        %1419 = vmatprep.subr.mxu0 0.0
        %1420 = vmatpush2.msra.mxu0 0.0
        %1421 = vmatprep.subr.mxu0 0.0
        %1422 = vmatpush2.msra.mxu0 0.0
        %1423 = vmatprep.subr.mxu0 0.0
        %1424 = vmatpush2.msra.mxu0 0.0
        %1425 = vmatprep.subr.mxu0 0.0
        %1426 = vmatpush2.msra.mxu0 0.0
        %1427 = vmatprep.subr.mxu0 0.0
        %1428 = vmatpush2.msra.mxu0 0.0
        %1429 = vmatprep.subr.mxu0 0.0
        %1430 = vmatpush2.msra.mxu0 0.0
        %1431 = vmatprep.subr.mxu0 0.0
        %1432 = vmatpush2.msra.mxu0 0.0
        %1433 = vmatprep.mubr.f32.mxu0 0.0
        %1434 = vmatmul.mubr.f32.gmra.mxu0 %v1358
        %v1435 = vpop.f32.mrf.mxu0
        %v1436 = vadd.f32 0.0, %v1435
        %v1437 = vpop.f32.mrf.mxu0
        %v1438 = vadd.f32 0.0, %v1437
        %1439 = vmatprep.mubr.f32.mxu0 0.0
        %1440 = vmatmul.mubr.f32.gmra.mxu0 %v1361
        %v1441 = vpop.f32.mrf.mxu0
        %v1442 = vadd.f32 0.0, %v1441
        %v1443 = vpop.f32.mrf.mxu0
        %v1444 = vadd.f32 0.0, %v1443
        %1445 = vmatprep.mubr.f32.mxu0 0.0
        %1446 = vmatmul.mubr.f32.gmra.mxu0 %v1364
        %v1447 = vpop.f32.mrf.mxu0
        %v1448 = vadd.f32 0.0, %v1447
        %v1449 = vpop.f32.mrf.mxu0
        %v1450 = vadd.f32 0.0, %v1449
        %1451 = vmatprep.mubr.f32.mxu0 0.0
        %1452 = vmatmul.mubr.f32.gmra.mxu0 %v1367
        %v1453 = vpop.f32.mrf.mxu0
        %v1454 = vadd.f32 0.0, %v1453
        %v1455 = vpop.f32.mrf.mxu0
        %v1456 = vadd.f32 0.0, %v1455
        %1457 = vdwg.mxu0
        %v1458 = vadd.f32 %v1336, %v1436
        %v1459 = vadd.f32 %v1337, %v1438
        %v1460 = vadd.f32 %v1338, %v1442
        %v1461 = vadd.f32 %v1339, %v1444
        %v1462 = vadd.f32 %v1340, %v1448
        %v1463 = vadd.f32 %v1341, %v1450
        %v1464 = vadd.f32 %v1342, %v1454
        %v1465 = vadd.f32 %v1343, %v1456
        %v1466 = vld [vmem:[%s383 + $0x24] sm:$0xff]
        %v1467 = vld [vmem:[%s383 + $0x2c] sm:$0xff]
        %v1468 = vld [vmem:[%s383 + $0x34] sm:$0xff]
        %v1469 = vld [vmem:[%s383 + $0x3c] sm:$0xf]
        %s1470 = scalar_lea.vmem %s1, 832
        %v1471 = vld [vmem:[%s1470] sm:$0xff]
        %v1472 = vld [vmem:[%s1470 + $0x8] sm:$0xff]
        %v1473 = vld [vmem:[%s1470 + $0x10] sm:$0xff]
        %v1474 = vld [vmem:[%s1470 + $0x18] sm:$0xff]
        %v1475 = vld [vmem:[%s1470 + $0x20] sm:$0xff]
        %v1476 = vld [vmem:[%s1470 + $0x28] sm:$0xff]
        %v1477 = vld [vmem:[%s1470 + $0x30] sm:$0xff]
        %v1478 = vld [vmem:[%s1470 + $0x38] sm:$0xff]
        %v1480 = vsel %vm409, %v1466, 0
        %v1483 = vsel %vm409, %v1467, 0
        %v1486 = vsel %vm409, %v1468, 0
        %v1489 = vsel %vm409, %v1469, 0
        %1491 = vmatprep.subr.mxu0 0.0
        %1492 = vmatpush1.msra.mxu0 0.0
        %1493 = vmatprep.subr.mxu0 0.0
        %1494 = vmatpush1.msra.mxu0 0.0
        %1495 = vmatprep.subr.mxu0 0.0
        %1496 = vmatpush1.msra.mxu0 0.0
        %1497 = vmatprep.subr.mxu0 0.0
        %1498 = vmatpush1.msra.mxu0 0.0
        %1499 = vmatprep.subr.mxu0 0.0
        %1500 = vmatpush1.msra.mxu0 0.0
        %1501 = vmatprep.subr.mxu0 0.0
        %1502 = vmatpush1.msra.mxu0 0.0
        %1503 = vmatprep.subr.mxu0 0.0
        %1504 = vmatpush1.msra.mxu0 0.0
        %1505 = vmatprep.subr.mxu0 0.0
        %1506 = vmatpush1.msra.mxu0 0.0
        %1507 = vmatprep.subr.mxu0 0.0
        %1508 = vmatpush1.msra.mxu0 0.0
        %1509 = vmatprep.subr.mxu0 0.0
        %1510 = vmatpush1.msra.mxu0 0.0
        %1511 = vmatprep.subr.mxu0 0.0
        %1512 = vmatpush1.msra.mxu0 0.0
        %1513 = vmatprep.subr.mxu0 0.0
        %1514 = vmatpush1.msra.mxu0 0.0
        %1515 = vmatprep.subr.mxu0 %v1478
        %1516 = vmatpush1.msra.mxu0 %v1477
        %1517 = vmatprep.subr.mxu0 %v1476
        %1518 = vmatpush1.msra.mxu0 %v1475
        %1519 = vmatprep.subr.mxu0 %v1474
        %1520 = vmatpush1.msra.mxu0 %v1473
        %1521 = vmatprep.subr.mxu0 %v1472
        %1522 = vmatpush1.msra.mxu0 %v1471
        %1523 = vmatprep.subr.mxu0 0.0
        %1524 = vmatpush2.msra.mxu0 0.0
        %1525 = vmatprep.subr.mxu0 0.0
        %1526 = vmatpush2.msra.mxu0 0.0
        %1527 = vmatprep.subr.mxu0 0.0
        %1528 = vmatpush2.msra.mxu0 0.0
        %1529 = vmatprep.subr.mxu0 0.0
        %1530 = vmatpush2.msra.mxu0 0.0
        %1531 = vmatprep.subr.mxu0 0.0
        %1532 = vmatpush2.msra.mxu0 0.0
        %1533 = vmatprep.subr.mxu0 0.0
        %1534 = vmatpush2.msra.mxu0 0.0
        %1535 = vmatprep.subr.mxu0 0.0
        %1536 = vmatpush2.msra.mxu0 0.0
        %1537 = vmatprep.subr.mxu0 0.0
        %1538 = vmatpush2.msra.mxu0 0.0
        %1539 = vmatprep.subr.mxu0 0.0
        %1540 = vmatpush2.msra.mxu0 0.0
        %1541 = vmatprep.subr.mxu0 0.0
        %1542 = vmatpush2.msra.mxu0 0.0
        %1543 = vmatprep.subr.mxu0 0.0
        %1544 = vmatpush2.msra.mxu0 0.0
        %1545 = vmatprep.subr.mxu0 0.0
        %1546 = vmatpush2.msra.mxu0 0.0
        %1547 = vmatprep.subr.mxu0 0.0
        %1548 = vmatpush2.msra.mxu0 0.0
        %1549 = vmatprep.subr.mxu0 0.0
        %1550 = vmatpush2.msra.mxu0 0.0
        %1551 = vmatprep.subr.mxu0 0.0
        %1552 = vmatpush2.msra.mxu0 0.0
        %1553 = vmatprep.subr.mxu0 0.0
        %1554 = vmatpush2.msra.mxu0 0.0
        %1555 = vmatprep.mubr.f32.mxu0 0.0
        %1556 = vmatmul.mubr.f32.gmra.mxu0 %v1480
        %v1557 = vpop.f32.mrf.mxu0
        %v1558 = vadd.f32 0.0, %v1557
        %v1559 = vpop.f32.mrf.mxu0
        %v1560 = vadd.f32 0.0, %v1559
        %1561 = vmatprep.mubr.f32.mxu0 0.0
        %1562 = vmatmul.mubr.f32.gmra.mxu0 %v1483
        %v1563 = vpop.f32.mrf.mxu0
        %v1564 = vadd.f32 0.0, %v1563
        %v1565 = vpop.f32.mrf.mxu0
        %v1566 = vadd.f32 0.0, %v1565
        %1567 = vmatprep.mubr.f32.mxu0 0.0
        %1568 = vmatmul.mubr.f32.gmra.mxu0 %v1486
        %v1569 = vpop.f32.mrf.mxu0
        %v1570 = vadd.f32 0.0, %v1569
        %v1571 = vpop.f32.mrf.mxu0
        %v1572 = vadd.f32 0.0, %v1571
        %1573 = vmatprep.mubr.f32.mxu0 0.0
        %1574 = vmatmul.mubr.f32.gmra.mxu0 %v1489
        %v1575 = vpop.f32.mrf.mxu0
        %v1576 = vadd.f32 0.0, %v1575
        %v1577 = vpop.f32.mrf.mxu0
        %v1578 = vadd.f32 0.0, %v1577
        %1579 = vdwg.mxu0
        %v1580 = vadd.f32 %v1458, %v1558
        %v1581 = vadd.f32 %v1459, %v1560
        %v1582 = vadd.f32 %v1460, %v1564
        %v1583 = vadd.f32 %v1461, %v1566
        %v1584 = vadd.f32 %v1462, %v1570
        %v1585 = vadd.f32 %v1463, %v1572
        %v1586 = vadd.f32 %v1464, %v1576
        %v1587 = vadd.f32 %v1465, %v1578
        %v1588 = vld [vmem:[%s383 + $0x40] sm:$0xff]
        %v1589 = vld [vmem:[%s383 + $0x48] sm:$0xff]
        %v1590 = vld [vmem:[%s383 + $0x50] sm:$0xff]
        %v1591 = vld [vmem:[%s383 + $0x58] sm:$0xf]
        %s1592 = scalar_lea.vmem %s1, 128
        %v1593 = vld [vmem:[%s1592] sm:$0xff]
        %v1594 = vld [vmem:[%s1592 + $0x8] sm:$0xff]
        %v1595 = vld [vmem:[%s1592 + $0x10] sm:$0xff]
        %v1596 = vld [vmem:[%s1592 + $0x18] sm:$0xff]
        %v1597 = vld [vmem:[%s1592 + $0x20] sm:$0xff]
        %v1598 = vld [vmem:[%s1592 + $0x28] sm:$0xff]
        %v1599 = vld [vmem:[%s1592 + $0x30] sm:$0xff]
        %v1600 = vld [vmem:[%s1592 + $0x38] sm:$0xff]
        %v1602 = vsel %vm409, %v1588, 0
        %v1605 = vsel %vm409, %v1589, 0
        %v1608 = vsel %vm409, %v1590, 0
        %v1611 = vsel %vm409, %v1591, 0
        %1613 = vmatprep.subr.mxu0 0.0
        %1614 = vmatpush1.msra.mxu0 0.0
        %1615 = vmatprep.subr.mxu0 0.0
        %1616 = vmatpush1.msra.mxu0 0.0
        %1617 = vmatprep.subr.mxu0 0.0
        %1618 = vmatpush1.msra.mxu0 0.0
        %1619 = vmatprep.subr.mxu0 0.0
        %1620 = vmatpush1.msra.mxu0 0.0
        %1621 = vmatprep.subr.mxu0 0.0
        %1622 = vmatpush1.msra.mxu0 0.0
        %1623 = vmatprep.subr.mxu0 0.0
        %1624 = vmatpush1.msra.mxu0 0.0
        %1625 = vmatprep.subr.mxu0 0.0
        %1626 = vmatpush1.msra.mxu0 0.0
        %1627 = vmatprep.subr.mxu0 0.0
        %1628 = vmatpush1.msra.mxu0 0.0
        %1629 = vmatprep.subr.mxu0 0.0
        %1630 = vmatpush1.msra.mxu0 0.0
        %1631 = vmatprep.subr.mxu0 0.0
        %1632 = vmatpush1.msra.mxu0 0.0
        %1633 = vmatprep.subr.mxu0 0.0
        %1634 = vmatpush1.msra.mxu0 0.0
        %1635 = vmatprep.subr.mxu0 0.0
        %1636 = vmatpush1.msra.mxu0 0.0
        %1637 = vmatprep.subr.mxu0 %v1600
        %1638 = vmatpush1.msra.mxu0 %v1599
        %1639 = vmatprep.subr.mxu0 %v1598
        %1640 = vmatpush1.msra.mxu0 %v1597
        %1641 = vmatprep.subr.mxu0 %v1596
        %1642 = vmatpush1.msra.mxu0 %v1595
        %1643 = vmatprep.subr.mxu0 %v1594
        %1644 = vmatpush1.msra.mxu0 %v1593
        %1645 = vmatprep.subr.mxu0 0.0
        %1646 = vmatpush2.msra.mxu0 0.0
        %1647 = vmatprep.subr.mxu0 0.0
        %1648 = vmatpush2.msra.mxu0 0.0
        %1649 = vmatprep.subr.mxu0 0.0
        %1650 = vmatpush2.msra.mxu0 0.0
        %1651 = vmatprep.subr.mxu0 0.0
        %1652 = vmatpush2.msra.mxu0 0.0
        %1653 = vmatprep.subr.mxu0 0.0
        %1654 = vmatpush2.msra.mxu0 0.0
        %1655 = vmatprep.subr.mxu0 0.0
        %1656 = vmatpush2.msra.mxu0 0.0
        %1657 = vmatprep.subr.mxu0 0.0
        %1658 = vmatpush2.msra.mxu0 0.0
        %1659 = vmatprep.subr.mxu0 0.0
        %1660 = vmatpush2.msra.mxu0 0.0
        %1661 = vmatprep.subr.mxu0 0.0
        %1662 = vmatpush2.msra.mxu0 0.0
        %1663 = vmatprep.subr.mxu0 0.0
        %1664 = vmatpush2.msra.mxu0 0.0
        %1665 = vmatprep.subr.mxu0 0.0
        %1666 = vmatpush2.msra.mxu0 0.0
        %1667 = vmatprep.subr.mxu0 0.0
        %1668 = vmatpush2.msra.mxu0 0.0
        %1669 = vmatprep.subr.mxu0 0.0
        %1670 = vmatpush2.msra.mxu0 0.0
        %1671 = vmatprep.subr.mxu0 0.0
        %1672 = vmatpush2.msra.mxu0 0.0
        %1673 = vmatprep.subr.mxu0 0.0
        %1674 = vmatpush2.msra.mxu0 0.0
        %1675 = vmatprep.subr.mxu0 0.0
        %1676 = vmatpush2.msra.mxu0 0.0
        %1677 = vmatprep.mubr.f32.mxu0 0.0
        %1678 = vmatmul.mubr.f32.gmra.mxu0 %v1602
        %v1679 = vpop.f32.mrf.mxu0
        %v1680 = vadd.f32 0.0, %v1679
        %v1681 = vpop.f32.mrf.mxu0
        %v1682 = vadd.f32 0.0, %v1681
        %1683 = vmatprep.mubr.f32.mxu0 0.0
        %1684 = vmatmul.mubr.f32.gmra.mxu0 %v1605
        %v1685 = vpop.f32.mrf.mxu0
        %v1686 = vadd.f32 0.0, %v1685
        %v1687 = vpop.f32.mrf.mxu0
        %v1688 = vadd.f32 0.0, %v1687
        %1689 = vmatprep.mubr.f32.mxu0 0.0
        %1690 = vmatmul.mubr.f32.gmra.mxu0 %v1608
        %v1691 = vpop.f32.mrf.mxu0
        %v1692 = vadd.f32 0.0, %v1691
        %v1693 = vpop.f32.mrf.mxu0
        %v1694 = vadd.f32 0.0, %v1693
        %1695 = vmatprep.mubr.f32.mxu0 0.0
        %1696 = vmatmul.mubr.f32.gmra.mxu0 %v1611
        %v1697 = vpop.f32.mrf.mxu0
        %v1698 = vadd.f32 0.0, %v1697
        %v1699 = vpop.f32.mrf.mxu0
        %v1700 = vadd.f32 0.0, %v1699
        %1701 = vdwg.mxu0
        %v1702 = vadd.f32 %v1580, %v1680
        %v1703 = vadd.f32 %v1581, %v1682
        %v1704 = vadd.f32 %v1582, %v1686
        %v1705 = vadd.f32 %v1583, %v1688
        %v1706 = vadd.f32 %v1584, %v1692
        %v1707 = vadd.f32 %v1585, %v1694
        %v1708 = vadd.f32 %v1586, %v1698
        %v1709 = vadd.f32 %v1587, %v1700
        %v1710 = vld [vmem:[%s383 + $0x41] sm:$0xff]
        %v1711 = vld [vmem:[%s383 + $0x49] sm:$0xff]
        %v1712 = vld [vmem:[%s383 + $0x51] sm:$0xff]
        %v1713 = vld [vmem:[%s383 + $0x59] sm:$0xf]
        %s1714 = scalar_lea.vmem %s1, 320
        %v1715 = vld [vmem:[%s1714] sm:$0xff]
        %v1716 = vld [vmem:[%s1714 + $0x8] sm:$0xff]
        %v1717 = vld [vmem:[%s1714 + $0x10] sm:$0xff]
        %v1718 = vld [vmem:[%s1714 + $0x18] sm:$0xff]
        %v1719 = vld [vmem:[%s1714 + $0x20] sm:$0xff]
        %v1720 = vld [vmem:[%s1714 + $0x28] sm:$0xff]
        %v1721 = vld [vmem:[%s1714 + $0x30] sm:$0xff]
        %v1722 = vld [vmem:[%s1714 + $0x38] sm:$0xff]
        %v1724 = vsel %vm409, %v1710, 0
        %v1727 = vsel %vm409, %v1711, 0
        %v1730 = vsel %vm409, %v1712, 0
        %v1733 = vsel %vm409, %v1713, 0
        %1735 = vmatprep.subr.mxu0 0.0
        %1736 = vmatpush1.msra.mxu0 0.0
        %1737 = vmatprep.subr.mxu0 0.0
        %1738 = vmatpush1.msra.mxu0 0.0
        %1739 = vmatprep.subr.mxu0 0.0
        %1740 = vmatpush1.msra.mxu0 0.0
        %1741 = vmatprep.subr.mxu0 0.0
        %1742 = vmatpush1.msra.mxu0 0.0
        %1743 = vmatprep.subr.mxu0 0.0
        %1744 = vmatpush1.msra.mxu0 0.0
        %1745 = vmatprep.subr.mxu0 0.0
        %1746 = vmatpush1.msra.mxu0 0.0
        %1747 = vmatprep.subr.mxu0 0.0
        %1748 = vmatpush1.msra.mxu0 0.0
        %1749 = vmatprep.subr.mxu0 0.0
        %1750 = vmatpush1.msra.mxu0 0.0
        %1751 = vmatprep.subr.mxu0 0.0
        %1752 = vmatpush1.msra.mxu0 0.0
        %1753 = vmatprep.subr.mxu0 0.0
        %1754 = vmatpush1.msra.mxu0 0.0
        %1755 = vmatprep.subr.mxu0 0.0
        %1756 = vmatpush1.msra.mxu0 0.0
        %1757 = vmatprep.subr.mxu0 0.0
        %1758 = vmatpush1.msra.mxu0 0.0
        %1759 = vmatprep.subr.mxu0 %v1722
        %1760 = vmatpush1.msra.mxu0 %v1721
        %1761 = vmatprep.subr.mxu0 %v1720
        %1762 = vmatpush1.msra.mxu0 %v1719
        %1763 = vmatprep.subr.mxu0 %v1718
        %1764 = vmatpush1.msra.mxu0 %v1717
        %1765 = vmatprep.subr.mxu0 %v1716
        %1766 = vmatpush1.msra.mxu0 %v1715
        %1767 = vmatprep.subr.mxu0 0.0
        %1768 = vmatpush2.msra.mxu0 0.0
        %1769 = vmatprep.subr.mxu0 0.0
        %1770 = vmatpush2.msra.mxu0 0.0
        %1771 = vmatprep.subr.mxu0 0.0
        %1772 = vmatpush2.msra.mxu0 0.0
        %1773 = vmatprep.subr.mxu0 0.0
        %1774 = vmatpush2.msra.mxu0 0.0
        %1775 = vmatprep.subr.mxu0 0.0
        %1776 = vmatpush2.msra.mxu0 0.0
        %1777 = vmatprep.subr.mxu0 0.0
        %1778 = vmatpush2.msra.mxu0 0.0
        %1779 = vmatprep.subr.mxu0 0.0
        %1780 = vmatpush2.msra.mxu0 0.0
        %1781 = vmatprep.subr.mxu0 0.0
        %1782 = vmatpush2.msra.mxu0 0.0
        %1783 = vmatprep.subr.mxu0 0.0
        %1784 = vmatpush2.msra.mxu0 0.0
        %1785 = vmatprep.subr.mxu0 0.0
        %1786 = vmatpush2.msra.mxu0 0.0
        %1787 = vmatprep.subr.mxu0 0.0
        %1788 = vmatpush2.msra.mxu0 0.0
        %1789 = vmatprep.subr.mxu0 0.0
        %1790 = vmatpush2.msra.mxu0 0.0
        %1791 = vmatprep.subr.mxu0 0.0
        %1792 = vmatpush2.msra.mxu0 0.0
        %1793 = vmatprep.subr.mxu0 0.0
        %1794 = vmatpush2.msra.mxu0 0.0
        %1795 = vmatprep.subr.mxu0 0.0
        %1796 = vmatpush2.msra.mxu0 0.0
        %1797 = vmatprep.subr.mxu0 0.0
        %1798 = vmatpush2.msra.mxu0 0.0
        %1799 = vmatprep.mubr.f32.mxu0 0.0
        %1800 = vmatmul.mubr.f32.gmra.mxu0 %v1724
        %v1801 = vpop.f32.mrf.mxu0
        %v1802 = vadd.f32 0.0, %v1801
        %v1803 = vpop.f32.mrf.mxu0
        %v1804 = vadd.f32 0.0, %v1803
        %1805 = vmatprep.mubr.f32.mxu0 0.0
        %1806 = vmatmul.mubr.f32.gmra.mxu0 %v1727
        %v1807 = vpop.f32.mrf.mxu0
        %v1808 = vadd.f32 0.0, %v1807
        %v1809 = vpop.f32.mrf.mxu0
        %v1810 = vadd.f32 0.0, %v1809
        %1811 = vmatprep.mubr.f32.mxu0 0.0
        %1812 = vmatmul.mubr.f32.gmra.mxu0 %v1730
        %v1813 = vpop.f32.mrf.mxu0
        %v1814 = vadd.f32 0.0, %v1813
        %v1815 = vpop.f32.mrf.mxu0
        %v1816 = vadd.f32 0.0, %v1815
        %1817 = vmatprep.mubr.f32.mxu0 0.0
        %1818 = vmatmul.mubr.f32.gmra.mxu0 %v1733
        %v1819 = vpop.f32.mrf.mxu0
        %v1820 = vadd.f32 0.0, %v1819
        %v1821 = vpop.f32.mrf.mxu0
        %v1822 = vadd.f32 0.0, %v1821
        %1823 = vdwg.mxu0
        %v1824 = vadd.f32 %v1702, %v1802
        %v1825 = vadd.f32 %v1703, %v1804
        %v1826 = vadd.f32 %v1704, %v1808
        %v1827 = vadd.f32 %v1705, %v1810
        %v1828 = vadd.f32 %v1706, %v1814
        %v1829 = vadd.f32 %v1707, %v1816
        %v1830 = vadd.f32 %v1708, %v1820
        %v1831 = vadd.f32 %v1709, %v1822
        %v1832 = vld [vmem:[%s383 + $0x42] sm:$0xff]
        %v1833 = vld [vmem:[%s383 + $0x4a] sm:$0xff]
        %v1834 = vld [vmem:[%s383 + $0x52] sm:$0xff]
        %v1835 = vld [vmem:[%s383 + $0x5a] sm:$0xf]
        %s1836 = scalar_lea.vmem %s1, 512
        %v1837 = vld [vmem:[%s1836] sm:$0xff]
        %v1838 = vld [vmem:[%s1836 + $0x8] sm:$0xff]
        %v1839 = vld [vmem:[%s1836 + $0x10] sm:$0xff]
        %v1840 = vld [vmem:[%s1836 + $0x18] sm:$0xff]
        %v1841 = vld [vmem:[%s1836 + $0x20] sm:$0xff]
        %v1842 = vld [vmem:[%s1836 + $0x28] sm:$0xff]
        %v1843 = vld [vmem:[%s1836 + $0x30] sm:$0xff]
        %v1844 = vld [vmem:[%s1836 + $0x38] sm:$0xff]
        %v1846 = vsel %vm409, %v1832, 0
        %v1849 = vsel %vm409, %v1833, 0
        %v1852 = vsel %vm409, %v1834, 0
        %v1855 = vsel %vm409, %v1835, 0
        %1857 = vmatprep.subr.mxu0 0.0
        %1858 = vmatpush1.msra.mxu0 0.0
        %1859 = vmatprep.subr.mxu0 0.0
        %1860 = vmatpush1.msra.mxu0 0.0
        %1861 = vmatprep.subr.mxu0 0.0
        %1862 = vmatpush1.msra.mxu0 0.0
        %1863 = vmatprep.subr.mxu0 0.0
        %1864 = vmatpush1.msra.mxu0 0.0
        %1865 = vmatprep.subr.mxu0 0.0
        %1866 = vmatpush1.msra.mxu0 0.0
        %1867 = vmatprep.subr.mxu0 0.0
        %1868 = vmatpush1.msra.mxu0 0.0
        %1869 = vmatprep.subr.mxu0 0.0
        %1870 = vmatpush1.msra.mxu0 0.0
        %1871 = vmatprep.subr.mxu0 0.0
        %1872 = vmatpush1.msra.mxu0 0.0
        %1873 = vmatprep.subr.mxu0 0.0
        %1874 = vmatpush1.msra.mxu0 0.0
        %1875 = vmatprep.subr.mxu0 0.0
        %1876 = vmatpush1.msra.mxu0 0.0
        %1877 = vmatprep.subr.mxu0 0.0
        %1878 = vmatpush1.msra.mxu0 0.0
        %1879 = vmatprep.subr.mxu0 0.0
        %1880 = vmatpush1.msra.mxu0 0.0
        %1881 = vmatprep.subr.mxu0 %v1844
        %1882 = vmatpush1.msra.mxu0 %v1843
        %1883 = vmatprep.subr.mxu0 %v1842
        %1884 = vmatpush1.msra.mxu0 %v1841
        %1885 = vmatprep.subr.mxu0 %v1840
        %1886 = vmatpush1.msra.mxu0 %v1839
        %1887 = vmatprep.subr.mxu0 %v1838
        %1888 = vmatpush1.msra.mxu0 %v1837
        %1889 = vmatprep.subr.mxu0 0.0
        %1890 = vmatpush2.msra.mxu0 0.0
        %1891 = vmatprep.subr.mxu0 0.0
        %1892 = vmatpush2.msra.mxu0 0.0
        %1893 = vmatprep.subr.mxu0 0.0
        %1894 = vmatpush2.msra.mxu0 0.0
        %1895 = vmatprep.subr.mxu0 0.0
        %1896 = vmatpush2.msra.mxu0 0.0
        %1897 = vmatprep.subr.mxu0 0.0
        %1898 = vmatpush2.msra.mxu0 0.0
        %1899 = vmatprep.subr.mxu0 0.0
        %1900 = vmatpush2.msra.mxu0 0.0
        %1901 = vmatprep.subr.mxu0 0.0
        %1902 = vmatpush2.msra.mxu0 0.0
        %1903 = vmatprep.subr.mxu0 0.0
        %1904 = vmatpush2.msra.mxu0 0.0
        %1905 = vmatprep.subr.mxu0 0.0
        %1906 = vmatpush2.msra.mxu0 0.0
        %1907 = vmatprep.subr.mxu0 0.0
        %1908 = vmatpush2.msra.mxu0 0.0
        %1909 = vmatprep.subr.mxu0 0.0
        %1910 = vmatpush2.msra.mxu0 0.0
        %1911 = vmatprep.subr.mxu0 0.0
        %1912 = vmatpush2.msra.mxu0 0.0
        %1913 = vmatprep.subr.mxu0 0.0
        %1914 = vmatpush2.msra.mxu0 0.0
        %1915 = vmatprep.subr.mxu0 0.0
        %1916 = vmatpush2.msra.mxu0 0.0
        %1917 = vmatprep.subr.mxu0 0.0
        %1918 = vmatpush2.msra.mxu0 0.0
        %1919 = vmatprep.subr.mxu0 0.0
        %1920 = vmatpush2.msra.mxu0 0.0
        %1921 = vmatprep.mubr.f32.mxu0 0.0
        %1922 = vmatmul.mubr.f32.gmra.mxu0 %v1846
        %v1923 = vpop.f32.mrf.mxu0
        %v1924 = vadd.f32 0.0, %v1923
        %v1925 = vpop.f32.mrf.mxu0
        %v1926 = vadd.f32 0.0, %v1925
        %1927 = vmatprep.mubr.f32.mxu0 0.0
        %1928 = vmatmul.mubr.f32.gmra.mxu0 %v1849
        %v1929 = vpop.f32.mrf.mxu0
        %v1930 = vadd.f32 0.0, %v1929
        %v1931 = vpop.f32.mrf.mxu0
        %v1932 = vadd.f32 0.0, %v1931
        %1933 = vmatprep.mubr.f32.mxu0 0.0
        %1934 = vmatmul.mubr.f32.gmra.mxu0 %v1852
        %v1935 = vpop.f32.mrf.mxu0
        %v1936 = vadd.f32 0.0, %v1935
        %v1937 = vpop.f32.mrf.mxu0
        %v1938 = vadd.f32 0.0, %v1937
        %1939 = vmatprep.mubr.f32.mxu0 0.0
        %1940 = vmatmul.mubr.f32.gmra.mxu0 %v1855
        %v1941 = vpop.f32.mrf.mxu0
        %v1942 = vadd.f32 0.0, %v1941
        %v1943 = vpop.f32.mrf.mxu0
        %v1944 = vadd.f32 0.0, %v1943
        %1945 = vdwg.mxu0
        %v1946 = vadd.f32 %v1824, %v1924
        %v1947 = vadd.f32 %v1825, %v1926
        %v1948 = vadd.f32 %v1826, %v1930
        %v1949 = vadd.f32 %v1827, %v1932
        %v1950 = vadd.f32 %v1828, %v1936
        %v1951 = vadd.f32 %v1829, %v1938
        %v1952 = vadd.f32 %v1830, %v1942
        %v1953 = vadd.f32 %v1831, %v1944
        %v1954 = vld [vmem:[%s383 + $0x43] sm:$0xff]
        %v1955 = vld [vmem:[%s383 + $0x4b] sm:$0xff]
        %v1956 = vld [vmem:[%s383 + $0x53] sm:$0xff]
        %v1957 = vld [vmem:[%s383 + $0x5b] sm:$0xf]
        %s1958 = scalar_lea.vmem %s1, 704
        %v1959 = vld [vmem:[%s1958] sm:$0xff]
        %v1960 = vld [vmem:[%s1958 + $0x8] sm:$0xff]
        %v1961 = vld [vmem:[%s1958 + $0x10] sm:$0xff]
        %v1962 = vld [vmem:[%s1958 + $0x18] sm:$0xff]
        %v1963 = vld [vmem:[%s1958 + $0x20] sm:$0xff]
        %v1964 = vld [vmem:[%s1958 + $0x28] sm:$0xff]
        %v1965 = vld [vmem:[%s1958 + $0x30] sm:$0xff]
        %v1966 = vld [vmem:[%s1958 + $0x38] sm:$0xff]
        %v1968 = vsel %vm409, %v1954, 0
        %v1971 = vsel %vm409, %v1955, 0
        %v1974 = vsel %vm409, %v1956, 0
        %v1977 = vsel %vm409, %v1957, 0
        %1979 = vmatprep.subr.mxu0 0.0
        %1980 = vmatpush1.msra.mxu0 0.0
        %1981 = vmatprep.subr.mxu0 0.0
        %1982 = vmatpush1.msra.mxu0 0.0
        %1983 = vmatprep.subr.mxu0 0.0
        %1984 = vmatpush1.msra.mxu0 0.0
        %1985 = vmatprep.subr.mxu0 0.0
        %1986 = vmatpush1.msra.mxu0 0.0
        %1987 = vmatprep.subr.mxu0 0.0
        %1988 = vmatpush1.msra.mxu0 0.0
        %1989 = vmatprep.subr.mxu0 0.0
        %1990 = vmatpush1.msra.mxu0 0.0
        %1991 = vmatprep.subr.mxu0 0.0
        %1992 = vmatpush1.msra.mxu0 0.0
        %1993 = vmatprep.subr.mxu0 0.0
        %1994 = vmatpush1.msra.mxu0 0.0
        %1995 = vmatprep.subr.mxu0 0.0
        %1996 = vmatpush1.msra.mxu0 0.0
        %1997 = vmatprep.subr.mxu0 0.0
        %1998 = vmatpush1.msra.mxu0 0.0
        %1999 = vmatprep.subr.mxu0 0.0
        %2000 = vmatpush1.msra.mxu0 0.0
        %2001 = vmatprep.subr.mxu0 0.0
        %2002 = vmatpush1.msra.mxu0 0.0
        %2003 = vmatprep.subr.mxu0 %v1966
        %2004 = vmatpush1.msra.mxu0 %v1965
        %2005 = vmatprep.subr.mxu0 %v1964
        %2006 = vmatpush1.msra.mxu0 %v1963
        %2007 = vmatprep.subr.mxu0 %v1962
        %2008 = vmatpush1.msra.mxu0 %v1961
        %2009 = vmatprep.subr.mxu0 %v1960
        %2010 = vmatpush1.msra.mxu0 %v1959
        %2011 = vmatprep.subr.mxu0 0.0
        %2012 = vmatpush2.msra.mxu0 0.0
        %2013 = vmatprep.subr.mxu0 0.0
        %2014 = vmatpush2.msra.mxu0 0.0
        %2015 = vmatprep.subr.mxu0 0.0
        %2016 = vmatpush2.msra.mxu0 0.0
        %2017 = vmatprep.subr.mxu0 0.0
        %2018 = vmatpush2.msra.mxu0 0.0
        %2019 = vmatprep.subr.mxu0 0.0
        %2020 = vmatpush2.msra.mxu0 0.0
        %2021 = vmatprep.subr.mxu0 0.0
        %2022 = vmatpush2.msra.mxu0 0.0
        %2023 = vmatprep.subr.mxu0 0.0
        %2024 = vmatpush2.msra.mxu0 0.0
        %2025 = vmatprep.subr.mxu0 0.0
        %2026 = vmatpush2.msra.mxu0 0.0
        %2027 = vmatprep.subr.mxu0 0.0
        %2028 = vmatpush2.msra.mxu0 0.0
        %2029 = vmatprep.subr.mxu0 0.0
        %2030 = vmatpush2.msra.mxu0 0.0
        %2031 = vmatprep.subr.mxu0 0.0
        %2032 = vmatpush2.msra.mxu0 0.0
        %2033 = vmatprep.subr.mxu0 0.0
        %2034 = vmatpush2.msra.mxu0 0.0
        %2035 = vmatprep.subr.mxu0 0.0
        %2036 = vmatpush2.msra.mxu0 0.0
        %2037 = vmatprep.subr.mxu0 0.0
        %2038 = vmatpush2.msra.mxu0 0.0
        %2039 = vmatprep.subr.mxu0 0.0
        %2040 = vmatpush2.msra.mxu0 0.0
        %2041 = vmatprep.subr.mxu0 0.0
        %2042 = vmatpush2.msra.mxu0 0.0
        %2043 = vmatprep.mubr.f32.mxu0 0.0
        %2044 = vmatmul.mubr.f32.gmra.mxu0 %v1968
        %v2045 = vpop.f32.mrf.mxu0
        %v2046 = vadd.f32 0.0, %v2045
        %v2047 = vpop.f32.mrf.mxu0
        %v2048 = vadd.f32 0.0, %v2047
        %2049 = vmatprep.mubr.f32.mxu0 0.0
        %2050 = vmatmul.mubr.f32.gmra.mxu0 %v1971
        %v2051 = vpop.f32.mrf.mxu0
        %v2052 = vadd.f32 0.0, %v2051
        %v2053 = vpop.f32.mrf.mxu0
        %v2054 = vadd.f32 0.0, %v2053
        %2055 = vmatprep.mubr.f32.mxu0 0.0
        %2056 = vmatmul.mubr.f32.gmra.mxu0 %v1974
        %v2057 = vpop.f32.mrf.mxu0
        %v2058 = vadd.f32 0.0, %v2057
        %v2059 = vpop.f32.mrf.mxu0
        %v2060 = vadd.f32 0.0, %v2059
        %2061 = vmatprep.mubr.f32.mxu0 0.0
        %2062 = vmatmul.mubr.f32.gmra.mxu0 %v1977
        %v2063 = vpop.f32.mrf.mxu0
        %v2064 = vadd.f32 0.0, %v2063
        %v2065 = vpop.f32.mrf.mxu0
        %v2066 = vadd.f32 0.0, %v2065
        %2067 = vdwg.mxu0
        %v2068 = vadd.f32 %v1946, %v2046
        %v2069 = vadd.f32 %v1947, %v2048
        %v2070 = vadd.f32 %v1948, %v2052
        %v2071 = vadd.f32 %v1949, %v2054
        %v2072 = vadd.f32 %v1950, %v2058
        %v2073 = vadd.f32 %v1951, %v2060
        %v2074 = vadd.f32 %v1952, %v2064
        %v2075 = vadd.f32 %v1953, %v2066
        %v2076 = vld [vmem:[%s383 + $0x44] sm:$0xff]
        %v2077 = vld [vmem:[%s383 + $0x4c] sm:$0xff]
        %v2078 = vld [vmem:[%s383 + $0x54] sm:$0xff]
        %v2079 = vld [vmem:[%s383 + $0x5c] sm:$0xf]
        %s2080 = scalar_lea.vmem %s1, 896
        %v2081 = vld [vmem:[%s2080] sm:$0xff]
        %v2082 = vld [vmem:[%s2080 + $0x8] sm:$0xff]
        %v2083 = vld [vmem:[%s2080 + $0x10] sm:$0xff]
        %v2084 = vld [vmem:[%s2080 + $0x18] sm:$0xff]
        %v2085 = vld [vmem:[%s2080 + $0x20] sm:$0xff]
        %v2086 = vld [vmem:[%s2080 + $0x28] sm:$0xff]
        %v2087 = vld [vmem:[%s2080 + $0x30] sm:$0xff]
        %v2088 = vld [vmem:[%s2080 + $0x38] sm:$0xff]
        %v2090 = vsel %vm409, %v2076, 0
        %v2093 = vsel %vm409, %v2077, 0
        %v2096 = vsel %vm409, %v2078, 0
        %v2099 = vsel %vm409, %v2079, 0
        %2101 = vmatprep.subr.mxu0 0.0
        %2102 = vmatpush1.msra.mxu0 0.0
        %2103 = vmatprep.subr.mxu0 0.0
        %2104 = vmatpush1.msra.mxu0 0.0
        %2105 = vmatprep.subr.mxu0 0.0
        %2106 = vmatpush1.msra.mxu0 0.0
        %2107 = vmatprep.subr.mxu0 0.0
        %2108 = vmatpush1.msra.mxu0 0.0
        %2109 = vmatprep.subr.mxu0 0.0
        %2110 = vmatpush1.msra.mxu0 0.0
        %2111 = vmatprep.subr.mxu0 0.0
        %2112 = vmatpush1.msra.mxu0 0.0
        %2113 = vmatprep.subr.mxu0 0.0
        %2114 = vmatpush1.msra.mxu0 0.0
        %2115 = vmatprep.subr.mxu0 0.0
        %2116 = vmatpush1.msra.mxu0 0.0
        %2117 = vmatprep.subr.mxu0 0.0
        %2118 = vmatpush1.msra.mxu0 0.0
        %2119 = vmatprep.subr.mxu0 0.0
        %2120 = vmatpush1.msra.mxu0 0.0
        %2121 = vmatprep.subr.mxu0 0.0
        %2122 = vmatpush1.msra.mxu0 0.0
        %2123 = vmatprep.subr.mxu0 0.0
        %2124 = vmatpush1.msra.mxu0 0.0
        %2125 = vmatprep.subr.mxu0 %v2088
        %2126 = vmatpush1.msra.mxu0 %v2087
        %2127 = vmatprep.subr.mxu0 %v2086
        %2128 = vmatpush1.msra.mxu0 %v2085
        %2129 = vmatprep.subr.mxu0 %v2084
        %2130 = vmatpush1.msra.mxu0 %v2083
        %2131 = vmatprep.subr.mxu0 %v2082
        %2132 = vmatpush1.msra.mxu0 %v2081
        %2133 = vmatprep.subr.mxu0 0.0
        %2134 = vmatpush2.msra.mxu0 0.0
        %2135 = vmatprep.subr.mxu0 0.0
        %2136 = vmatpush2.msra.mxu0 0.0
        %2137 = vmatprep.subr.mxu0 0.0
        %2138 = vmatpush2.msra.mxu0 0.0
        %2139 = vmatprep.subr.mxu0 0.0
        %2140 = vmatpush2.msra.mxu0 0.0
        %2141 = vmatprep.subr.mxu0 0.0
        %2142 = vmatpush2.msra.mxu0 0.0
        %2143 = vmatprep.subr.mxu0 0.0
        %2144 = vmatpush2.msra.mxu0 0.0
        %2145 = vmatprep.subr.mxu0 0.0
        %2146 = vmatpush2.msra.mxu0 0.0
        %2147 = vmatprep.subr.mxu0 0.0
        %2148 = vmatpush2.msra.mxu0 0.0
        %2149 = vmatprep.subr.mxu0 0.0
        %2150 = vmatpush2.msra.mxu0 0.0
        %2151 = vmatprep.subr.mxu0 0.0
        %2152 = vmatpush2.msra.mxu0 0.0
        %2153 = vmatprep.subr.mxu0 0.0
        %2154 = vmatpush2.msra.mxu0 0.0
        %2155 = vmatprep.subr.mxu0 0.0
        %2156 = vmatpush2.msra.mxu0 0.0
        %2157 = vmatprep.subr.mxu0 0.0
        %2158 = vmatpush2.msra.mxu0 0.0
        %2159 = vmatprep.subr.mxu0 0.0
        %2160 = vmatpush2.msra.mxu0 0.0
        %2161 = vmatprep.subr.mxu0 0.0
        %2162 = vmatpush2.msra.mxu0 0.0
        %2163 = vmatprep.subr.mxu0 0.0
        %2164 = vmatpush2.msra.mxu0 0.0
        %2165 = vmatprep.mubr.f32.mxu0 0.0
        %2166 = vmatmul.mubr.f32.gmra.mxu0 %v2090
        %v2167 = vpop.f32.mrf.mxu0
        %v2168 = vadd.f32 0.0, %v2167
        %v2169 = vpop.f32.mrf.mxu0
        %v2170 = vadd.f32 0.0, %v2169
        %2171 = vmatprep.mubr.f32.mxu0 0.0
        %2172 = vmatmul.mubr.f32.gmra.mxu0 %v2093
        %v2173 = vpop.f32.mrf.mxu0
        %v2174 = vadd.f32 0.0, %v2173
        %v2175 = vpop.f32.mrf.mxu0
        %v2176 = vadd.f32 0.0, %v2175
        %2177 = vmatprep.mubr.f32.mxu0 0.0
        %2178 = vmatmul.mubr.f32.gmra.mxu0 %v2096
        %v2179 = vpop.f32.mrf.mxu0
        %v2180 = vadd.f32 0.0, %v2179
        %v2181 = vpop.f32.mrf.mxu0
        %v2182 = vadd.f32 0.0, %v2181
        %2183 = vmatprep.mubr.f32.mxu0 0.0
        %2184 = vmatmul.mubr.f32.gmra.mxu0 %v2099
        %v2185 = vpop.f32.mrf.mxu0
        %v2186 = vadd.f32 0.0, %v2185
        %v2187 = vpop.f32.mrf.mxu0
        %v2188 = vadd.f32 0.0, %v2187
        %2189 = vdwg.mxu0
        %v2190 = vadd.f32 %v2068, %v2168
        %v2191 = vadd.f32 %v2069, %v2170
        %v2192 = vadd.f32 %v2070, %v2174
        %v2193 = vadd.f32 %v2071, %v2176
        %v2194 = vadd.f32 %v2072, %v2180
        %v2195 = vadd.f32 %v2073, %v2182
        %v2196 = vadd.f32 %v2074, %v2186
        %v2197 = vadd.f32 %v2075, %v2188
        %v2198 = vld [vmem:[%s2] sm:$0x3]
        %v2200 = vlaneseq
        %v2201 = vshrl.u32 %v2200, 7
        %v2202 = vsub.s32 0, %v2201
        %v2203 = vrot.slane %v2198, %v2202
        %v2204 = vlaneseq
        %v2205 = vshrl.u32 %v2204, 7
        %v2206 = vsub.s32 1, %v2205
        %v2207 = vrot.slane %v2198, %v2206
        %v2210 = vadd.f32 %v2190, %v2203
        %v2211 = vadd.f32 %v2191, %v2207
        %v2212 = vadd.f32 %v2192, %v2203
        %v2213 = vadd.f32 %v2193, %v2207
        %v2214 = vadd.f32 %v2194, %v2203
        %v2215 = vadd.f32 %v2195, %v2207
        %v2216 = vadd.f32 %v2196, %v2203
        %v2217 = vadd.f32 %v2197, %v2207
        %v2218 = vmax.f32 %v2210, 0.0
        %v2219 = vmax.f32 %v2211, 0.0
        %v2220 = vmax.f32 %v2212, 0.0
        %v2221 = vmax.f32 %v2213, 0.0
        %v2222 = vmax.f32 %v2214, 0.0
        %v2223 = vmax.f32 %v2215, 0.0
        %v2224 = vmax.f32 %v2216, 0.0
        %v2225 = vmax.f32 %v2217, 0.0
        %2234 = vrot.lane.b32.xlu0 %v2218, 122
        %v2235 = vpop.permute.xlu0 %2234
        %2236 = vrot.lane.b32.xlu0 %v2219, 122
        %v2237 = vpop.permute.xlu0 %2236
        %2238 = vrot.lane.b32.xlu0 %v2220, 122
        %v2239 = vpop.permute.xlu0 %2238
        %2240 = vrot.lane.b32.xlu0 %v2221, 122
        %v2241 = vpop.permute.xlu0 %2240
        %2242 = vrot.lane.b32.xlu0 %v2222, 122
        %v2243 = vpop.permute.xlu0 %2242
        %2244 = vrot.lane.b32.xlu0 %v2223, 122
        %v2245 = vpop.permute.xlu0 %2244
        %2246 = vrot.lane.b32.xlu0 %v2224, 122
        %v2247 = vpop.permute.xlu0 %2246
        %2248 = vrot.lane.b32.xlu0 %v2225, 122
        %v2249 = vpop.permute.xlu0 %2248
        %vm2250 = vcmask 998400
        %v2251 = vsel %vm2250, %v2235, %v2237
        %v2252 = vsel %vm2250, %v2239, %v2241
        %v2253 = vsel %vm2250, %v2243, %v2245
        %v2254 = vsel %vm2250, %v2247, %v2249
        %v2263 = vmax.f32 %v2218, %v2251
        %v2264 = vmax.f32 %v2219, %v2237
        %v2265 = vmax.f32 %v2220, %v2252
        %v2266 = vmax.f32 %v2221, %v2241
        %v2267 = vmax.f32 %v2222, %v2253
        %v2268 = vmax.f32 %v2223, %v2245
        %v2269 = vmax.f32 %v2224, %v2254
        %v2270 = vmax.f32 %v2225, %v2249
        %vm2279 = vcmask 1046528
        %v2280 = vrot.slane %v2263, 1
        %v2281 = vrot.slane %v2265, 1
        %v2282 = vsel %vm2279, %v2280, %v2281
        %v2283 = vrot.slane %v2264, 1
        %v2284 = vrot.slane %v2266, 1
        %v2285 = vsel %vm2279, %v2283, %v2284
        %v2286 = vrot.slane %v2267, 1
        %v2287 = vsel %vm2279, %v2281, %v2286
        %v2288 = vrot.slane %v2268, 1
        %v2289 = vsel %vm2279, %v2284, %v2288
        %v2290 = vrot.slane %v2269, 1
        %v2291 = vsel %vm2279, %v2286, %v2290
        %v2292 = vrot.slane %v2270, 1
        %v2293 = vsel %vm2279, %v2288, %v2292
        %v2302 = vmax.f32 %v2263, %v2282
        %v2303 = vmax.f32 %v2264, %v2285
        %v2304 = vmax.f32 %v2265, %v2287
        %v2305 = vmax.f32 %v2266, %v2289
        %v2306 = vmax.f32 %v2267, %v2291
        %v2307 = vmax.f32 %v2268, %v2293
        %v2308 = vmax.f32 %v2269, %v2290
        %v2309 = vmax.f32 %v2270, %v2292
        %v2312 = vcombine.low %v2302, %v2303
        %v2314 = vunpack.c.l.s4 1966171168
        %v2315 = vunpack.c.0.s8 %v2314
        %v2316 = vlaneseq
        %v2317 = vshrl.u32 %v2316, 7
        %v2318 = vsub.s32 %v2315, %v2317
        %v2319 = vrot.slane %v2312, %v2318
        %v2321 = vunpack.c.l.s4 1966171168
        %v2322 = vunpack.c.0.s8 %v2321
        %v2323 = vlaneseq
        %v2324 = vshrl.u32 %v2323, 7
        %v2325 = vsub.s32 %v2322, %v2324
        %v2326 = vrot.slane %v2319, %v2325
        %v2328 = vlaneseq
        %vm2329 = vcmp.ge.s32.totalorder %v2328, 0
        %vm2330 = vcmp.lt.s32.totalorder %v2328, 162
        %vm2331 = vmand %vm2329, %vm2330
        %2332 = vst.msk [vmem:[#allocation2] ss:$8 sm:$0x3] %vm2331, %v2326
        %2333 = vst.msk [vmem:[#allocation2] ss:$8 sm:$0x0] %vm2331, %v2326
        %v2334 = vcombine.high %v2326, %v2326
        %s2336 = scalar_lea.vmem [#allocation2], 1
        %2337 = vst.msk [vmem:[%s2336] ss:$8 sm:$0x3] %vm2331, %v2334
        %2338 = vst.msk [vmem:[%s2336] ss:$8 sm:$0x0] %vm2331, %v2334
        %v2339 = vcombine.high %v2302, %v2303
        %v2341 = vunpack.c.l.s4 1966171168
        %v2342 = vunpack.c.0.s8 %v2341
        %v2343 = vlaneseq
        %v2344 = vshrl.u32 %v2343, 7
        %v2345 = vsub.s32 %v2342, %v2344
        %v2346 = vrot.slane %v2339, %v2345
        %v2348 = vunpack.c.l.s4 1966171168
        %v2349 = vunpack.c.0.s8 %v2348
        %v2350 = vlaneseq
        %v2351 = vshrl.u32 %v2350, 7
        %v2352 = vsub.s32 %v2349, %v2351
        %v2353 = vrot.slane %v2346, %v2352
        %s2355 = scalar_lea.vmem [#allocation2], 2
        %2356 = vst.msk [vmem:[%s2355] ss:$8 sm:$0x3] %vm2331, %v2353
        %2357 = vst.msk [vmem:[%s2355] ss:$8 sm:$0x0] %vm2331, %v2353
        %v2358 = vcombine.high %v2353, %v2353
        %s2360 = scalar_lea.vmem [#allocation2], 3
        %2361 = vst.msk [vmem:[%s2360] ss:$8 sm:$0x3] %vm2331, %v2358
        %2362 = vst.msk [vmem:[%s2360] ss:$8 sm:$0x0] %vm2331, %v2358
        %v2365 = vcombine.low %v2304, %v2305
        %v2367 = vunpack.c.l.s4 1966171168
        %v2368 = vunpack.c.0.s8 %v2367
        %v2369 = vlaneseq
        %v2370 = vshrl.u32 %v2369, 7
        %v2371 = vsub.s32 %v2368, %v2370
        %v2372 = vrot.slane %v2365, %v2371
        %v2374 = vunpack.c.l.s4 1966171168
        %v2375 = vunpack.c.0.s8 %v2374
        %v2376 = vlaneseq
        %v2377 = vshrl.u32 %v2376, 7
        %v2378 = vsub.s32 %v2375, %v2377
        %v2379 = vrot.slane %v2372, %v2378
        %s2381 = scalar_lea.vmem [#allocation2], 4
        %2382 = vst.msk [vmem:[%s2381] ss:$8 sm:$0x3] %vm2331, %v2379
        %2383 = vst.msk [vmem:[%s2381] ss:$8 sm:$0x0] %vm2331, %v2379
        %v2384 = vcombine.high %v2379, %v2379
        %s2386 = scalar_lea.vmem [#allocation2], 5
        %2387 = vst.msk [vmem:[%s2386] ss:$8 sm:$0x3] %vm2331, %v2384
        %2388 = vst.msk [vmem:[%s2386] ss:$8 sm:$0x0] %vm2331, %v2384
        %v2389 = vcombine.high %v2304, %v2305
        %v2391 = vunpack.c.l.s4 1966171168
        %v2392 = vunpack.c.0.s8 %v2391
        %v2393 = vlaneseq
        %v2394 = vshrl.u32 %v2393, 7
        %v2395 = vsub.s32 %v2392, %v2394
        %v2396 = vrot.slane %v2389, %v2395
        %v2398 = vunpack.c.l.s4 1966171168
        %v2399 = vunpack.c.0.s8 %v2398
        %v2400 = vlaneseq
        %v2401 = vshrl.u32 %v2400, 7
        %v2402 = vsub.s32 %v2399, %v2401
        %v2403 = vrot.slane %v2396, %v2402
        %s2405 = scalar_lea.vmem [#allocation2], 6
        %2406 = vst.msk [vmem:[%s2405] ss:$8 sm:$0x3] %vm2331, %v2403
        %2407 = vst.msk [vmem:[%s2405] ss:$8 sm:$0x0] %vm2331, %v2403
        %v2408 = vcombine.high %v2403, %v2403
        %s2410 = scalar_lea.vmem [#allocation2], 7
        %2411 = vst.msk [vmem:[%s2410] ss:$8 sm:$0x3] %vm2331, %v2408
        %2412 = vst.msk [vmem:[%s2410] ss:$8 sm:$0x0] %vm2331, %v2408
        %v2415 = vcombine.low %v2306, %v2307
        %v2417 = vunpack.c.l.s4 1966171168
        %v2418 = vunpack.c.0.s8 %v2417
        %v2419 = vlaneseq
        %v2420 = vshrl.u32 %v2419, 7
        %v2421 = vsub.s32 %v2418, %v2420
        %v2422 = vrot.slane %v2415, %v2421
        %v2424 = vunpack.c.l.s4 1966171168
        %v2425 = vunpack.c.0.s8 %v2424
        %v2426 = vlaneseq
        %v2427 = vshrl.u32 %v2426, 7
        %v2428 = vsub.s32 %v2425, %v2427
        %v2429 = vrot.slane %v2422, %v2428
        %s2431 = scalar_lea.vmem [#allocation2], 16
        %2432 = vst.msk [vmem:[%s2431] ss:$8 sm:$0x3] %vm2331, %v2429
        %2433 = vst.msk [vmem:[%s2431] ss:$8 sm:$0x0] %vm2331, %v2429
        %v2434 = vcombine.high %v2429, %v2429
        %s2436 = scalar_lea.vmem [#allocation2], 17
        %2437 = vst.msk [vmem:[%s2436] ss:$8 sm:$0x3] %vm2331, %v2434
        %2438 = vst.msk [vmem:[%s2436] ss:$8 sm:$0x0] %vm2331, %v2434
        %v2439 = vcombine.high %v2306, %v2307
        %v2441 = vunpack.c.l.s4 1966171168
        %v2442 = vunpack.c.0.s8 %v2441
        %v2443 = vlaneseq
        %v2444 = vshrl.u32 %v2443, 7
        %v2445 = vsub.s32 %v2442, %v2444
        %v2446 = vrot.slane %v2439, %v2445
        %v2448 = vunpack.c.l.s4 1966171168
        %v2449 = vunpack.c.0.s8 %v2448
        %v2450 = vlaneseq
        %v2451 = vshrl.u32 %v2450, 7
        %v2452 = vsub.s32 %v2449, %v2451
        %v2453 = vrot.slane %v2446, %v2452
        %s2455 = scalar_lea.vmem [#allocation2], 18
        %2456 = vst.msk [vmem:[%s2455] ss:$8 sm:$0x3] %vm2331, %v2453
        %2457 = vst.msk [vmem:[%s2455] ss:$8 sm:$0x0] %vm2331, %v2453
        %v2458 = vcombine.high %v2453, %v2453
        %s2460 = scalar_lea.vmem [#allocation2], 19
        %2461 = vst.msk [vmem:[%s2460] ss:$8 sm:$0x3] %vm2331, %v2458
        %2462 = vst.msk [vmem:[%s2460] ss:$8 sm:$0x0] %vm2331, %v2458
        %v2465 = vcombine.low %v2308, %v2309
        %v2467 = vunpack.c.l.s4 1966171168
        %v2468 = vunpack.c.0.s8 %v2467
        %v2469 = vlaneseq
        %v2470 = vshrl.u32 %v2469, 7
        %v2471 = vsub.s32 %v2468, %v2470
        %v2472 = vrot.slane %v2465, %v2471
        %v2474 = vunpack.c.l.s4 1966171168
        %v2475 = vunpack.c.0.s8 %v2474
        %v2476 = vlaneseq
        %v2477 = vshrl.u32 %v2476, 7
        %v2478 = vsub.s32 %v2475, %v2477
        %v2479 = vrot.slane %v2472, %v2478
        %s2481 = scalar_lea.vmem [#allocation2], 20
        %2482 = vst.msk [vmem:[%s2481] ss:$8 sm:$0x3] %vm2331, %v2479
        %2483 = vst.msk [vmem:[%s2481] ss:$8 sm:$0x0] %vm2331, %v2479
        %v2484 = vcombine.high %v2479, %v2479
        %s2486 = scalar_lea.vmem [#allocation2], 21
        %2487 = vst.msk [vmem:[%s2486] ss:$8 sm:$0x3] %vm2331, %v2484
        %2488 = vst.msk [vmem:[%s2486] ss:$8 sm:$0x0] %vm2331, %v2484
        %v2489 = vld [vmem:[#allocation2] sm:$0xff]
        %v2490 = vld [vmem:[#allocation2 + $0x8] sm:$0xff]
        %v2491 = vld [vmem:[#allocation2 + $0x10] sm:$0x3]
        %v2492 = vld [vmem:[#allocation2 + $0x18] sm:$0x3]
        %v2493 = vld [vmem:[%s3] sm:$0xff]
        %v2494 = vld [vmem:[%s3 + $0x8] sm:$0xff]
        %v2495 = vld [vmem:[%s3 + $0x10] sm:$0xff]
        %v2496 = vld [vmem:[%s3 + $0x18] sm:$0xff]
        %v2497 = vld [vmem:[%s3 + $0x20] sm:$0xff]
        %v2498 = vld [vmem:[%s3 + $0x28] sm:$0xff]
        %v2499 = vld [vmem:[%s3 + $0x30] sm:$0xff]
        %v2500 = vld [vmem:[%s3 + $0x38] sm:$0xff]
        %v2501 = vld [vmem:[%s3 + $0x40] sm:$0xff]
        %v2502 = vld [vmem:[%s3 + $0x48] sm:$0xff]
        %v2503 = vld [vmem:[%s3 + $0x50] sm:$0xff]
        %v2504 = vld [vmem:[%s3 + $0x58] sm:$0xff]
        %v2505 = vld [vmem:[%s3 + $0x60] sm:$0xff]
        %v2506 = vld [vmem:[%s3 + $0x68] sm:$0xff]
        %v2507 = vld [vmem:[%s3 + $0x70] sm:$0xff]
        %v2508 = vld [vmem:[%s3 + $0x78] sm:$0xff]
        %v2509 = vld [vmem:[%s3 + $0x80] sm:$0xff]
        %v2510 = vld [vmem:[%s3 + $0x88] sm:$0xff]
        %v2511 = vld [vmem:[%s3 + $0x90] sm:$0xff]
        %v2512 = vld [vmem:[%s3 + $0x98] sm:$0xff]
        %v2513 = vld [vmem:[%s3 + $0xa0] sm:$0xff]
        %v2514 = vld [vmem:[%s3 + $0xa8] sm:$0xff]
        %v2515 = vld [vmem:[%s3 + $0xb0] sm:$0xff]
        %v2516 = vld [vmem:[%s3 + $0xb8] sm:$0xff]
        %v2517 = vld [vmem:[%s3 + $0xc0] sm:$0xff]
        %v2518 = vld [vmem:[%s3 + $0xc8] sm:$0xff]
        %v2519 = vld [vmem:[%s3 + $0xd0] sm:$0xff]
        %v2520 = vld [vmem:[%s3 + $0xd8] sm:$0xff]
        %v2521 = vld [vmem:[%s3 + $0xe0] sm:$0xff]
        %v2522 = vld [vmem:[%s3 + $0xe8] sm:$0xff]
        %v2523 = vld [vmem:[%s3 + $0xf0] sm:$0xff]
        %v2524 = vld [vmem:[%s3 + $0xf8] sm:$0xff]
        %v2525 = vld [vmem:[%s3 + $0x100] sm:$0xff]
        %v2526 = vld [vmem:[%s3 + $0x108] sm:$0xff]
        %v2527 = vld [vmem:[%s3 + $0x110] sm:$0xff]
        %v2528 = vld [vmem:[%s3 + $0x118] sm:$0xff]
        %v2529 = vld [vmem:[%s3 + $0x120] sm:$0xff]
        %v2530 = vld [vmem:[%s3 + $0x128] sm:$0xff]
        %v2531 = vld [vmem:[%s3 + $0x130] sm:$0xff]
        %v2532 = vld [vmem:[%s3 + $0x138] sm:$0xff]
        %v2533 = vld [vmem:[%s3 + $0x140] sm:$0x3]
        %v2534 = vld [vmem:[%s3 + $0x148] sm:$0x3]
        %v2535 = vld [vmem:[#allocation2] sm:$0xfe]
        %v2536 = vld [vmem:[#allocation2 + $0x8] sm:$0xfe]
        %v2537 = vld [vmem:[#allocation2 + $0x10] sm:$0x7]
        %v2538 = vld [vmem:[#allocation2 + $0x18] sm:$0x7]
        %s2539 = scalar_lea.vmem %s3, 336
        %v2540 = vld [vmem:[%s2539] sm:$0xff]
        %v2541 = vld [vmem:[%s2539 + $0x8] sm:$0xff]
        %v2542 = vld [vmem:[%s2539 + $0x10] sm:$0xff]
        %v2543 = vld [vmem:[%s2539 + $0x18] sm:$0xff]
        %v2544 = vld [vmem:[%s2539 + $0x20] sm:$0xff]
        %v2545 = vld [vmem:[%s2539 + $0x28] sm:$0xff]
        %v2546 = vld [vmem:[%s2539 + $0x30] sm:$0xff]
        %v2547 = vld [vmem:[%s2539 + $0x38] sm:$0xff]
        %v2548 = vld [vmem:[%s2539 + $0x40] sm:$0xff]
        %v2549 = vld [vmem:[%s2539 + $0x48] sm:$0xff]
        %v2550 = vld [vmem:[%s2539 + $0x50] sm:$0xff]
        %v2551 = vld [vmem:[%s2539 + $0x58] sm:$0xff]
        %v2552 = vld [vmem:[%s2539 + $0x60] sm:$0xff]
        %v2553 = vld [vmem:[%s2539 + $0x68] sm:$0xff]
        %v2554 = vld [vmem:[%s2539 + $0x70] sm:$0xff]
        %v2555 = vld [vmem:[%s2539 + $0x78] sm:$0xff]
        %v2556 = vld [vmem:[%s2539 + $0x80] sm:$0xff]
        %v2557 = vld [vmem:[%s2539 + $0x88] sm:$0xff]
        %v2558 = vld [vmem:[%s2539 + $0x90] sm:$0xff]
        %v2559 = vld [vmem:[%s2539 + $0x98] sm:$0xff]
        %v2560 = vld [vmem:[%s2539 + $0xa0] sm:$0xff]
        %v2561 = vld [vmem:[%s2539 + $0xa8] sm:$0xff]
        %v2562 = vld [vmem:[%s2539 + $0xb0] sm:$0xff]
        %v2563 = vld [vmem:[%s2539 + $0xb8] sm:$0xff]
        %v2564 = vld [vmem:[%s2539 + $0xc0] sm:$0xff]
        %v2565 = vld [vmem:[%s2539 + $0xc8] sm:$0xff]
        %v2566 = vld [vmem:[%s2539 + $0xd0] sm:$0xff]
        %v2567 = vld [vmem:[%s2539 + $0xd8] sm:$0xff]
        %v2568 = vld [vmem:[%s2539 + $0xe0] sm:$0xff]
        %v2569 = vld [vmem:[%s2539 + $0xe8] sm:$0xff]
        %v2570 = vld [vmem:[%s2539 + $0xf0] sm:$0xff]
        %v2571 = vld [vmem:[%s2539 + $0xf8] sm:$0xff]
        %v2572 = vld [vmem:[%s2539 + $0x100] sm:$0xff]
        %v2573 = vld [vmem:[%s2539 + $0x108] sm:$0xff]
        %v2574 = vld [vmem:[%s2539 + $0x110] sm:$0xff]
        %v2575 = vld [vmem:[%s2539 + $0x118] sm:$0xff]
        %v2576 = vld [vmem:[%s2539 + $0x120] sm:$0xff]
        %v2577 = vld [vmem:[%s2539 + $0x128] sm:$0xff]
        %v2578 = vld [vmem:[%s2539 + $0x130] sm:$0xff]
        %v2579 = vld [vmem:[%s2539 + $0x138] sm:$0xff]
        %v2580 = vld [vmem:[%s2539 + $0x140] sm:$0x3]
        %v2581 = vld [vmem:[%s2539 + $0x148] sm:$0x3]
        %v2586 = vrot.slane %v2535, 1
        %v2587 = vrot.slane %v2537, 1
        %v2588 = vsel %vm2279, %v2586, %v2587
        %v2589 = vrot.slane %v2536, 1
        %v2590 = vrot.slane %v2538, 1
        %v2591 = vsel %vm2279, %v2589, %v2590
        %vm2594 = vcmask 277504
        %v2595 = vsel %vm2594, %v2591, 0
        %v2597 = vsel %vm2594, %v2590, 0
        %vm2599 = vcmask 1041408
        %v2601 = vsel %vm2599, %v2580, 0
        %v2604 = vsel %vm2599, %v2581, 0
        %2606 = vmatprep.subr.mxu0 %v2571
        %2607 = vmatpush1.msra.mxu0 %v2570
        %2608 = vmatprep.subr.mxu0 %v2569
        %2609 = vmatpush1.msra.mxu0 %v2568
        %2610 = vmatprep.subr.mxu0 %v2567
        %2611 = vmatpush1.msra.mxu0 %v2566
        %2612 = vmatprep.subr.mxu0 %v2565
        %2613 = vmatpush1.msra.mxu0 %v2564
        %2614 = vmatprep.subr.mxu0 %v2563
        %2615 = vmatpush1.msra.mxu0 %v2562
        %2616 = vmatprep.subr.mxu0 %v2561
        %2617 = vmatpush1.msra.mxu0 %v2560
        %2618 = vmatprep.subr.mxu0 %v2559
        %2619 = vmatpush1.msra.mxu0 %v2558
        %2620 = vmatprep.subr.mxu0 %v2557
        %2621 = vmatpush1.msra.mxu0 %v2556
        %2622 = vmatprep.subr.mxu0 %v2555
        %2623 = vmatpush1.msra.mxu0 %v2554
        %2624 = vmatprep.subr.mxu0 %v2553
        %2625 = vmatpush1.msra.mxu0 %v2552
        %2626 = vmatprep.subr.mxu0 %v2551
        %2627 = vmatpush1.msra.mxu0 %v2550
        %2628 = vmatprep.subr.mxu0 %v2549
        %2629 = vmatpush1.msra.mxu0 %v2548
        %2630 = vmatprep.subr.mxu0 %v2547
        %2631 = vmatpush1.msra.mxu0 %v2546
        %2632 = vmatprep.subr.mxu0 %v2545
        %2633 = vmatpush1.msra.mxu0 %v2544
        %2634 = vmatprep.subr.mxu0 %v2543
        %2635 = vmatpush1.msra.mxu0 %v2542
        %2636 = vmatprep.subr.mxu0 %v2541
        %2637 = vmatpush1.msra.mxu0 %v2540
        %2638 = vmatprep.subr.mxu0 0.0
        %2639 = vmatpush2.msra.mxu0 0.0
        %2640 = vmatprep.subr.mxu0 0.0
        %2641 = vmatpush2.msra.mxu0 0.0
        %2642 = vmatprep.subr.mxu0 0.0
        %2643 = vmatpush2.msra.mxu0 0.0
        %2644 = vmatprep.subr.mxu0 0.0
        %2645 = vmatpush2.msra.mxu0 0.0
        %2646 = vmatprep.subr.mxu0 0.0
        %2647 = vmatpush2.msra.mxu0 0.0
        %2648 = vmatprep.subr.mxu0 0.0
        %2649 = vmatpush2.msra.mxu0 0.0
        %2650 = vmatprep.subr.mxu0 0.0
        %2651 = vmatpush2.msra.mxu0 0.0
        %2652 = vmatprep.subr.mxu0 0.0
        %2653 = vmatpush2.msra.mxu0 0.0
        %2654 = vmatprep.subr.mxu0 0.0
        %2655 = vmatpush2.msra.mxu0 0.0
        %2656 = vmatprep.subr.mxu0 0.0
        %2657 = vmatpush2.msra.mxu0 0.0
        %2658 = vmatprep.subr.mxu0 0.0
        %2659 = vmatpush2.msra.mxu0 0.0
        %2660 = vmatprep.subr.mxu0 %v2604
        %2661 = vmatpush2.msra.mxu0 %v2601
        %2662 = vmatprep.subr.mxu0 %v2579
        %2663 = vmatpush2.msra.mxu0 %v2578
        %2664 = vmatprep.subr.mxu0 %v2577
        %2665 = vmatpush2.msra.mxu0 %v2576
        %2666 = vmatprep.subr.mxu0 %v2575
        %2667 = vmatpush2.msra.mxu0 %v2574
        %2668 = vmatprep.subr.mxu0 %v2573
        %2669 = vmatpush2.msra.mxu0 %v2572
        %2670 = vmatprep.mubr.f32.mxu0 %v2595
        %2671 = vmatmul.mubr.f32.gmra.mxu0 %v2588
        %v2672 = vpop.f32.mrf.mxu0
        %v2673 = vadd.f32 0.0, %v2672
        %v2674 = vpop.f32.mrf.mxu0
        %v2675 = vadd.f32 0.0, %v2674
        %2676 = vmatprep.mubr.f32.mxu0 %v2597
        %2677 = vmatmul.mubr.f32.gmra.mxu0 %v2587
        %v2678 = vpop.f32.mrf.mxu0
        %v2679 = vadd.f32 0.0, %v2678
        %v2680 = vpop.f32.mrf.mxu0
        %v2681 = vadd.f32 0.0, %v2680
        %2682 = vdwg.mxu0
        %v2684 = vsel %vm2594, %v2490, 0
        %v2687 = vsel %vm2594, %v2492, 0
        %v2690 = vsel %vm2599, %v2533, 0
        %v2693 = vsel %vm2599, %v2534, 0
        %2695 = vmatprep.subr.mxu0 %v2524
        %2696 = vmatpush1.msra.mxu0 %v2523
        %2697 = vmatprep.subr.mxu0 %v2522
        %2698 = vmatpush1.msra.mxu0 %v2521
        %2699 = vmatprep.subr.mxu0 %v2520
        %2700 = vmatpush1.msra.mxu0 %v2519
        %2701 = vmatprep.subr.mxu0 %v2518
        %2702 = vmatpush1.msra.mxu0 %v2517
        %2703 = vmatprep.subr.mxu0 %v2516
        %2704 = vmatpush1.msra.mxu0 %v2515
        %2705 = vmatprep.subr.mxu0 %v2514
        %2706 = vmatpush1.msra.mxu0 %v2513
        %2707 = vmatprep.subr.mxu0 %v2512
        %2708 = vmatpush1.msra.mxu0 %v2511
        %2709 = vmatprep.subr.mxu0 %v2510
        %2710 = vmatpush1.msra.mxu0 %v2509
        %2711 = vmatprep.subr.mxu0 %v2508
        %2712 = vmatpush1.msra.mxu0 %v2507
        %2713 = vmatprep.subr.mxu0 %v2506
        %2714 = vmatpush1.msra.mxu0 %v2505
        %2715 = vmatprep.subr.mxu0 %v2504
        %2716 = vmatpush1.msra.mxu0 %v2503
        %2717 = vmatprep.subr.mxu0 %v2502
        %2718 = vmatpush1.msra.mxu0 %v2501
        %2719 = vmatprep.subr.mxu0 %v2500
        %2720 = vmatpush1.msra.mxu0 %v2499
        %2721 = vmatprep.subr.mxu0 %v2498
        %2722 = vmatpush1.msra.mxu0 %v2497
        %2723 = vmatprep.subr.mxu0 %v2496
        %2724 = vmatpush1.msra.mxu0 %v2495
        %2725 = vmatprep.subr.mxu0 %v2494
        %2726 = vmatpush1.msra.mxu0 %v2493
        %2727 = vmatprep.subr.mxu0 0.0
        %2728 = vmatpush2.msra.mxu0 0.0
        %2729 = vmatprep.subr.mxu0 0.0
        %2730 = vmatpush2.msra.mxu0 0.0
        %2731 = vmatprep.subr.mxu0 0.0
        %2732 = vmatpush2.msra.mxu0 0.0
        %2733 = vmatprep.subr.mxu0 0.0
        %2734 = vmatpush2.msra.mxu0 0.0
        %2735 = vmatprep.subr.mxu0 0.0
        %2736 = vmatpush2.msra.mxu0 0.0
        %2737 = vmatprep.subr.mxu0 0.0
        %2738 = vmatpush2.msra.mxu0 0.0
        %2739 = vmatprep.subr.mxu0 0.0
        %2740 = vmatpush2.msra.mxu0 0.0
        %2741 = vmatprep.subr.mxu0 0.0
        %2742 = vmatpush2.msra.mxu0 0.0
        %2743 = vmatprep.subr.mxu0 0.0
        %2744 = vmatpush2.msra.mxu0 0.0
        %2745 = vmatprep.subr.mxu0 0.0
        %2746 = vmatpush2.msra.mxu0 0.0
        %2747 = vmatprep.subr.mxu0 0.0
        %2748 = vmatpush2.msra.mxu0 0.0
        %2749 = vmatprep.subr.mxu0 %v2693
        %2750 = vmatpush2.msra.mxu0 %v2690
        %2751 = vmatprep.subr.mxu0 %v2532
        %2752 = vmatpush2.msra.mxu0 %v2531
        %2753 = vmatprep.subr.mxu0 %v2530
        %2754 = vmatpush2.msra.mxu0 %v2529
        %2755 = vmatprep.subr.mxu0 %v2528
        %2756 = vmatpush2.msra.mxu0 %v2527
        %2757 = vmatprep.subr.mxu0 %v2526
        %2758 = vmatpush2.msra.mxu0 %v2525
        %2759 = vmatprep.mubr.f32.mxu0 %v2684
        %2760 = vmatmul.mubr.f32.gmra.mxu0 %v2489
        %v2761 = vpop.f32.mrf.mxu0
        %v2762 = vadd.f32 %v2673, %v2761
        %v2763 = vpop.f32.mrf.mxu0
        %v2764 = vadd.f32 %v2675, %v2763
        %2765 = vmatprep.mubr.f32.mxu0 %v2687
        %2766 = vmatmul.mubr.f32.gmra.mxu0 %v2491
        %v2767 = vpop.f32.mrf.mxu0
        %v2768 = vadd.f32 %v2679, %v2767
        %v2769 = vpop.f32.mrf.mxu0
        %v2770 = vadd.f32 %v2681, %v2769
        %2771 = vdwg.mxu0
        %v2772 = vld [vmem:[#allocation2] sm:$0xfc]
        %v2773 = vld [vmem:[#allocation2 + $0x8] sm:$0xfc]
        %v2774 = vld [vmem:[#allocation2 + $0x10] sm:$0xf]
        %v2775 = vld [vmem:[#allocation2 + $0x18] sm:$0xf]
        %s2776 = scalar_lea.vmem %s3, 672
        %v2777 = vld [vmem:[%s2776] sm:$0xff]
        %v2778 = vld [vmem:[%s2776 + $0x8] sm:$0xff]
        %v2779 = vld [vmem:[%s2776 + $0x10] sm:$0xff]
        %v2780 = vld [vmem:[%s2776 + $0x18] sm:$0xff]
        %v2781 = vld [vmem:[%s2776 + $0x20] sm:$0xff]
        %v2782 = vld [vmem:[%s2776 + $0x28] sm:$0xff]
        %v2783 = vld [vmem:[%s2776 + $0x30] sm:$0xff]
        %v2784 = vld [vmem:[%s2776 + $0x38] sm:$0xff]
        %v2785 = vld [vmem:[%s2776 + $0x40] sm:$0xff]
        %v2786 = vld [vmem:[%s2776 + $0x48] sm:$0xff]
        %v2787 = vld [vmem:[%s2776 + $0x50] sm:$0xff]
        %v2788 = vld [vmem:[%s2776 + $0x58] sm:$0xff]
        %v2789 = vld [vmem:[%s2776 + $0x60] sm:$0xff]
        %v2790 = vld [vmem:[%s2776 + $0x68] sm:$0xff]
        %v2791 = vld [vmem:[%s2776 + $0x70] sm:$0xff]
        %v2792 = vld [vmem:[%s2776 + $0x78] sm:$0xff]
        %v2793 = vld [vmem:[%s2776 + $0x80] sm:$0xff]
        %v2794 = vld [vmem:[%s2776 + $0x88] sm:$0xff]
        %v2795 = vld [vmem:[%s2776 + $0x90] sm:$0xff]
        %v2796 = vld [vmem:[%s2776 + $0x98] sm:$0xff]
        %v2797 = vld [vmem:[%s2776 + $0xa0] sm:$0xff]
        %v2798 = vld [vmem:[%s2776 + $0xa8] sm:$0xff]
        %v2799 = vld [vmem:[%s2776 + $0xb0] sm:$0xff]
        %v2800 = vld [vmem:[%s2776 + $0xb8] sm:$0xff]
        %v2801 = vld [vmem:[%s2776 + $0xc0] sm:$0xff]
        %v2802 = vld [vmem:[%s2776 + $0xc8] sm:$0xff]
        %v2803 = vld [vmem:[%s2776 + $0xd0] sm:$0xff]
        %v2804 = vld [vmem:[%s2776 + $0xd8] sm:$0xff]
        %v2805 = vld [vmem:[%s2776 + $0xe0] sm:$0xff]
        %v2806 = vld [vmem:[%s2776 + $0xe8] sm:$0xff]
        %v2807 = vld [vmem:[%s2776 + $0xf0] sm:$0xff]
        %v2808 = vld [vmem:[%s2776 + $0xf8] sm:$0xff]
        %v2809 = vld [vmem:[%s2776 + $0x100] sm:$0xff]
        %v2810 = vld [vmem:[%s2776 + $0x108] sm:$0xff]
        %v2811 = vld [vmem:[%s2776 + $0x110] sm:$0xff]
        %v2812 = vld [vmem:[%s2776 + $0x118] sm:$0xff]
        %v2813 = vld [vmem:[%s2776 + $0x120] sm:$0xff]
        %v2814 = vld [vmem:[%s2776 + $0x128] sm:$0xff]
        %v2815 = vld [vmem:[%s2776 + $0x130] sm:$0xff]
        %v2816 = vld [vmem:[%s2776 + $0x138] sm:$0xff]
        %v2817 = vld [vmem:[%s2776 + $0x140] sm:$0x3]
        %v2818 = vld [vmem:[%s2776 + $0x148] sm:$0x3]
        %vm2823 = vcmask 1045504
        %v2824 = vrot.slane %v2772, 2
        %v2825 = vrot.slane %v2774, 2
        %v2826 = vsel %vm2823, %v2824, %v2825
        %v2827 = vrot.slane %v2773, 2
        %v2828 = vrot.slane %v2775, 2
        %v2829 = vsel %vm2823, %v2827, %v2828
        %v2832 = vsel %vm2594, %v2829, 0
        %v2834 = vsel %vm2594, %v2828, 0
        %v2837 = vsel %vm2599, %v2817, 0
        %v2840 = vsel %vm2599, %v2818, 0
        %2842 = vmatprep.subr.mxu0 %v2808
        %2843 = vmatpush1.msra.mxu0 %v2807
        %2844 = vmatprep.subr.mxu0 %v2806
        %2845 = vmatpush1.msra.mxu0 %v2805
        %2846 = vmatprep.subr.mxu0 %v2804
        %2847 = vmatpush1.msra.mxu0 %v2803
        %2848 = vmatprep.subr.mxu0 %v2802
        %2849 = vmatpush1.msra.mxu0 %v2801
        %2850 = vmatprep.subr.mxu0 %v2800
        %2851 = vmatpush1.msra.mxu0 %v2799
        %2852 = vmatprep.subr.mxu0 %v2798
        %2853 = vmatpush1.msra.mxu0 %v2797
        %2854 = vmatprep.subr.mxu0 %v2796
        %2855 = vmatpush1.msra.mxu0 %v2795
        %2856 = vmatprep.subr.mxu0 %v2794
        %2857 = vmatpush1.msra.mxu0 %v2793
        %2858 = vmatprep.subr.mxu0 %v2792
        %2859 = vmatpush1.msra.mxu0 %v2791
        %2860 = vmatprep.subr.mxu0 %v2790
        %2861 = vmatpush1.msra.mxu0 %v2789
        %2862 = vmatprep.subr.mxu0 %v2788
        %2863 = vmatpush1.msra.mxu0 %v2787
        %2864 = vmatprep.subr.mxu0 %v2786
        %2865 = vmatpush1.msra.mxu0 %v2785
        %2866 = vmatprep.subr.mxu0 %v2784
        %2867 = vmatpush1.msra.mxu0 %v2783
        %2868 = vmatprep.subr.mxu0 %v2782
        %2869 = vmatpush1.msra.mxu0 %v2781
        %2870 = vmatprep.subr.mxu0 %v2780
        %2871 = vmatpush1.msra.mxu0 %v2779
        %2872 = vmatprep.subr.mxu0 %v2778
        %2873 = vmatpush1.msra.mxu0 %v2777
        %2874 = vmatprep.subr.mxu0 0.0
        %2875 = vmatpush2.msra.mxu0 0.0
        %2876 = vmatprep.subr.mxu0 0.0
        %2877 = vmatpush2.msra.mxu0 0.0
        %2878 = vmatprep.subr.mxu0 0.0
        %2879 = vmatpush2.msra.mxu0 0.0
        %2880 = vmatprep.subr.mxu0 0.0
        %2881 = vmatpush2.msra.mxu0 0.0
        %2882 = vmatprep.subr.mxu0 0.0
        %2883 = vmatpush2.msra.mxu0 0.0
        %2884 = vmatprep.subr.mxu0 0.0
        %2885 = vmatpush2.msra.mxu0 0.0
        %2886 = vmatprep.subr.mxu0 0.0
        %2887 = vmatpush2.msra.mxu0 0.0
        %2888 = vmatprep.subr.mxu0 0.0
        %2889 = vmatpush2.msra.mxu0 0.0
        %2890 = vmatprep.subr.mxu0 0.0
        %2891 = vmatpush2.msra.mxu0 0.0
        %2892 = vmatprep.subr.mxu0 0.0
        %2893 = vmatpush2.msra.mxu0 0.0
        %2894 = vmatprep.subr.mxu0 0.0
        %2895 = vmatpush2.msra.mxu0 0.0
        %2896 = vmatprep.subr.mxu0 %v2840
        %2897 = vmatpush2.msra.mxu0 %v2837
        %2898 = vmatprep.subr.mxu0 %v2816
        %2899 = vmatpush2.msra.mxu0 %v2815
        %2900 = vmatprep.subr.mxu0 %v2814
        %2901 = vmatpush2.msra.mxu0 %v2813
        %2902 = vmatprep.subr.mxu0 %v2812
        %2903 = vmatpush2.msra.mxu0 %v2811
        %2904 = vmatprep.subr.mxu0 %v2810
        %2905 = vmatpush2.msra.mxu0 %v2809
        %2906 = vmatprep.mubr.f32.mxu0 %v2832
        %2907 = vmatmul.mubr.f32.gmra.mxu0 %v2826
        %v2908 = vpop.f32.mrf.mxu0
        %v2909 = vadd.f32 0.0, %v2908
        %v2910 = vpop.f32.mrf.mxu0
        %v2911 = vadd.f32 0.0, %v2910
        %2912 = vmatprep.mubr.f32.mxu0 %v2834
        %2913 = vmatmul.mubr.f32.gmra.mxu0 %v2825
        %v2914 = vpop.f32.mrf.mxu0
        %v2915 = vadd.f32 0.0, %v2914
        %v2916 = vpop.f32.mrf.mxu0
        %v2917 = vadd.f32 0.0, %v2916
        %2918 = vdwg.mxu0
        %v2919 = vadd.f32 %v2762, %v2909
        %v2920 = vadd.f32 %v2764, %v2911
        %v2921 = vadd.f32 %v2768, %v2915
        %v2922 = vadd.f32 %v2770, %v2917
        %v2923 = vld [vmem:[#allocation2] sm:$0xf8]
        %v2924 = vld [vmem:[#allocation2 + $0x8] sm:$0xf8]
        %v2925 = vld [vmem:[#allocation2 + $0x10] sm:$0x1f]
        %v2926 = vld [vmem:[#allocation2 + $0x18] sm:$0x1f]
        %s2927 = scalar_lea.vmem %s3, 1008
        %v2928 = vld [vmem:[%s2927] sm:$0xff]
        %v2929 = vld [vmem:[%s2927 + $0x8] sm:$0xff]
        %v2930 = vld [vmem:[%s2927 + $0x10] sm:$0xff]
        %v2931 = vld [vmem:[%s2927 + $0x18] sm:$0xff]
        %v2932 = vld [vmem:[%s2927 + $0x20] sm:$0xff]
        %v2933 = vld [vmem:[%s2927 + $0x28] sm:$0xff]
        %v2934 = vld [vmem:[%s2927 + $0x30] sm:$0xff]
        %v2935 = vld [vmem:[%s2927 + $0x38] sm:$0xff]
        %v2936 = vld [vmem:[%s2927 + $0x40] sm:$0xff]
        %v2937 = vld [vmem:[%s2927 + $0x48] sm:$0xff]
        %v2938 = vld [vmem:[%s2927 + $0x50] sm:$0xff]
        %v2939 = vld [vmem:[%s2927 + $0x58] sm:$0xff]
        %v2940 = vld [vmem:[%s2927 + $0x60] sm:$0xff]
        %v2941 = vld [vmem:[%s2927 + $0x68] sm:$0xff]
        %v2942 = vld [vmem:[%s2927 + $0x70] sm:$0xff]
        %v2943 = vld [vmem:[%s2927 + $0x78] sm:$0xff]
        %v2944 = vld [vmem:[%s2927 + $0x80] sm:$0xff]
        %v2945 = vld [vmem:[%s2927 + $0x88] sm:$0xff]
        %v2946 = vld [vmem:[%s2927 + $0x90] sm:$0xff]
        %v2947 = vld [vmem:[%s2927 + $0x98] sm:$0xff]
        %v2948 = vld [vmem:[%s2927 + $0xa0] sm:$0xff]
        %v2949 = vld [vmem:[%s2927 + $0xa8] sm:$0xff]
        %v2950 = vld [vmem:[%s2927 + $0xb0] sm:$0xff]
        %v2951 = vld [vmem:[%s2927 + $0xb8] sm:$0xff]
        %v2952 = vld [vmem:[%s2927 + $0xc0] sm:$0xff]
        %v2953 = vld [vmem:[%s2927 + $0xc8] sm:$0xff]
        %v2954 = vld [vmem:[%s2927 + $0xd0] sm:$0xff]
        %v2955 = vld [vmem:[%s2927 + $0xd8] sm:$0xff]
        %v2956 = vld [vmem:[%s2927 + $0xe0] sm:$0xff]
        %v2957 = vld [vmem:[%s2927 + $0xe8] sm:$0xff]
        %v2958 = vld [vmem:[%s2927 + $0xf0] sm:$0xff]
        %v2959 = vld [vmem:[%s2927 + $0xf8] sm:$0xff]
        %v2960 = vld [vmem:[%s2927 + $0x100] sm:$0xff]
        %v2961 = vld [vmem:[%s2927 + $0x108] sm:$0xff]
        %v2962 = vld [vmem:[%s2927 + $0x110] sm:$0xff]
        %v2963 = vld [vmem:[%s2927 + $0x118] sm:$0xff]
        %v2964 = vld [vmem:[%s2927 + $0x120] sm:$0xff]
        %v2965 = vld [vmem:[%s2927 + $0x128] sm:$0xff]
        %v2966 = vld [vmem:[%s2927 + $0x130] sm:$0xff]
        %v2967 = vld [vmem:[%s2927 + $0x138] sm:$0xff]
        %v2968 = vld [vmem:[%s2927 + $0x140] sm:$0x3]
        %v2969 = vld [vmem:[%s2927 + $0x148] sm:$0x3]
        %vm2974 = vcmask 1044480
        %v2975 = vrot.slane %v2923, 3
        %v2976 = vrot.slane %v2925, 3
        %v2977 = vsel %vm2974, %v2975, %v2976
        %v2978 = vrot.slane %v2924, 3
        %v2979 = vrot.slane %v2926, 3
        %v2980 = vsel %vm2974, %v2978, %v2979
        %v2983 = vsel %vm2594, %v2980, 0
        %v2985 = vsel %vm2594, %v2979, 0
        %v2988 = vsel %vm2599, %v2968, 0
        %v2991 = vsel %vm2599, %v2969, 0
        %2993 = vmatprep.subr.mxu0 %v2959
        %2994 = vmatpush1.msra.mxu0 %v2958
        %2995 = vmatprep.subr.mxu0 %v2957
        %2996 = vmatpush1.msra.mxu0 %v2956
        %2997 = vmatprep.subr.mxu0 %v2955
        %2998 = vmatpush1.msra.mxu0 %v2954
        %2999 = vmatprep.subr.mxu0 %v2953
        %3000 = vmatpush1.msra.mxu0 %v2952
        %3001 = vmatprep.subr.mxu0 %v2951
        %3002 = vmatpush1.msra.mxu0 %v2950
        %3003 = vmatprep.subr.mxu0 %v2949
        %3004 = vmatpush1.msra.mxu0 %v2948
        %3005 = vmatprep.subr.mxu0 %v2947
        %3006 = vmatpush1.msra.mxu0 %v2946
        %3007 = vmatprep.subr.mxu0 %v2945
        %3008 = vmatpush1.msra.mxu0 %v2944
        %3009 = vmatprep.subr.mxu0 %v2943
        %3010 = vmatpush1.msra.mxu0 %v2942
        %3011 = vmatprep.subr.mxu0 %v2941
        %3012 = vmatpush1.msra.mxu0 %v2940
        %3013 = vmatprep.subr.mxu0 %v2939
        %3014 = vmatpush1.msra.mxu0 %v2938
        %3015 = vmatprep.subr.mxu0 %v2937
        %3016 = vmatpush1.msra.mxu0 %v2936
        %3017 = vmatprep.subr.mxu0 %v2935
        %3018 = vmatpush1.msra.mxu0 %v2934
        %3019 = vmatprep.subr.mxu0 %v2933
        %3020 = vmatpush1.msra.mxu0 %v2932
        %3021 = vmatprep.subr.mxu0 %v2931
        %3022 = vmatpush1.msra.mxu0 %v2930
        %3023 = vmatprep.subr.mxu0 %v2929
        %3024 = vmatpush1.msra.mxu0 %v2928
        %3025 = vmatprep.subr.mxu0 0.0
        %3026 = vmatpush2.msra.mxu0 0.0
        %3027 = vmatprep.subr.mxu0 0.0
        %3028 = vmatpush2.msra.mxu0 0.0
        %3029 = vmatprep.subr.mxu0 0.0
        %3030 = vmatpush2.msra.mxu0 0.0
        %3031 = vmatprep.subr.mxu0 0.0
        %3032 = vmatpush2.msra.mxu0 0.0
        %3033 = vmatprep.subr.mxu0 0.0
        %3034 = vmatpush2.msra.mxu0 0.0
        %3035 = vmatprep.subr.mxu0 0.0
        %3036 = vmatpush2.msra.mxu0 0.0
        %3037 = vmatprep.subr.mxu0 0.0
        %3038 = vmatpush2.msra.mxu0 0.0
        %3039 = vmatprep.subr.mxu0 0.0
        %3040 = vmatpush2.msra.mxu0 0.0
        %3041 = vmatprep.subr.mxu0 0.0
        %3042 = vmatpush2.msra.mxu0 0.0
        %3043 = vmatprep.subr.mxu0 0.0
        %3044 = vmatpush2.msra.mxu0 0.0
        %3045 = vmatprep.subr.mxu0 0.0
        %3046 = vmatpush2.msra.mxu0 0.0
        %3047 = vmatprep.subr.mxu0 %v2991
        %3048 = vmatpush2.msra.mxu0 %v2988
        %3049 = vmatprep.subr.mxu0 %v2967
        %3050 = vmatpush2.msra.mxu0 %v2966
        %3051 = vmatprep.subr.mxu0 %v2965
        %3052 = vmatpush2.msra.mxu0 %v2964
        %3053 = vmatprep.subr.mxu0 %v2963
        %3054 = vmatpush2.msra.mxu0 %v2962
        %3055 = vmatprep.subr.mxu0 %v2961
        %3056 = vmatpush2.msra.mxu0 %v2960
        %3057 = vmatprep.mubr.f32.mxu0 %v2983
        %3058 = vmatmul.mubr.f32.gmra.mxu0 %v2977
        %v3059 = vpop.f32.mrf.mxu0
        %v3060 = vadd.f32 0.0, %v3059
        %v3061 = vpop.f32.mrf.mxu0
        %v3062 = vadd.f32 0.0, %v3061
        %3063 = vmatprep.mubr.f32.mxu0 %v2985
        %3064 = vmatmul.mubr.f32.gmra.mxu0 %v2976
        %v3065 = vpop.f32.mrf.mxu0
        %v3066 = vadd.f32 0.0, %v3065
        %v3067 = vpop.f32.mrf.mxu0
        %v3068 = vadd.f32 0.0, %v3067
        %3069 = vdwg.mxu0
        %v3070 = vadd.f32 %v2919, %v3060
        %v3071 = vadd.f32 %v2920, %v3062
        %v3072 = vadd.f32 %v2921, %v3066
        %v3073 = vadd.f32 %v2922, %v3068
        %v3074 = vld [vmem:[#allocation2] sm:$0xf0]
        %v3075 = vld [vmem:[#allocation2 + $0x8] sm:$0xf0]
        %v3076 = vld [vmem:[#allocation2 + $0x10] sm:$0x3f]
        %v3077 = vld [vmem:[#allocation2 + $0x18] sm:$0x3f]
        %s3078 = scalar_lea.vmem %s3, 1344
        %v3079 = vld [vmem:[%s3078] sm:$0xff]
        %v3080 = vld [vmem:[%s3078 + $0x8] sm:$0xff]
        %v3081 = vld [vmem:[%s3078 + $0x10] sm:$0xff]
        %v3082 = vld [vmem:[%s3078 + $0x18] sm:$0xff]
        %v3083 = vld [vmem:[%s3078 + $0x20] sm:$0xff]
        %v3084 = vld [vmem:[%s3078 + $0x28] sm:$0xff]
        %v3085 = vld [vmem:[%s3078 + $0x30] sm:$0xff]
        %v3086 = vld [vmem:[%s3078 + $0x38] sm:$0xff]
        %v3087 = vld [vmem:[%s3078 + $0x40] sm:$0xff]
        %v3088 = vld [vmem:[%s3078 + $0x48] sm:$0xff]
        %v3089 = vld [vmem:[%s3078 + $0x50] sm:$0xff]
        %v3090 = vld [vmem:[%s3078 + $0x58] sm:$0xff]
        %v3091 = vld [vmem:[%s3078 + $0x60] sm:$0xff]
        %v3092 = vld [vmem:[%s3078 + $0x68] sm:$0xff]
        %v3093 = vld [vmem:[%s3078 + $0x70] sm:$0xff]
        %v3094 = vld [vmem:[%s3078 + $0x78] sm:$0xff]
        %v3095 = vld [vmem:[%s3078 + $0x80] sm:$0xff]
        %v3096 = vld [vmem:[%s3078 + $0x88] sm:$0xff]
        %v3097 = vld [vmem:[%s3078 + $0x90] sm:$0xff]
        %v3098 = vld [vmem:[%s3078 + $0x98] sm:$0xff]
        %v3099 = vld [vmem:[%s3078 + $0xa0] sm:$0xff]
        %v3100 = vld [vmem:[%s3078 + $0xa8] sm:$0xff]
        %v3101 = vld [vmem:[%s3078 + $0xb0] sm:$0xff]
        %v3102 = vld [vmem:[%s3078 + $0xb8] sm:$0xff]
        %v3103 = vld [vmem:[%s3078 + $0xc0] sm:$0xff]
        %v3104 = vld [vmem:[%s3078 + $0xc8] sm:$0xff]
        %v3105 = vld [vmem:[%s3078 + $0xd0] sm:$0xff]
        %v3106 = vld [vmem:[%s3078 + $0xd8] sm:$0xff]
        %v3107 = vld [vmem:[%s3078 + $0xe0] sm:$0xff]
        %v3108 = vld [vmem:[%s3078 + $0xe8] sm:$0xff]
        %v3109 = vld [vmem:[%s3078 + $0xf0] sm:$0xff]
        %v3110 = vld [vmem:[%s3078 + $0xf8] sm:$0xff]
        %v3111 = vld [vmem:[%s3078 + $0x100] sm:$0xff]
        %v3112 = vld [vmem:[%s3078 + $0x108] sm:$0xff]
        %v3113 = vld [vmem:[%s3078 + $0x110] sm:$0xff]
        %v3114 = vld [vmem:[%s3078 + $0x118] sm:$0xff]
        %v3115 = vld [vmem:[%s3078 + $0x120] sm:$0xff]
        %v3116 = vld [vmem:[%s3078 + $0x128] sm:$0xff]
        %v3117 = vld [vmem:[%s3078 + $0x130] sm:$0xff]
        %v3118 = vld [vmem:[%s3078 + $0x138] sm:$0xff]
        %v3119 = vld [vmem:[%s3078 + $0x140] sm:$0x3]
        %v3120 = vld [vmem:[%s3078 + $0x148] sm:$0x3]
        %vm3125 = vcmask 1043456
        %v3126 = vrot.slane %v3074, 4
        %v3127 = vrot.slane %v3076, 4
        %v3128 = vsel %vm3125, %v3126, %v3127
        %v3129 = vrot.slane %v3075, 4
        %v3130 = vrot.slane %v3077, 4
        %v3131 = vsel %vm3125, %v3129, %v3130
        %v3134 = vsel %vm2594, %v3131, 0
        %v3136 = vsel %vm2594, %v3130, 0
        %v3139 = vsel %vm2599, %v3119, 0
        %v3142 = vsel %vm2599, %v3120, 0
        %3144 = vmatprep.subr.mxu0 %v3110
        %3145 = vmatpush1.msra.mxu0 %v3109
        %3146 = vmatprep.subr.mxu0 %v3108
        %3147 = vmatpush1.msra.mxu0 %v3107
        %3148 = vmatprep.subr.mxu0 %v3106
        %3149 = vmatpush1.msra.mxu0 %v3105
        %3150 = vmatprep.subr.mxu0 %v3104
        %3151 = vmatpush1.msra.mxu0 %v3103
        %3152 = vmatprep.subr.mxu0 %v3102
        %3153 = vmatpush1.msra.mxu0 %v3101
        %3154 = vmatprep.subr.mxu0 %v3100
        %3155 = vmatpush1.msra.mxu0 %v3099
        %3156 = vmatprep.subr.mxu0 %v3098
        %3157 = vmatpush1.msra.mxu0 %v3097
        %3158 = vmatprep.subr.mxu0 %v3096
        %3159 = vmatpush1.msra.mxu0 %v3095
        %3160 = vmatprep.subr.mxu0 %v3094
        %3161 = vmatpush1.msra.mxu0 %v3093
        %3162 = vmatprep.subr.mxu0 %v3092
        %3163 = vmatpush1.msra.mxu0 %v3091
        %3164 = vmatprep.subr.mxu0 %v3090
        %3165 = vmatpush1.msra.mxu0 %v3089
        %3166 = vmatprep.subr.mxu0 %v3088
        %3167 = vmatpush1.msra.mxu0 %v3087
        %3168 = vmatprep.subr.mxu0 %v3086
        %3169 = vmatpush1.msra.mxu0 %v3085
        %3170 = vmatprep.subr.mxu0 %v3084
        %3171 = vmatpush1.msra.mxu0 %v3083
        %3172 = vmatprep.subr.mxu0 %v3082
        %3173 = vmatpush1.msra.mxu0 %v3081
        %3174 = vmatprep.subr.mxu0 %v3080
        %3175 = vmatpush1.msra.mxu0 %v3079
        %3176 = vmatprep.subr.mxu0 0.0
        %3177 = vmatpush2.msra.mxu0 0.0
        %3178 = vmatprep.subr.mxu0 0.0
        %3179 = vmatpush2.msra.mxu0 0.0
        %3180 = vmatprep.subr.mxu0 0.0
        %3181 = vmatpush2.msra.mxu0 0.0
        %3182 = vmatprep.subr.mxu0 0.0
        %3183 = vmatpush2.msra.mxu0 0.0
        %3184 = vmatprep.subr.mxu0 0.0
        %3185 = vmatpush2.msra.mxu0 0.0
        %3186 = vmatprep.subr.mxu0 0.0
        %3187 = vmatpush2.msra.mxu0 0.0
        %3188 = vmatprep.subr.mxu0 0.0
        %3189 = vmatpush2.msra.mxu0 0.0
        %3190 = vmatprep.subr.mxu0 0.0
        %3191 = vmatpush2.msra.mxu0 0.0
        %3192 = vmatprep.subr.mxu0 0.0
        %3193 = vmatpush2.msra.mxu0 0.0
        %3194 = vmatprep.subr.mxu0 0.0
        %3195 = vmatpush2.msra.mxu0 0.0
        %3196 = vmatprep.subr.mxu0 0.0
        %3197 = vmatpush2.msra.mxu0 0.0
        %3198 = vmatprep.subr.mxu0 %v3142
        %3199 = vmatpush2.msra.mxu0 %v3139
        %3200 = vmatprep.subr.mxu0 %v3118
        %3201 = vmatpush2.msra.mxu0 %v3117
        %3202 = vmatprep.subr.mxu0 %v3116
        %3203 = vmatpush2.msra.mxu0 %v3115
        %3204 = vmatprep.subr.mxu0 %v3114
        %3205 = vmatpush2.msra.mxu0 %v3113
        %3206 = vmatprep.subr.mxu0 %v3112
        %3207 = vmatpush2.msra.mxu0 %v3111
        %3208 = vmatprep.mubr.f32.mxu0 %v3134
        %3209 = vmatmul.mubr.f32.gmra.mxu0 %v3128
        %v3210 = vpop.f32.mrf.mxu0
        %v3211 = vadd.f32 0.0, %v3210
        %v3212 = vpop.f32.mrf.mxu0
        %v3213 = vadd.f32 0.0, %v3212
        %3214 = vmatprep.mubr.f32.mxu0 %v3136
        %3215 = vmatmul.mubr.f32.gmra.mxu0 %v3127
        %v3216 = vpop.f32.mrf.mxu0
        %v3217 = vadd.f32 0.0, %v3216
        %v3218 = vpop.f32.mrf.mxu0
        %v3219 = vadd.f32 0.0, %v3218
        %3220 = vdwg.mxu0
        %v3221 = vadd.f32 %v3070, %v3211
        %v3222 = vadd.f32 %v3071, %v3213
        %v3223 = vadd.f32 %v3072, %v3217
        %v3224 = vadd.f32 %v3073, %v3219
        %v3225 = vld [vmem:[%s4] sm:$0x3]
        %v3227 = vlaneseq
        %v3228 = vshrl.u32 %v3227, 7
        %v3229 = vsub.s32 0, %v3228
        %v3230 = vrot.slane %v3225, %v3229
        %v3231 = vlaneseq
        %v3232 = vshrl.u32 %v3231, 7
        %v3233 = vsub.s32 1, %v3232
        %v3234 = vrot.slane %v3225, %v3233
        %v3237 = vadd.f32 %v3221, %v3230
        %v3238 = vadd.f32 %v3222, %v3234
        %v3239 = vadd.f32 %v3223, %v3230
        %v3240 = vadd.f32 %v3224, %v3234
        %v3241 = vmax.f32 %v3237, 0.0
        %v3242 = vmax.f32 %v3238, 0.0
        %v3243 = vmax.f32 %v3239, 0.0
        %v3244 = vmax.f32 %v3240, 0.0
        %3249 = vrot.lane.b32.xlu0 %v3241, 112
        %v3250 = vpop.permute.xlu0 %3249
        %3251 = vrot.lane.b32.xlu0 %v3242, 112
        %v3252 = vpop.permute.xlu0 %3251
        %3253 = vrot.lane.b32.xlu0 %v3243, 112
        %v3254 = vpop.permute.xlu0 %3253
        %3255 = vrot.lane.b32.xlu0 %v3244, 112
        %v3256 = vpop.permute.xlu0 %3255
        %vm3257 = vcmask 916480
        %v3258 = vsel %vm3257, %v3250, %v3252
        %v3259 = vsel %vm3257, %v3254, %v3256
        %v3264 = vmax.f32 %v3241, %v3258
        %v3265 = vmax.f32 %v3242, %v3252
        %v3266 = vmax.f32 %v3243, %v3259
        %v3267 = vmax.f32 %v3244, %v3256
        %v3272 = vrot.slane %v3264, 1
        %v3273 = vrot.slane %v3266, 1
        %v3274 = vsel %vm2279, %v3272, %v3273
        %v3275 = vrot.slane %v3265, 1
        %v3276 = vrot.slane %v3267, 1
        %v3277 = vsel %vm2279, %v3275, %v3276
        %v3282 = vmax.f32 %v3264, %v3274
        %v3283 = vmax.f32 %v3265, %v3277
        %v3284 = vmax.f32 %v3266, %v3273
        %v3285 = vmax.f32 %v3267, %v3276
        %v3286 = vld [vmem:[%s5] sm:$0xff]
        %v3287 = vld [vmem:[%s5 + $0x8] sm:$0xff]
        %v3288 = vld [vmem:[%s5 + $0x10] sm:$0xff]
        %v3289 = vld [vmem:[%s5 + $0x18] sm:$0xff]
        %v3290 = vld [vmem:[%s5 + $0x20] sm:$0xff]
        %v3291 = vld [vmem:[%s5 + $0x28] sm:$0xff]
        %v3292 = vld [vmem:[%s5 + $0x30] sm:$0xff]
        %v3293 = vld [vmem:[%s5 + $0x38] sm:$0xff]
        %v3294 = vld [vmem:[%s5 + $0x40] sm:$0xff]
        %v3295 = vld [vmem:[%s5 + $0x48] sm:$0xff]
        %v3296 = vld [vmem:[%s5 + $0x50] sm:$0xff]
        %v3297 = vld [vmem:[%s5 + $0x58] sm:$0xff]
        %v3298 = vld [vmem:[%s5 + $0x60] sm:$0xff]
        %v3299 = vld [vmem:[%s5 + $0x68] sm:$0xff]
        %v3300 = vld [vmem:[%s5 + $0x70] sm:$0xff]
        %v3301 = vld [vmem:[%s5 + $0x78] sm:$0xff]
        %v3302 = vld [vmem:[%s5 + $0x80] sm:$0xff]
        %v3303 = vld [vmem:[%s5 + $0x88] sm:$0xff]
        %s3304 = scalar_lea.vmem %s5, 144
        %v3305 = vld [vmem:[%s3304] sm:$0xff]
        %v3306 = vld [vmem:[%s3304 + $0x8] sm:$0xff]
        %v3307 = vld [vmem:[%s3304 + $0x10] sm:$0xff]
        %v3308 = vld [vmem:[%s3304 + $0x18] sm:$0xff]
        %v3309 = vld [vmem:[%s3304 + $0x20] sm:$0xff]
        %v3310 = vld [vmem:[%s3304 + $0x28] sm:$0xff]
        %v3311 = vld [vmem:[%s3304 + $0x30] sm:$0xff]
        %v3312 = vld [vmem:[%s3304 + $0x38] sm:$0xff]
        %v3313 = vld [vmem:[%s3304 + $0x40] sm:$0xff]
        %v3314 = vld [vmem:[%s3304 + $0x48] sm:$0xff]
        %v3315 = vld [vmem:[%s3304 + $0x50] sm:$0xff]
        %v3316 = vld [vmem:[%s3304 + $0x58] sm:$0xff]
        %v3317 = vld [vmem:[%s3304 + $0x60] sm:$0xff]
        %v3318 = vld [vmem:[%s3304 + $0x68] sm:$0xff]
        %v3319 = vld [vmem:[%s3304 + $0x70] sm:$0xff]
        %v3320 = vld [vmem:[%s3304 + $0x78] sm:$0xff]
        %v3321 = vld [vmem:[%s3304 + $0x80] sm:$0xff]
        %v3322 = vld [vmem:[%s3304 + $0x88] sm:$0xff]
        %v3325 = vrot.slane %v3282, 2
        %v3326 = vrot.slane %v3283, 2
        %vm3328 = vcmask 130048
        %v3329 = vsel %vm3328, %v3326, 0
        %3331 = vmatprep.subr.mxu0 0.0
        %3332 = vmatpush1.msra.mxu0 %v3320
        %3333 = vmatprep.subr.mxu0 0.0
        %3334 = vmatpush1.msra.mxu0 %v3319
        %3335 = vmatprep.subr.mxu0 0.0
        %3336 = vmatpush1.msra.mxu0 %v3318
        %3337 = vmatprep.subr.mxu0 0.0
        %3338 = vmatpush1.msra.mxu0 %v3317
        %3339 = vmatprep.subr.mxu0 0.0
        %3340 = vmatpush1.msra.mxu0 %v3316
        %3341 = vmatprep.subr.mxu0 0.0
        %3342 = vmatpush1.msra.mxu0 %v3315
        %3343 = vmatprep.subr.mxu0 0.0
        %3344 = vmatpush1.msra.mxu0 %v3314
        %3345 = vmatprep.subr.mxu0 0.0
        %3346 = vmatpush1.msra.mxu0 %v3313
        %3347 = vmatprep.subr.mxu0 0.0
        %3348 = vmatpush1.msra.mxu0 %v3312
        %3349 = vmatprep.subr.mxu0 0.0
        %3350 = vmatpush1.msra.mxu0 %v3311
        %3351 = vmatprep.subr.mxu0 0.0
        %3352 = vmatpush1.msra.mxu0 %v3310
        %3353 = vmatprep.subr.mxu0 0.0
        %3354 = vmatpush1.msra.mxu0 %v3309
        %3355 = vmatprep.subr.mxu0 0.0
        %3356 = vmatpush1.msra.mxu0 %v3308
        %3357 = vmatprep.subr.mxu0 0.0
        %3358 = vmatpush1.msra.mxu0 %v3307
        %3359 = vmatprep.subr.mxu0 0.0
        %3360 = vmatpush1.msra.mxu0 %v3306
        %3361 = vmatprep.subr.mxu0 0.0
        %3362 = vmatpush1.msra.mxu0 %v3305
        %3363 = vmatprep.subr.mxu0 0.0
        %3364 = vmatpush2.msra.mxu0 0.0
        %3365 = vmatprep.subr.mxu0 0.0
        %3366 = vmatpush2.msra.mxu0 0.0
        %3367 = vmatprep.subr.mxu0 0.0
        %3368 = vmatpush2.msra.mxu0 0.0
        %3369 = vmatprep.subr.mxu0 0.0
        %3370 = vmatpush2.msra.mxu0 0.0
        %3371 = vmatprep.subr.mxu0 0.0
        %3372 = vmatpush2.msra.mxu0 0.0
        %3373 = vmatprep.subr.mxu0 0.0
        %3374 = vmatpush2.msra.mxu0 0.0
        %3375 = vmatprep.subr.mxu0 0.0
        %3376 = vmatpush2.msra.mxu0 0.0
        %3377 = vmatprep.subr.mxu0 0.0
        %3378 = vmatpush2.msra.mxu0 0.0
        %3379 = vmatprep.subr.mxu0 0.0
        %3380 = vmatpush2.msra.mxu0 0.0
        %3381 = vmatprep.subr.mxu0 0.0
        %3382 = vmatpush2.msra.mxu0 0.0
        %3383 = vmatprep.subr.mxu0 0.0
        %3384 = vmatpush2.msra.mxu0 0.0
        %3385 = vmatprep.subr.mxu0 0.0
        %3386 = vmatpush2.msra.mxu0 0.0
        %3387 = vmatprep.subr.mxu0 0.0
        %3388 = vmatpush2.msra.mxu0 0.0
        %3389 = vmatprep.subr.mxu0 0.0
        %3390 = vmatpush2.msra.mxu0 0.0
        %3391 = vmatprep.subr.mxu0 0.0
        %3392 = vmatpush2.msra.mxu0 %v3322
        %3393 = vmatprep.subr.mxu0 0.0
        %3394 = vmatpush2.msra.mxu0 %v3321
        %3395 = vmatprep.mubr.f32.mxu0 %v3329
        %3396 = vmatmul.mubr.f32.gmra.mxu0 %v3325
        %v3397 = vpop.f32.mrf.mxu0
        %v3398 = vadd.f32 0.0, %v3397
        %v3399 = vpop.f32.mrf.mxu0
        %3400 = vdwg.mxu0
        %v3401 = vsel %vm3328, %v3283, 0
        %3403 = vmatprep.subr.mxu0 0.0
        %3404 = vmatpush1.msra.mxu0 %v3301
        %3405 = vmatprep.subr.mxu0 0.0
        %3406 = vmatpush1.msra.mxu0 %v3300
        %3407 = vmatprep.subr.mxu0 0.0
        %3408 = vmatpush1.msra.mxu0 %v3299
        %3409 = vmatprep.subr.mxu0 0.0
        %3410 = vmatpush1.msra.mxu0 %v3298
        %3411 = vmatprep.subr.mxu0 0.0
        %3412 = vmatpush1.msra.mxu0 %v3297
        %3413 = vmatprep.subr.mxu0 0.0
        %3414 = vmatpush1.msra.mxu0 %v3296
        %3415 = vmatprep.subr.mxu0 0.0
        %3416 = vmatpush1.msra.mxu0 %v3295
        %3417 = vmatprep.subr.mxu0 0.0
        %3418 = vmatpush1.msra.mxu0 %v3294
        %3419 = vmatprep.subr.mxu0 0.0
        %3420 = vmatpush1.msra.mxu0 %v3293
        %3421 = vmatprep.subr.mxu0 0.0
        %3422 = vmatpush1.msra.mxu0 %v3292
        %3423 = vmatprep.subr.mxu0 0.0
        %3424 = vmatpush1.msra.mxu0 %v3291
        %3425 = vmatprep.subr.mxu0 0.0
        %3426 = vmatpush1.msra.mxu0 %v3290
        %3427 = vmatprep.subr.mxu0 0.0
        %3428 = vmatpush1.msra.mxu0 %v3289
        %3429 = vmatprep.subr.mxu0 0.0
        %3430 = vmatpush1.msra.mxu0 %v3288
        %3431 = vmatprep.subr.mxu0 0.0
        %3432 = vmatpush1.msra.mxu0 %v3287
        %3433 = vmatprep.subr.mxu0 0.0
        %3434 = vmatpush1.msra.mxu0 %v3286
        %3435 = vmatprep.subr.mxu0 0.0
        %3436 = vmatpush2.msra.mxu0 0.0
        %3437 = vmatprep.subr.mxu0 0.0
        %3438 = vmatpush2.msra.mxu0 0.0
        %3439 = vmatprep.subr.mxu0 0.0
        %3440 = vmatpush2.msra.mxu0 0.0
        %3441 = vmatprep.subr.mxu0 0.0
        %3442 = vmatpush2.msra.mxu0 0.0
        %3443 = vmatprep.subr.mxu0 0.0
        %3444 = vmatpush2.msra.mxu0 0.0
        %3445 = vmatprep.subr.mxu0 0.0
        %3446 = vmatpush2.msra.mxu0 0.0
        %3447 = vmatprep.subr.mxu0 0.0
        %3448 = vmatpush2.msra.mxu0 0.0
        %3449 = vmatprep.subr.mxu0 0.0
        %3450 = vmatpush2.msra.mxu0 0.0
        %3451 = vmatprep.subr.mxu0 0.0
        %3452 = vmatpush2.msra.mxu0 0.0
        %3453 = vmatprep.subr.mxu0 0.0
        %3454 = vmatpush2.msra.mxu0 0.0
        %3455 = vmatprep.subr.mxu0 0.0
        %3456 = vmatpush2.msra.mxu0 0.0
        %3457 = vmatprep.subr.mxu0 0.0
        %3458 = vmatpush2.msra.mxu0 0.0
        %3459 = vmatprep.subr.mxu0 0.0
        %3460 = vmatpush2.msra.mxu0 0.0
        %3461 = vmatprep.subr.mxu0 0.0
        %3462 = vmatpush2.msra.mxu0 0.0
        %3463 = vmatprep.subr.mxu0 0.0
        %3464 = vmatpush2.msra.mxu0 %v3303
        %3465 = vmatprep.subr.mxu0 0.0
        %3466 = vmatpush2.msra.mxu0 %v3302
        %3467 = vmatprep.mubr.f32.mxu0 %v3401
        %3468 = vmatmul.mubr.f32.gmra.mxu0 %v3282
        %v3469 = vpop.f32.mrf.mxu0
        %v3470 = vadd.f32 %v3398, %v3469
        %v3471 = vpop.f32.mrf.mxu0
        %3472 = vdwg.mxu0
        %s3473 = scalar_lea.vmem %s5, 288
        %v3474 = vld [vmem:[%s3473] sm:$0xff]
        %v3475 = vld [vmem:[%s3473 + $0x8] sm:$0xff]
        %v3476 = vld [vmem:[%s3473 + $0x10] sm:$0xff]
        %v3477 = vld [vmem:[%s3473 + $0x18] sm:$0xff]
        %v3478 = vld [vmem:[%s3473 + $0x20] sm:$0xff]
        %v3479 = vld [vmem:[%s3473 + $0x28] sm:$0xff]
        %v3480 = vld [vmem:[%s3473 + $0x30] sm:$0xff]
        %v3481 = vld [vmem:[%s3473 + $0x38] sm:$0xff]
        %v3482 = vld [vmem:[%s3473 + $0x40] sm:$0xff]
        %v3483 = vld [vmem:[%s3473 + $0x48] sm:$0xff]
        %v3484 = vld [vmem:[%s3473 + $0x50] sm:$0xff]
        %v3485 = vld [vmem:[%s3473 + $0x58] sm:$0xff]
        %v3486 = vld [vmem:[%s3473 + $0x60] sm:$0xff]
        %v3487 = vld [vmem:[%s3473 + $0x68] sm:$0xff]
        %v3488 = vld [vmem:[%s3473 + $0x70] sm:$0xff]
        %v3489 = vld [vmem:[%s3473 + $0x78] sm:$0xff]
        %v3490 = vld [vmem:[%s3473 + $0x80] sm:$0xff]
        %v3491 = vld [vmem:[%s3473 + $0x88] sm:$0xff]
        %v3492 = vrot.slane %v3282, 4
        %v3493 = vrot.slane %v3283, 4
        %v3495 = vsel %vm3328, %v3493, 0
        %3497 = vmatprep.subr.mxu0 0.0
        %3498 = vmatpush1.msra.mxu0 %v3489
        %3499 = vmatprep.subr.mxu0 0.0
        %3500 = vmatpush1.msra.mxu0 %v3488
        %3501 = vmatprep.subr.mxu0 0.0
        %3502 = vmatpush1.msra.mxu0 %v3487
        %3503 = vmatprep.subr.mxu0 0.0
        %3504 = vmatpush1.msra.mxu0 %v3486
        %3505 = vmatprep.subr.mxu0 0.0
        %3506 = vmatpush1.msra.mxu0 %v3485
        %3507 = vmatprep.subr.mxu0 0.0
        %3508 = vmatpush1.msra.mxu0 %v3484
        %3509 = vmatprep.subr.mxu0 0.0
        %3510 = vmatpush1.msra.mxu0 %v3483
        %3511 = vmatprep.subr.mxu0 0.0
        %3512 = vmatpush1.msra.mxu0 %v3482
        %3513 = vmatprep.subr.mxu0 0.0
        %3514 = vmatpush1.msra.mxu0 %v3481
        %3515 = vmatprep.subr.mxu0 0.0
        %3516 = vmatpush1.msra.mxu0 %v3480
        %3517 = vmatprep.subr.mxu0 0.0
        %3518 = vmatpush1.msra.mxu0 %v3479
        %3519 = vmatprep.subr.mxu0 0.0
        %3520 = vmatpush1.msra.mxu0 %v3478
        %3521 = vmatprep.subr.mxu0 0.0
        %3522 = vmatpush1.msra.mxu0 %v3477
        %3523 = vmatprep.subr.mxu0 0.0
        %3524 = vmatpush1.msra.mxu0 %v3476
        %3525 = vmatprep.subr.mxu0 0.0
        %3526 = vmatpush1.msra.mxu0 %v3475
        %3527 = vmatprep.subr.mxu0 0.0
        %3528 = vmatpush1.msra.mxu0 %v3474
        %3529 = vmatprep.subr.mxu0 0.0
        %3530 = vmatpush2.msra.mxu0 0.0
        %3531 = vmatprep.subr.mxu0 0.0
        %3532 = vmatpush2.msra.mxu0 0.0
        %3533 = vmatprep.subr.mxu0 0.0
        %3534 = vmatpush2.msra.mxu0 0.0
        %3535 = vmatprep.subr.mxu0 0.0
        %3536 = vmatpush2.msra.mxu0 0.0
        %3537 = vmatprep.subr.mxu0 0.0
        %3538 = vmatpush2.msra.mxu0 0.0
        %3539 = vmatprep.subr.mxu0 0.0
        %3540 = vmatpush2.msra.mxu0 0.0
        %3541 = vmatprep.subr.mxu0 0.0
        %3542 = vmatpush2.msra.mxu0 0.0
        %3543 = vmatprep.subr.mxu0 0.0
        %3544 = vmatpush2.msra.mxu0 0.0
        %3545 = vmatprep.subr.mxu0 0.0
        %3546 = vmatpush2.msra.mxu0 0.0
        %3547 = vmatprep.subr.mxu0 0.0
        %3548 = vmatpush2.msra.mxu0 0.0
        %3549 = vmatprep.subr.mxu0 0.0
        %3550 = vmatpush2.msra.mxu0 0.0
        %3551 = vmatprep.subr.mxu0 0.0
        %3552 = vmatpush2.msra.mxu0 0.0
        %3553 = vmatprep.subr.mxu0 0.0
        %3554 = vmatpush2.msra.mxu0 0.0
        %3555 = vmatprep.subr.mxu0 0.0
        %3556 = vmatpush2.msra.mxu0 0.0
        %3557 = vmatprep.subr.mxu0 0.0
        %3558 = vmatpush2.msra.mxu0 %v3491
        %3559 = vmatprep.subr.mxu0 0.0
        %3560 = vmatpush2.msra.mxu0 %v3490
        %3561 = vmatprep.mubr.f32.mxu0 %v3495
        %3562 = vmatmul.mubr.f32.gmra.mxu0 %v3492
        %v3563 = vpop.f32.mrf.mxu0
        %v3564 = vadd.f32 0.0, %v3563
        %v3565 = vpop.f32.mrf.mxu0
        %3566 = vdwg.mxu0
        %v3567 = vadd.f32 %v3470, %v3564
        %s3568 = scalar_lea.vmem %s5, 432
        %v3569 = vld [vmem:[%s3568] sm:$0xff]
        %v3570 = vld [vmem:[%s3568 + $0x8] sm:$0xff]
        %v3571 = vld [vmem:[%s3568 + $0x10] sm:$0xff]
        %v3572 = vld [vmem:[%s3568 + $0x18] sm:$0xff]
        %v3573 = vld [vmem:[%s3568 + $0x20] sm:$0xff]
        %v3574 = vld [vmem:[%s3568 + $0x28] sm:$0xff]
        %v3575 = vld [vmem:[%s3568 + $0x30] sm:$0xff]
        %v3576 = vld [vmem:[%s3568 + $0x38] sm:$0xff]
        %v3577 = vld [vmem:[%s3568 + $0x40] sm:$0xff]
        %v3578 = vld [vmem:[%s3568 + $0x48] sm:$0xff]
        %v3579 = vld [vmem:[%s3568 + $0x50] sm:$0xff]
        %v3580 = vld [vmem:[%s3568 + $0x58] sm:$0xff]
        %v3581 = vld [vmem:[%s3568 + $0x60] sm:$0xff]
        %v3582 = vld [vmem:[%s3568 + $0x68] sm:$0xff]
        %v3583 = vld [vmem:[%s3568 + $0x70] sm:$0xff]
        %v3584 = vld [vmem:[%s3568 + $0x78] sm:$0xff]
        %v3585 = vld [vmem:[%s3568 + $0x80] sm:$0xff]
        %v3586 = vld [vmem:[%s3568 + $0x88] sm:$0xff]
        %v3587 = vrot.slane %v3282, 6
        %v3588 = vrot.slane %v3283, 6
        %v3590 = vsel %vm3328, %v3588, 0
        %3592 = vmatprep.subr.mxu0 0.0
        %3593 = vmatpush1.msra.mxu0 %v3584
        %3594 = vmatprep.subr.mxu0 0.0
        %3595 = vmatpush1.msra.mxu0 %v3583
        %3596 = vmatprep.subr.mxu0 0.0
        %3597 = vmatpush1.msra.mxu0 %v3582
        %3598 = vmatprep.subr.mxu0 0.0
        %3599 = vmatpush1.msra.mxu0 %v3581
        %3600 = vmatprep.subr.mxu0 0.0
        %3601 = vmatpush1.msra.mxu0 %v3580
        %3602 = vmatprep.subr.mxu0 0.0
        %3603 = vmatpush1.msra.mxu0 %v3579
        %3604 = vmatprep.subr.mxu0 0.0
        %3605 = vmatpush1.msra.mxu0 %v3578
        %3606 = vmatprep.subr.mxu0 0.0
        %3607 = vmatpush1.msra.mxu0 %v3577
        %3608 = vmatprep.subr.mxu0 0.0
        %3609 = vmatpush1.msra.mxu0 %v3576
        %3610 = vmatprep.subr.mxu0 0.0
        %3611 = vmatpush1.msra.mxu0 %v3575
        %3612 = vmatprep.subr.mxu0 0.0
        %3613 = vmatpush1.msra.mxu0 %v3574
        %3614 = vmatprep.subr.mxu0 0.0
        %3615 = vmatpush1.msra.mxu0 %v3573
        %3616 = vmatprep.subr.mxu0 0.0
        %3617 = vmatpush1.msra.mxu0 %v3572
        %3618 = vmatprep.subr.mxu0 0.0
        %3619 = vmatpush1.msra.mxu0 %v3571
        %3620 = vmatprep.subr.mxu0 0.0
        %3621 = vmatpush1.msra.mxu0 %v3570
        %3622 = vmatprep.subr.mxu0 0.0
        %3623 = vmatpush1.msra.mxu0 %v3569
        %3624 = vmatprep.subr.mxu0 0.0
        %3625 = vmatpush2.msra.mxu0 0.0
        %3626 = vmatprep.subr.mxu0 0.0
        %3627 = vmatpush2.msra.mxu0 0.0
        %3628 = vmatprep.subr.mxu0 0.0
        %3629 = vmatpush2.msra.mxu0 0.0
        %3630 = vmatprep.subr.mxu0 0.0
        %3631 = vmatpush2.msra.mxu0 0.0
        %3632 = vmatprep.subr.mxu0 0.0
        %3633 = vmatpush2.msra.mxu0 0.0
        %3634 = vmatprep.subr.mxu0 0.0
        %3635 = vmatpush2.msra.mxu0 0.0
        %3636 = vmatprep.subr.mxu0 0.0
        %3637 = vmatpush2.msra.mxu0 0.0
        %3638 = vmatprep.subr.mxu0 0.0
        %3639 = vmatpush2.msra.mxu0 0.0
        %3640 = vmatprep.subr.mxu0 0.0
        %3641 = vmatpush2.msra.mxu0 0.0
        %3642 = vmatprep.subr.mxu0 0.0
        %3643 = vmatpush2.msra.mxu0 0.0
        %3644 = vmatprep.subr.mxu0 0.0
        %3645 = vmatpush2.msra.mxu0 0.0
        %3646 = vmatprep.subr.mxu0 0.0
        %3647 = vmatpush2.msra.mxu0 0.0
        %3648 = vmatprep.subr.mxu0 0.0
        %3649 = vmatpush2.msra.mxu0 0.0
        %3650 = vmatprep.subr.mxu0 0.0
        %3651 = vmatpush2.msra.mxu0 0.0
        %3652 = vmatprep.subr.mxu0 0.0
        %3653 = vmatpush2.msra.mxu0 %v3586
        %3654 = vmatprep.subr.mxu0 0.0
        %3655 = vmatpush2.msra.mxu0 %v3585
        %3656 = vmatprep.mubr.f32.mxu0 %v3590
        %3657 = vmatmul.mubr.f32.gmra.mxu0 %v3587
        %v3658 = vpop.f32.mrf.mxu0
        %v3659 = vadd.f32 0.0, %v3658
        %v3660 = vpop.f32.mrf.mxu0
        %3661 = vdwg.mxu0
        %v3662 = vadd.f32 %v3567, %v3659
        %s3663 = scalar_lea.vmem %s5, 576
        %v3664 = vld [vmem:[%s3663] sm:$0xff]
        %v3665 = vld [vmem:[%s3663 + $0x8] sm:$0xff]
        %v3666 = vld [vmem:[%s3663 + $0x10] sm:$0xff]
        %v3667 = vld [vmem:[%s3663 + $0x18] sm:$0xff]
        %v3668 = vld [vmem:[%s3663 + $0x20] sm:$0xff]
        %v3669 = vld [vmem:[%s3663 + $0x28] sm:$0xff]
        %v3670 = vld [vmem:[%s3663 + $0x30] sm:$0xff]
        %v3671 = vld [vmem:[%s3663 + $0x38] sm:$0xff]
        %v3672 = vld [vmem:[%s3663 + $0x40] sm:$0xff]
        %v3673 = vld [vmem:[%s3663 + $0x48] sm:$0xff]
        %v3674 = vld [vmem:[%s3663 + $0x50] sm:$0xff]
        %v3675 = vld [vmem:[%s3663 + $0x58] sm:$0xff]
        %v3676 = vld [vmem:[%s3663 + $0x60] sm:$0xff]
        %v3677 = vld [vmem:[%s3663 + $0x68] sm:$0xff]
        %v3678 = vld [vmem:[%s3663 + $0x70] sm:$0xff]
        %v3679 = vld [vmem:[%s3663 + $0x78] sm:$0xff]
        %v3680 = vld [vmem:[%s3663 + $0x80] sm:$0xff]
        %v3681 = vld [vmem:[%s3663 + $0x88] sm:$0xff]
        %v3683 = vsel %vm3328, %v3285, 0
        %3685 = vmatprep.subr.mxu0 0.0
        %3686 = vmatpush1.msra.mxu0 %v3679
        %3687 = vmatprep.subr.mxu0 0.0
        %3688 = vmatpush1.msra.mxu0 %v3678
        %3689 = vmatprep.subr.mxu0 0.0
        %3690 = vmatpush1.msra.mxu0 %v3677
        %3691 = vmatprep.subr.mxu0 0.0
        %3692 = vmatpush1.msra.mxu0 %v3676
        %3693 = vmatprep.subr.mxu0 0.0
        %3694 = vmatpush1.msra.mxu0 %v3675
        %3695 = vmatprep.subr.mxu0 0.0
        %3696 = vmatpush1.msra.mxu0 %v3674
        %3697 = vmatprep.subr.mxu0 0.0
        %3698 = vmatpush1.msra.mxu0 %v3673
        %3699 = vmatprep.subr.mxu0 0.0
        %3700 = vmatpush1.msra.mxu0 %v3672
        %3701 = vmatprep.subr.mxu0 0.0
        %3702 = vmatpush1.msra.mxu0 %v3671
        %3703 = vmatprep.subr.mxu0 0.0
        %3704 = vmatpush1.msra.mxu0 %v3670
        %3705 = vmatprep.subr.mxu0 0.0
        %3706 = vmatpush1.msra.mxu0 %v3669
        %3707 = vmatprep.subr.mxu0 0.0
        %3708 = vmatpush1.msra.mxu0 %v3668
        %3709 = vmatprep.subr.mxu0 0.0
        %3710 = vmatpush1.msra.mxu0 %v3667
        %3711 = vmatprep.subr.mxu0 0.0
        %3712 = vmatpush1.msra.mxu0 %v3666
        %3713 = vmatprep.subr.mxu0 0.0
        %3714 = vmatpush1.msra.mxu0 %v3665
        %3715 = vmatprep.subr.mxu0 0.0
        %3716 = vmatpush1.msra.mxu0 %v3664
        %3717 = vmatprep.subr.mxu0 0.0
        %3718 = vmatpush2.msra.mxu0 0.0
        %3719 = vmatprep.subr.mxu0 0.0
        %3720 = vmatpush2.msra.mxu0 0.0
        %3721 = vmatprep.subr.mxu0 0.0
        %3722 = vmatpush2.msra.mxu0 0.0
        %3723 = vmatprep.subr.mxu0 0.0
        %3724 = vmatpush2.msra.mxu0 0.0
        %3725 = vmatprep.subr.mxu0 0.0
        %3726 = vmatpush2.msra.mxu0 0.0
        %3727 = vmatprep.subr.mxu0 0.0
        %3728 = vmatpush2.msra.mxu0 0.0
        %3729 = vmatprep.subr.mxu0 0.0
        %3730 = vmatpush2.msra.mxu0 0.0
        %3731 = vmatprep.subr.mxu0 0.0
        %3732 = vmatpush2.msra.mxu0 0.0
        %3733 = vmatprep.subr.mxu0 0.0
        %3734 = vmatpush2.msra.mxu0 0.0
        %3735 = vmatprep.subr.mxu0 0.0
        %3736 = vmatpush2.msra.mxu0 0.0
        %3737 = vmatprep.subr.mxu0 0.0
        %3738 = vmatpush2.msra.mxu0 0.0
        %3739 = vmatprep.subr.mxu0 0.0
        %3740 = vmatpush2.msra.mxu0 0.0
        %3741 = vmatprep.subr.mxu0 0.0
        %3742 = vmatpush2.msra.mxu0 0.0
        %3743 = vmatprep.subr.mxu0 0.0
        %3744 = vmatpush2.msra.mxu0 0.0
        %3745 = vmatprep.subr.mxu0 0.0
        %3746 = vmatpush2.msra.mxu0 %v3681
        %3747 = vmatprep.subr.mxu0 0.0
        %3748 = vmatpush2.msra.mxu0 %v3680
        %3749 = vmatprep.mubr.f32.mxu0 %v3683
        %3750 = vmatmul.mubr.f32.gmra.mxu0 %v3284
        %v3751 = vpop.f32.mrf.mxu0
        %v3752 = vadd.f32 0.0, %v3751
        %v3753 = vpop.f32.mrf.mxu0
        %3754 = vdwg.mxu0
        %v3755 = vadd.f32 %v3662, %v3752
        %v3756 = vld [vmem:[%s6] sm:$0x1]
        %v3757 = vadd.f32 %v3755, %v3756
        %v3758 = vmax.f32 %v3757, 0.0
        %v3759 = vld [vmem:[%s7] sm:$0xff]
        %v3760 = vld [vmem:[%s7 + $0x8] sm:$0xff]
        %v3761 = vld [vmem:[%s7 + $0x10] sm:$0xff]
        %v3762 = vld [vmem:[%s7 + $0x18] sm:$0xff]
        %v3763 = vld [vmem:[%s7 + $0x20] sm:$0xff]
        %v3764 = vld [vmem:[%s7 + $0x28] sm:$0xff]
        %v3765 = vld [vmem:[%s7 + $0x30] sm:$0xff]
        %v3766 = vld [vmem:[%s7 + $0x38] sm:$0xff]
        %v3767 = vld [vmem:[%s7 + $0x40] sm:$0xff]
        %v3768 = vld [vmem:[%s7 + $0x48] sm:$0xff]
        %v3769 = vld [vmem:[%s7 + $0x50] sm:$0xff]
        %v3770 = vld [vmem:[%s7 + $0x58] sm:$0xff]
        %v3771 = vld [vmem:[%s7 + $0x60] sm:$0xff]
        %v3772 = vld [vmem:[%s7 + $0x68] sm:$0xff]
        %v3773 = vld [vmem:[%s7 + $0x70] sm:$0xff]
        %v3774 = vld [vmem:[%s8] sm:$0x1]
        %vm3775 = vcmask 982016
        %v3777 = vsel %vm3775, %v3758, 0
        %3779 = vmatprep.subr.mxu0 0.0
        %3780 = vmatpush1.msra.mxu0 0.0
        %3781 = vmatprep.subr.mxu0 0.0
        %3782 = vmatpush1.msra.mxu0 %v3773
        %3783 = vmatprep.subr.mxu0 0.0
        %3784 = vmatpush1.msra.mxu0 %v3772
        %3785 = vmatprep.subr.mxu0 0.0
        %3786 = vmatpush1.msra.mxu0 %v3771
        %3787 = vmatprep.subr.mxu0 0.0
        %3788 = vmatpush1.msra.mxu0 %v3770
        %3789 = vmatprep.subr.mxu0 0.0
        %3790 = vmatpush1.msra.mxu0 %v3769
        %3791 = vmatprep.subr.mxu0 0.0
        %3792 = vmatpush1.msra.mxu0 %v3768
        %3793 = vmatprep.subr.mxu0 0.0
        %3794 = vmatpush1.msra.mxu0 %v3767
        %3795 = vmatprep.subr.mxu0 0.0
        %3796 = vmatpush1.msra.mxu0 %v3766
        %3797 = vmatprep.subr.mxu0 0.0
        %3798 = vmatpush1.msra.mxu0 %v3765
        %3799 = vmatprep.subr.mxu0 0.0
        %3800 = vmatpush1.msra.mxu0 %v3764
        %3801 = vmatprep.subr.mxu0 0.0
        %3802 = vmatpush1.msra.mxu0 %v3763
        %3803 = vmatprep.subr.mxu0 0.0
        %3804 = vmatpush1.msra.mxu0 %v3762
        %3805 = vmatprep.subr.mxu0 0.0
        %3806 = vmatpush1.msra.mxu0 %v3761
        %3807 = vmatprep.subr.mxu0 0.0
        %3808 = vmatpush1.msra.mxu0 %v3760
        %3809 = vmatprep.subr.mxu0 0.0
        %3810 = vmatpush1.msra.mxu0 %v3759
        %3811 = vmatprep.subr.mxu0 0.0
        %3812 = vmatpush2.msra.mxu0 0.0
        %3813 = vmatprep.subr.mxu0 0.0
        %3814 = vmatpush2.msra.mxu0 0.0
        %3815 = vmatprep.subr.mxu0 0.0
        %3816 = vmatpush2.msra.mxu0 0.0
        %3817 = vmatprep.subr.mxu0 0.0
        %3818 = vmatpush2.msra.mxu0 0.0
        %3819 = vmatprep.subr.mxu0 0.0
        %3820 = vmatpush2.msra.mxu0 0.0
        %3821 = vmatprep.subr.mxu0 0.0
        %3822 = vmatpush2.msra.mxu0 0.0
        %3823 = vmatprep.subr.mxu0 0.0
        %3824 = vmatpush2.msra.mxu0 0.0
        %3825 = vmatprep.subr.mxu0 0.0
        %3826 = vmatpush2.msra.mxu0 0.0
        %3827 = vmatprep.subr.mxu0 0.0
        %3828 = vmatpush2.msra.mxu0 0.0
        %3829 = vmatprep.subr.mxu0 0.0
        %3830 = vmatpush2.msra.mxu0 0.0
        %3831 = vmatprep.subr.mxu0 0.0
        %3832 = vmatpush2.msra.mxu0 0.0
        %3833 = vmatprep.subr.mxu0 0.0
        %3834 = vmatpush2.msra.mxu0 0.0
        %3835 = vmatprep.subr.mxu0 0.0
        %3836 = vmatpush2.msra.mxu0 0.0
        %3837 = vmatprep.subr.mxu0 0.0
        %3838 = vmatpush2.msra.mxu0 0.0
        %3839 = vmatprep.subr.mxu0 0.0
        %3840 = vmatpush2.msra.mxu0 0.0
        %3841 = vmatprep.subr.mxu0 0.0
        %3842 = vmatpush2.msra.mxu0 0.0
        %3843 = vmatprep.mubr.f32.mxu0 0.0
        %3844 = vmatmul.mubr.f32.gmra.mxu0 %v3777
        %v3845 = vpop.f32.mrf.mxu0
        %v3846 = vadd.f32 %v3774, %v3845
        %v3847 = vpop.f32.mrf.mxu0
        %3848 = vdwg.mxu0
        %v3849 = vmax.f32 %v3846, 0.0
        %v3850 = vld [vmem:[%s9] sm:$0xff]
        %v3851 = vld [vmem:[%s9 + $0x8] sm:$0xff]
        %v3852 = vld [vmem:[%s9 + $0x10] sm:$0xff]
        %v3853 = vld [vmem:[%s9 + $0x18] sm:$0xff]
        %v3854 = vld [vmem:[%s9 + $0x20] sm:$0xff]
        %v3855 = vld [vmem:[%s9 + $0x28] sm:$0xff]
        %v3856 = vld [vmem:[%s9 + $0x30] sm:$0xff]
        %v3857 = vld [vmem:[%s9 + $0x38] sm:$0xff]
        %v3858 = vld [vmem:[%s9 + $0x40] sm:$0xff]
        %v3859 = vld [vmem:[%s9 + $0x48] sm:$0xff]
        %v3860 = vld [vmem:[%s9 + $0x50] sm:$0xf]
        %v3861 = vld [vmem:[%s10] sm:$0x1]
        %vm3862 = vcmask 687104
        %v3864 = vsel %vm3862, %v3849, 0
        %v3867 = vsel %vm3125, %v3860, 0
        %3869 = vmatprep.subr.mxu0 0.0
        %3870 = vmatpush1.msra.mxu0 0.0
        %3871 = vmatprep.subr.mxu0 0.0
        %3872 = vmatpush1.msra.mxu0 0.0
        %3873 = vmatprep.subr.mxu0 0.0
        %3874 = vmatpush1.msra.mxu0 0.0
        %3875 = vmatprep.subr.mxu0 0.0
        %3876 = vmatpush1.msra.mxu0 0.0
        %3877 = vmatprep.subr.mxu0 0.0
        %3878 = vmatpush1.msra.mxu0 0.0
        %3879 = vmatprep.subr.mxu0 0.0
        %3880 = vmatpush1.msra.mxu0 %v3867
        %3881 = vmatprep.subr.mxu0 0.0
        %3882 = vmatpush1.msra.mxu0 %v3859
        %3883 = vmatprep.subr.mxu0 0.0
        %3884 = vmatpush1.msra.mxu0 %v3858
        %3885 = vmatprep.subr.mxu0 0.0
        %3886 = vmatpush1.msra.mxu0 %v3857
        %3887 = vmatprep.subr.mxu0 0.0
        %3888 = vmatpush1.msra.mxu0 %v3856
        %3889 = vmatprep.subr.mxu0 0.0
        %3890 = vmatpush1.msra.mxu0 %v3855
        %3891 = vmatprep.subr.mxu0 0.0
        %3892 = vmatpush1.msra.mxu0 %v3854
        %3893 = vmatprep.subr.mxu0 0.0
        %3894 = vmatpush1.msra.mxu0 %v3853
        %3895 = vmatprep.subr.mxu0 0.0
        %3896 = vmatpush1.msra.mxu0 %v3852
        %3897 = vmatprep.subr.mxu0 0.0
        %3898 = vmatpush1.msra.mxu0 %v3851
        %3899 = vmatprep.subr.mxu0 0.0
        %3900 = vmatpush1.msra.mxu0 %v3850
        %3901 = vmatprep.subr.mxu0 0.0
        %3902 = vmatpush2.msra.mxu0 0.0
        %3903 = vmatprep.subr.mxu0 0.0
        %3904 = vmatpush2.msra.mxu0 0.0
        %3905 = vmatprep.subr.mxu0 0.0
        %3906 = vmatpush2.msra.mxu0 0.0
        %3907 = vmatprep.subr.mxu0 0.0
        %3908 = vmatpush2.msra.mxu0 0.0
        %3909 = vmatprep.subr.mxu0 0.0
        %3910 = vmatpush2.msra.mxu0 0.0
        %3911 = vmatprep.subr.mxu0 0.0
        %3912 = vmatpush2.msra.mxu0 0.0
        %3913 = vmatprep.subr.mxu0 0.0
        %3914 = vmatpush2.msra.mxu0 0.0
        %3915 = vmatprep.subr.mxu0 0.0
        %3916 = vmatpush2.msra.mxu0 0.0
        %3917 = vmatprep.subr.mxu0 0.0
        %3918 = vmatpush2.msra.mxu0 0.0
        %3919 = vmatprep.subr.mxu0 0.0
        %3920 = vmatpush2.msra.mxu0 0.0
        %3921 = vmatprep.subr.mxu0 0.0
        %3922 = vmatpush2.msra.mxu0 0.0
        %3923 = vmatprep.subr.mxu0 0.0
        %3924 = vmatpush2.msra.mxu0 0.0
        %3925 = vmatprep.subr.mxu0 0.0
        %3926 = vmatpush2.msra.mxu0 0.0
        %3927 = vmatprep.subr.mxu0 0.0
        %3928 = vmatpush2.msra.mxu0 0.0
        %3929 = vmatprep.subr.mxu0 0.0
        %3930 = vmatpush2.msra.mxu0 0.0
        %3931 = vmatprep.subr.mxu0 0.0
        %3932 = vmatpush2.msra.mxu0 0.0
        %3933 = vmatprep.mubr.f32.mxu0 0.0
        %3934 = vmatmul.mubr.f32.gmra.mxu0 %v3864
        %v3935 = vpop.f32.mrf.mxu0
        %v3936 = vadd.f32 %v3861, %v3935
        %v3937 = vpop.f32.mrf.mxu0
        %3938 = vdwg.mxu0
        %vm3939 = vcmask 73728
        %3940 = vst.msk [vmem:[%s378] sm:$0x1] %vm3939, %v3936
        %s3941 = sand.u32 %s269, 1
        %s3942 = scalar_lea.sflag [#allocation4], %s3941
        %s3943 = sand.u32 %s269, 1
        %s3944 = scalar_lea.vmem [#allocation3], %s3943
        // Predicated region
        $region65: #{convnet_forward.1} parent=63 // pred_check
          %p3945 = pneg %p279
        $region66: #{convnet_forward.1} parent=63 // pred_check_branch
          %3947 = sbr.rel (%p3945) target = $region68
        $region67: #{convnet_forward.1} parent=63 // pred_region
          %s3949 = ssub.s32 16, 16
          %3950 = vsyncadd %s3942, %s3949
          %s3951 = smul.addr %s25, 16
          %s3952 = scalar_lea.hbm %s11, %s3951
          %s3954 = sshll.u32 %s3944, 4
          %s3955 = int_to_ptr.vmem [resolvable:$true] %s3954
          %3957 = dma.vmem_to_hbm [thread:$0]  %s3955, 16, %s3952, %s3942
        $region68: #{convnet_forward.1} parent=63 // pred_fallthru
          _
      $region64: #{convnet_forward.1} parent=5 // pred_fallthru
        _
      %p3958 = scmp.le.s32.totalorder 2, %s20
      // Predicated region
      $region69: #{convnet_forward.1} parent=5 // pred_check
        %p3959 = pneg %p3958
      $region70: #{convnet_forward.1} parent=5 // pred_check_branch
        %3961 = sbr.rel (%p3959) target = $region72
      $region71: #{convnet_forward.1} parent=5 // pred_region
        %s3962 = ssub.s32 %s20, 2
        // Predicated region
        $region73: #{convnet_forward.1} parent=71 // pred_check
          %p3963 = pneg %p285
        $region74: #{convnet_forward.1} parent=71 // pred_check_branch
          %3965 = sbr.rel (%p3963) target = $region76
        $region75: #{convnet_forward.1} parent=71 // pred_region
          %s3966 = sand.u32 %s270, 1
          %s3967 = scalar_lea.sflag [#allocation4], %s3966
          %s3968 = sand.u32 %s270, 1
          %s3969 = scalar_lea.vmem [#allocation3], %s3968
          %3970 = dma.done %s3967, 16
        $region76: #{convnet_forward.1} parent=71 // pred_fallthru
          _
      $region72: #{convnet_forward.1} parent=5 // pred_fallthru
        _
    $region6: #{convnet_forward.1} parent=1 // loop_footer
      %s24 = sadd.s32 1, %s20
    $region7: #{convnet_forward.1} parent=1 // loop_footer_branch
      %19 = sbr.rel target = $region3
    $region8: #{convnet_forward.1} parent=1 // loop_exit
      _
    %3971 = vsyncpa [#allocation4], 1
    %s3972 = scalar_lea.sflag [#allocation4], 1
    %3973 = vsyncpa %s3972, 1

</llo_original>
